<compile_context>
chip_gen: v5e
topology: v5e:2x2
jax: 0.10.0
libtpu: 0.0.40
codegen_flags: <defaults>
</compile_context>

<pallas_src>
import functools

import jax
import jax.numpy as jnp
from jax.experimental import pallas as pl
from jax.experimental.pallas import tpu as pltpu

EPS = 1e-5
MXU_DTYPE = jnp.bfloat16   # MXU operand dtype; accumulation is always f32

# Row indices inside the packed per-layer (15, E) "vector" slab (biases + LN params).
_BQ_S, _BK_S, _BV_S, _BO_S = 0, 1, 2, 3
_BQ_C, _BK_C, _BV_C, _BO_C = 4, 5, 6, 7
_LN1_W, _LN1_B, _LN2_W, _LN2_B, _LN3_W, _LN3_B = 8, 9, 10, 11, 12, 13
_FF_B2 = 14


# --------------------------------------------------------------------------- #
# In-kernel helpers (operate on jnp values loaded from refs)
# --------------------------------------------------------------------------- #
def _layernorm(x, w, b):
    # x: (N, E) f32, w/b: (1, E) f32; PyTorch LayerNorm over last dim, biased var.
    mu = jnp.mean(x, axis=-1, keepdims=True)
    var = jnp.mean((x - mu) ** 2, axis=-1, keepdims=True)
    return (x - mu) * jax.lax.rsqrt(var + EPS) * w + b


def _mha(q_rows, kv_rows, batch, wq, wk, wv, wo, bq, bk, bv, bo, num_heads):
    # q_rows: (B*Lq, E) bf16; kv_rows: (B*Lk, E) bf16 (already cast by caller)
    # wq/wk/wv/wo: (E, E) bf16, (in, out) orientation;  b*: (1, E) f32
    B = batch
    E = q_rows.shape[1]
    Lq = q_rows.shape[0] // B
    Lk = kv_rows.shape[0] // B
    dh = E // num_heads
    mxu = wq.dtype

    # Folded-row projections: B folded into MXU rows, one matmul per projection.
    q = jnp.dot(q_rows, wq, preferred_element_type=jnp.float32) + bq
    q3 = (q * (float(dh) ** -0.5)).astype(mxu).reshape(B, Lq, E)        # (B, Lq, E)
    k3 = (jnp.dot(kv_rows, wk, preferred_element_type=jnp.float32) + bk
          ).astype(mxu).reshape(B, Lk, E)                               # (B, Lk, E)
    v3 = (jnp.dot(kv_rows, wv, preferred_element_type=jnp.float32) + bv
          ).astype(mxu).reshape(B, Lk, E)                               # (B, Lk, E)

    head_outs = []
    for h in range(num_heads):      # static unroll; each head = one B-batched matmul
        sl = slice(h * dh, (h + 1) * dh)
        s = jnp.einsum("bqd,bkd->bqk", q3[:, :, sl], k3[:, :, sl],
                       preferred_element_type=jnp.float32)              # (B, Lq, Lk)
        s = s - jnp.max(s, axis=-1, keepdims=True)
        p = jnp.exp(s)
        p = p * pl.reciprocal(jnp.sum(p, axis=-1, keepdims=True), approx=True)
        head_outs.append(
            jnp.einsum("bqk,bkd->bqd", p.astype(mxu), v3[:, :, sl],
                       preferred_element_type=jnp.float32))             # (B, Lq, dh)
    o = jnp.concatenate(head_outs, axis=-1).reshape(B * Lq, E)          # (B*Lq, E)
    return jnp.dot(o.astype(mxu), wo, preferred_element_type=jnp.float32) + bo


# --------------------------------------------------------------------------- #
# Fused kernel: one grid step per decoder layer; activations persist in VMEM
# --------------------------------------------------------------------------- #
def fused_decoder_kernel(x_in_ref, mem_ref, attn_w_ref, vecs_ref,
                         ffw1_ref, ffb1_ref, ffw2_ref,
                         recon_w_ref, recon_b_ref, o_ref, x_ref,
                         *, num_heads, batch):
    l = pl.program_id(0)

    @pl.when(l == 0)
    def _():
        x_ref[...] = x_in_ref[...]          # init persistent activation scratch

    B = batch
    x = x_ref[...]                          # (B*S, E) f32, resident across layers
    mem_rows = mem_ref[...]                 # (B*M, E) bf16 (cast once in wrapper)
    mxu = mem_rows.dtype

    aw = attn_w_ref[0]                      # (8, E, E) bf16, this layer's attn weights
    vv = vecs_ref[0]                        # (15, E)   f32   biases + LN params

    # --- self-attention + residual + LN1 ------------------------------------ #
    x_mxu = x.astype(mxu)                   # single cast, reused for q and k/v
    sa = _mha(x_mxu, x_mxu, B,
              aw[0], aw[1], aw[2], aw[3],
              vv[_BQ_S:_BQ_S + 1], vv[_BK_S:_BK_S + 1],
              vv[_BV_S:_BV_S + 1], vv[_BO_S:_BO_S + 1], num_heads)
    x = _layernorm(x + sa, vv[_LN1_W:_LN1_W + 1], vv[_LN1_B:_LN1_B + 1])

    # --- cross-attention + residual + LN2 ----------------------------------- #
    ca = _mha(x.astype(mxu), mem_rows, B,
              aw[4], aw[5], aw[6], aw[7],
              vv[_BQ_C:_BQ_C + 1], vv[_BK_C:_BK_C + 1],
              vv[_BV_C:_BV_C + 1], vv[_BO_C:_BO_C + 1], num_heads)
    x = _layernorm(x + ca, vv[_LN2_W:_LN2_W + 1], vv[_LN2_B:_LN2_B + 1])

    # --- feed-forward (relu) + residual + LN3 -------------------------------- #
    h = jnp.dot(x.astype(mxu), ffw1_ref[0],
                preferred_element_type=jnp.float32) + ffb1_ref[0]
    h = jnp.maximum(h, 0.0)
    ff = jnp.dot(h.astype(mxu), ffw2_ref[0],
                 preferred_element_type=jnp.float32) + vv[_FF_B2:_FF_B2 + 1]
    x = _layernorm(x + ff, vv[_LN3_W:_LN3_W + 1], vv[_LN3_B:_LN3_B + 1])

    x_ref[...] = x                          # carry activations to the next layer

    # --- reconstruction linear, emitted on the last layer -------------------- #
    @pl.when(l == pl.num_programs(0) - 1)
    def _():
        o_ref[...] = (jnp.dot(x.astype(recon_w_ref.dtype), recon_w_ref[...],
                              preferred_element_type=jnp.float32)
                      + recon_b_ref[...])


# --------------------------------------------------------------------------- #
# Wrapper (layout plumbing + specs only)
# --------------------------------------------------------------------------- #
def transformer_decoder_forward(x_sbe, mem_sbe, packed, num_heads):
    # x_sbe: (S, B, E), mem_sbe: (M, B, E) -> (S, B, output_dim * patch_size)
    S, B, E = x_sbe.shape
    M = mem_sbe.shape[0]
    L = packed["attn_w"].shape[0]
    FF = packed["ffw1"].shape[2]
    O = packed["recon_w"].shape[1]

    x2 = jnp.transpose(x_sbe, (1, 0, 2)).reshape(B * S, E).astype(jnp.float32)
    mem2 = jnp.transpose(mem_sbe, (1, 0, 2)).reshape(B * M, E).astype(MXU_DTYPE)

    # ---- VMEM budget: 2x per-layer slab (double-buffered) + resident tensors ----
    per_layer = (8 * E * E + E * FF + FF * E) * 2 + (15 * E + FF) * 4
    resident = (B * S * E * 4) + (B * M * E * 2) + (E * O * 2) + O * 4 \
               + (B * S * O * 4) + (B * S * E * 4)
    vmem_bytes = min(max(2 * (2 * per_layer + resident) + (4 << 20), 32 << 20),
                     64 << 20)              # cap at v7x's 64 MiB physical VMEM

    # ---- advisory cost estimate for the XLA scheduler ----
    def _attn_flops(lq, lk):
        proj = 2 * B * (2 * lq + 2 * lk) * E * E                 # q,k,v,out proj
        attn = 4 * B * lq * lk * E                               # scores + PV
        return proj + attn
    flops = L * (_attn_flops(S, S) + _attn_flops(S, M) + 4 * B * S * E * FF) \
        + 2 * B * S * E * O
    transcendentals = L * B * num_heads * (S * S + S * M)
    bytes_accessed = (x2.size * 4 + mem2.size * 2 + B * S * O * 4
                      + sum(int(v.size) * v.dtype.itemsize for v in packed.values()))

    grid_spec = pltpu.PrefetchScalarGridSpec(
        num_scalar_prefetch=0,
        grid=(L,),
        in_specs=[
            pl.BlockSpec((B * S, E), lambda l: (0, 0)),            # x: fetched once
            pl.BlockSpec((B * M, E), lambda l: (0, 0)),            # memory: fetched once
            pl.BlockSpec((1, 8, E, E), lambda l: (l, 0, 0, 0)),    # attn W: streamed per layer
            pl.BlockSpec((1, 15, E), lambda l: (l, 0, 0)),         # biases + LN params
            pl.BlockSpec((1, E, FF), lambda l: (l, 0, 0)),         # FFN W1
            pl.BlockSpec((1, 1, FF), lambda l: (l, 0, 0)),         # FFN b1
            pl.BlockSpec((1, FF, E), lambda l: (l, 0, 0)),         # FFN W2
            pl.BlockSpec((E, O), lambda l: (0, 0)),                # recon W (resident)
            pl.BlockSpec((1, O), lambda l: (0, 0)),                # recon b (resident)
        ],
        out_specs=pl.BlockSpec((B * S, O), lambda l: (0, 0)),
        scratch_shapes=[pltpu.VMEM((B * S, E), jnp.float32)],      # persistent activations
    )

    out = pl.pallas_call(
        functools.partial(fused_decoder_kernel, num_heads=num_heads, batch=B),
        out_shape=jax.ShapeDtypeStruct((B * S, O), jnp.float32),
        grid_spec=grid_spec,
        compiler_params=pltpu.CompilerParams(
            dimension_semantics=("arbitrary",),      # sequential layer dependence
            vmem_limit_bytes=int(vmem_bytes)),
        cost_estimate=pl.CostEstimate(flops=int(flops),
                                      transcendentals=int(transcendentals),
                                      bytes_accessed=int(bytes_accessed)),
    )(x2, mem2, packed["attn_w"], packed["vecs"], packed["ffw1"],
      packed["ffb1"], packed["ffw2"], packed["recon_w"], packed["recon_b"])

    return jnp.transpose(out.reshape(B, S, O), (1, 0, 2))          # (S, B, O)


# --------------------------------------------------------------------------- #
# One-time host-side weight prep: pre-transpose, pre-split, stack, pack, bf16
# --------------------------------------------------------------------------- #
def pack_params(params):
    layers = params["layers"]
    E = layers[0]["sa_out_w"].shape[0]

    def qkv_t(w):     # (3E, E) packed [Wq; Wk; Wv] -> Wq^T, Wk^T, Wv^T in (in, out)
        return w[:E].T, w[E:2 * E].T, w[2 * E:].T

    attn_w, vecs, ffw1, ffb1, ffw2 = [], [], [], [], []
    for p in layers:
        wq_s, wk_s, wv_s = qkv_t(p["sa_in_w"])
        wq_c, wk_c, wv_c = qkv_t(p["ca_in_w"])
        attn_w.append(jnp.stack([wq_s, wk_s, wv_s, p["sa_out_w"].T,
                                 wq_c, wk_c, wv_c, p["ca_out_w"].T]))
        bs, bc = p["sa_in_b"], p["ca_in_b"]
        vecs.append(jnp.stack([
            bs[:E], bs[E:2 * E], bs[2 * E:], p["sa_out_b"],
            bc[:E], bc[E:2 * E], bc[2 * E:], p["ca_out_b"],
            p["ln1_w"], p["ln1_b"], p["ln2_w"], p["ln2_b"],
            p["ln3_w"], p["ln3_b"], p["ff_b2"]]))
        ffw1.append(p["ff_w1"].T)            # (E, FF)
        ffb1.append(p["ff_b1"][None, :])     # (1, FF)
        ffw2.append(p["ff_w2"].T)            # (FF, E)

    return dict(
        attn_w=jnp.stack(attn_w).astype(MXU_DTYPE),             # (L, 8, E, E)
        vecs=jnp.stack(vecs).astype(jnp.float32),               # (L, 15, E)
        ffw1=jnp.stack(ffw1).astype(MXU_DTYPE),                 # (L, E, FF)
        ffb1=jnp.stack(ffb1).astype(jnp.float32),               # (L, 1, FF)
        ffw2=jnp.stack(ffw2).astype(MXU_DTYPE),                 # (L, FF, E)
        recon_w=params["recon_w"].T.astype(MXU_DTYPE),          # (E, O)
        recon_b=params["recon_b"][None, :].astype(jnp.float32), # (1, O)
    )


# --------------------------------------------------------------------------- #
# Deterministic parameter init (PyTorch-layout shapes) + pure-JAX reference
# --------------------------------------------------------------------------- #
def init_params(key, embed_dim, num_layers, output_dim, patch_size, ffn_dim=2048):
    E, FF = embed_dim, ffn_dim
    O = output_dim * patch_size
    layers = []
    for _ in range(num_layers):
        key, *ks = jax.random.split(key, 19)
        layers.append(dict(
            sa_in_w=0.05 * jax.random.normal(ks[0], (3 * E, E), jnp.float32),
            sa_in_b=0.02 * jax.random.normal(ks[1], (3 * E,), jnp.float32),
            sa_out_w=0.05 * jax.random.normal(ks[2], (E, E), jnp.float32),
            sa_out_b=0.02 * jax.random.normal(ks[3], (E,), jnp.float32),
            ca_in_w=0.05 * jax.random.normal(ks[4], (3 * E, E), jnp.float32),
            ca_in_b=0.02 * jax.random.normal(ks[5], (3 * E,), jnp.float32),
            ca_out_w=0.05 * jax.random.normal(ks[6], (E, E), jnp.float32),
            ca_out_b=0.02 * jax.random.normal(ks[7], (E,), jnp.float32),
            ff_w1=0.05 * jax.random.normal(ks[8], (FF, E), jnp.float32),
            ff_b1=0.02 * jax.random.normal(ks[9], (FF,), jnp.float32),
            ff_w2=0.05 * jax.random.normal(ks[10], (E, FF), jnp.float32),
            ff_b2=0.02 * jax.random.normal(ks[11], (E,), jnp.float32),
            ln1_w=1.0 + 0.1 * jax.random.normal(ks[12], (E,), jnp.float32),
            ln1_b=0.1 * jax.random.normal(ks[13], (E,), jnp.float32),
            ln2_w=1.0 + 0.1 * jax.random.normal(ks[14], (E,), jnp.float32),
            ln2_b=0.1 * jax.random.normal(ks[15], (E,), jnp.float32),
            ln3_w=1.0 + 0.1 * jax.random.normal(ks[16], (E,), jnp.float32),
            ln3_b=0.1 * jax.random.normal(ks[17], (E,), jnp.float32),
        ))
    key, kw, kb = jax.random.split(key, 3)
    return dict(
        layers=layers,
        recon_w=0.05 * jax.random.normal(kw, (O, E), jnp.float32),
        recon_b=0.02 * jax.random.normal(kb, (O,), jnp.float32),
    )


def ref_forward(x_sbe, mem_sbe, params, num_heads):
    """Pure-JAX (non-Pallas) reference of the PyTorch module math, for validation."""
    x = jnp.transpose(x_sbe, (1, 0, 2))          # (B, S, E)
    mem = jnp.transpose(mem_sbe, (1, 0, 2))      # (B, M, E)
    B, _, E = x.shape
    H = num_heads
    dh = E // H

    def mha(q_in, kv_in, in_w, in_b, out_w, out_b):
        Lq, Lk = q_in.shape[1], kv_in.shape[1]
        q = q_in @ in_w[:E].T + in_b[:E]
        k = kv_in @ in_w[E:2 * E].T + in_b[E:2 * E]
        v = kv_in @ in_w[2 * E:].T + in_b[2 * E:]
        q = q.reshape(B, Lq, H, dh).transpose(0, 2, 1, 3)
        k = k.reshape(B, Lk, H, dh).transpose(0, 2, 1, 3)
        v = v.reshape(B, Lk, H, dh).transpose(0, 2, 1, 3)
        s = jnp.einsum("bhqd,bhkd->bhqk", q, k) / jnp.sqrt(jnp.float32(dh))
        p = jax.nn.softmax(s, axis=-1)
        o = jnp.einsum("bhqk,bhkd->bhqd", p, v)
        o = o.transpose(0, 2, 1, 3).reshape(B, Lq, E)
        return o @ out_w.T + out_b

    def ln(y, w, b):
        mu = y.mean(-1, keepdims=True)
        var = ((y - mu) ** 2).mean(-1, keepdims=True)
        return (y - mu) / jnp.sqrt(var + EPS) * w + b

    for p in params["layers"]:
        x = ln(x + mha(x, x, p["sa_in_w"], p["sa_in_b"], p["sa_out_w"], p["sa_out_b"]),
               p["ln1_w"], p["ln1_b"])
        x = ln(x + mha(x, mem, p["ca_in_w"], p["ca_in_b"], p["ca_out_w"], p["ca_out_b"]),
               p["ln2_w"], p["ln2_b"])
        hmid = jnp.maximum(x @ p["ff_w1"].T + p["ff_b1"], 0.0)
        x = ln(x + hmid @ p["ff_w2"].T + p["ff_b2"], p["ln3_w"], p["ln3_b"])

    out = x @ params["recon_w"].T + params["recon_b"]
    return jnp.transpose(out, (1, 0, 2))         # (S, B, O)


# --------------------------------------------------------------------------- #
if __name__ == "__main__":
    embed_dim, num_heads, num_layers = 32, 4, 2
    output_dim, patch_size = 4, 8
    S, M, B = 8, 10, 2   # target seq, memory seq, batch

    key = jax.random.PRNGKey(0)
    kx, kmem, kp = jax.random.split(key, 3)
    x = jax.random.normal(kx, (S, B, embed_dim), jnp.float32)         # (S, B, E)
    memory = jax.random.normal(kmem, (M, B, embed_dim), jnp.float32)  # (M, B, E)

    params = init_params(kp, embed_dim, num_layers, output_dim, patch_size)
    packed = pack_params(params)   # one-time host-side weight prep

    fwd = jax.jit(functools.partial(transformer_decoder_forward, num_heads=num_heads))
    out = jax.block_until_ready(fwd(x, memory, packed))

    assert out.shape == (S, B, output_dim * patch_size), out.shape
    assert bool(jnp.all(jnp.isfinite(out)))

    # Numerical sanity check vs a pure-JAX reference of the PyTorch math
    # (bf16 MXU operands + f32 accumulation + approx softmax recip => loose tol).
    ref = ref_forward(x, memory, params, num_heads)
    max_err = float(jnp.max(jnp.abs(out - ref)))
    assert max_err < 5e-2, f"max abs err vs reference: {max_err}"
    print("KERNEL_OK")
</pallas_src>

<mosaic_0001>
module attributes {stable_mosaic.version = 11 : i64} {
  func.func @fused_decoder_kernel(%arg0: i32, %arg1: memref<16x32xf32, #tpu.memory_space<vmem>>, %arg2: memref<20x32xbf16, #tpu.memory_space<vmem>>, %arg3: memref<1x8x32x32xbf16, #tpu.memory_space<vmem>>, %arg4: memref<1x15x32xf32, #tpu.memory_space<vmem>>, %arg5: memref<1x32x2048xbf16, #tpu.memory_space<vmem>>, %arg6: memref<1x1x2048xf32, #tpu.memory_space<vmem>>, %arg7: memref<1x2048x32xbf16, #tpu.memory_space<vmem>>, %arg8: memref<32x32xbf16, #tpu.memory_space<vmem>>, %arg9: memref<1x32xf32, #tpu.memory_space<vmem>>, %arg10: memref<16x32xf32, #tpu.memory_space<vmem>>, %arg11: memref<16x32xf32, #tpu.memory_space<vmem>>) attributes {dimension_semantics = [#tpu.dimension_semantics<arbitrary>], iteration_bounds = array<i64: 2>, scalar_prefetch = 0 : i64, scratch_operands = 1 : i64, tpu.core_type = #tpu.core_type<tc>, window_params = [{pipeline_mode = #tpu.pipeline_mode<synchronous>, transform_indices = @transform_0, window_bounds = array<i64: 16, 32>}, {pipeline_mode = #tpu.pipeline_mode<synchronous>, transform_indices = @transform_1, window_bounds = array<i64: 20, 32>}, {transform_indices = @transform_2, window_bounds = array<i64: 1, 8, 32, 32>}, {transform_indices = @transform_3, window_bounds = array<i64: 1, 15, 32>}, {transform_indices = @transform_4, window_bounds = array<i64: 1, 32, 2048>}, {transform_indices = @transform_5, window_bounds = array<i64: 1, 1, 2048>}, {transform_indices = @transform_6, window_bounds = array<i64: 1, 2048, 32>}, {pipeline_mode = #tpu.pipeline_mode<synchronous>, transform_indices = @transform_7, window_bounds = array<i64: 32, 32>}, {pipeline_mode = #tpu.pipeline_mode<synchronous>, transform_indices = @transform_8, window_bounds = array<i64: 1, 32>}, {pipeline_mode = #tpu.pipeline_mode<synchronous>, transform_indices = @transform_9, window_bounds = array<i64: 16, 32>}]} {
    %c0_i32 = arith.constant 0 : i32
    %0 = arith.cmpi eq, %arg0, %c0_i32 : i32
    %1 = arith.extui %0 : i1 to i32
    %c0_i32_0 = arith.constant 0 : i32
    %2 = arith.cmpi ne, %1, %c0_i32_0 : i32
    scf.if %2 {
      %c0_82 = arith.constant 0 : index
      %c0_83 = arith.constant 0 : index
      %305 = vector.load %arg1[%c0_82, %c0_83] : memref<16x32xf32, #tpu.memory_space<vmem>>, vector<16x32xf32>
      %c0_84 = arith.constant 0 : index
      %c0_85 = arith.constant 0 : index
      %306 = vector.load %arg11[%c0_84, %c0_85] : memref<16x32xf32, #tpu.memory_space<vmem>>, vector<16x32xf32>
      tpu.vector_store %arg11[%c0_84, %c0_85], %305 {strides = array<i32>} : memref<16x32xf32, #tpu.memory_space<vmem>>, vector<16x32xf32>,
    } else {
    }
    %c0 = arith.constant 0 : index
    %c0_1 = arith.constant 0 : index
    %3 = vector.load %arg11[%c0, %c0_1] : memref<16x32xf32, #tpu.memory_space<vmem>>, vector<16x32xf32>
    %c0_2 = arith.constant 0 : index
    %c0_3 = arith.constant 0 : index
    %4 = vector.load %arg2[%c0_2, %c0_3] : memref<20x32xbf16, #tpu.memory_space<vmem>>, vector<20x32xbf16>
    %c0_4 = arith.constant 0 : index
    %c0_5 = arith.constant 0 : index
    %c0_6 = arith.constant 0 : index
    %c0_7 = arith.constant 0 : index
    %5 = vector.load %arg3[%c0_4, %c0_5, %c0_6, %c0_7] : memref<1x8x32x32xbf16, #tpu.memory_space<vmem>>, vector<1x8x32x32xbf16>
    %6 = vector.shape_cast %5 : vector<1x8x32x32xbf16> to vector<8x32x32xbf16>
    %c0_8 = arith.constant 0 : index
    %c0_9 = arith.constant 0 : index
    %c0_10 = arith.constant 0 : index
    %7 = vector.load %arg4[%c0_8, %c0_9, %c0_10] : memref<1x15x32xf32, #tpu.memory_space<vmem>>, vector<1x15x32xf32>
    %8 = vector.shape_cast %7 : vector<1x15x32xf32> to vector<15x32xf32>
    %9 = arith.truncf %3 : vector<16x32xf32> to vector<16x32xbf16>
    %10 = vector.extract_strided_slice %6 {offsets = [0, 0, 0], sizes = [1, 32, 32], strides = [1, 1, 1]} : vector<8x32x32xbf16> to vector<1x32x32xbf16>
    %11 = vector.shape_cast %10 : vector<1x32x32xbf16> to vector<32x32xbf16>
    %12 = vector.extract_strided_slice %6 {offsets = [1, 0, 0], sizes = [1, 32, 32], strides = [1, 1, 1]} : vector<8x32x32xbf16> to vector<1x32x32xbf16>
    %13 = vector.shape_cast %12 : vector<1x32x32xbf16> to vector<32x32xbf16>
    %14 = vector.extract_strided_slice %6 {offsets = [2, 0, 0], sizes = [1, 32, 32], strides = [1, 1, 1]} : vector<8x32x32xbf16> to vector<1x32x32xbf16>
    %15 = vector.shape_cast %14 : vector<1x32x32xbf16> to vector<32x32xbf16>
    %16 = vector.extract_strided_slice %6 {offsets = [3, 0, 0], sizes = [1, 32, 32], strides = [1, 1, 1]} : vector<8x32x32xbf16> to vector<1x32x32xbf16>
    %17 = vector.shape_cast %16 : vector<1x32x32xbf16> to vector<32x32xbf16>
    %18 = vector.extract_strided_slice %8 {offsets = [0, 0], sizes = [1, 32], strides = [1, 1]} : vector<15x32xf32> to vector<1x32xf32>
    %19 = vector.extract_strided_slice %8 {offsets = [1, 0], sizes = [1, 32], strides = [1, 1]} : vector<15x32xf32> to vector<1x32xf32>
    %20 = vector.extract_strided_slice %8 {offsets = [2, 0], sizes = [1, 32], strides = [1, 1]} : vector<15x32xf32> to vector<1x32xf32>
    %21 = vector.extract_strided_slice %8 {offsets = [3, 0], sizes = [1, 32], strides = [1, 1]} : vector<15x32xf32> to vector<1x32xf32>
    %cst = arith.constant dense<0.000000e+00> : vector<16x32xf32>
    %22 = tpu.matmul %9, %11, %cst {dimension_numbers = #tpu.dot_dimension_numbers<[1], [0], [0], [1], [0, 0, 1, 1], [], []>} : vector<16x32xbf16>, vector<32x32xbf16>, vector<16x32xf32> -> vector<16x32xf32>
    %23 = vector.broadcast %18 : vector<1x32xf32> to vector<16x32xf32>
    %24 = arith.addf %22, %23 : vector<16x32xf32>
    %cst_11 = arith.constant 0.353553385 : f32
    %25 = vector.broadcast %cst_11 : f32 to vector<16x32xf32>
    %26 = arith.mulf %24, %25 : vector<16x32xf32>
    %27 = arith.truncf %26 : vector<16x32xf32> to vector<16x32xbf16>
    %28 = vector.shape_cast %27 : vector<16x32xbf16> to vector<2x8x32xbf16>
    %cst_12 = arith.constant dense<0.000000e+00> : vector<16x32xf32>
    %29 = tpu.matmul %9, %13, %cst_12 {dimension_numbers = #tpu.dot_dimension_numbers<[1], [0], [0], [1], [0, 0, 1, 1], [], []>} : vector<16x32xbf16>, vector<32x32xbf16>, vector<16x32xf32> -> vector<16x32xf32>
    %30 = vector.broadcast %19 : vector<1x32xf32> to vector<16x32xf32>
    %31 = arith.addf %29, %30 : vector<16x32xf32>
    %32 = arith.truncf %31 : vector<16x32xf32> to vector<16x32xbf16>
    %33 = vector.shape_cast %32 : vector<16x32xbf16> to vector<2x8x32xbf16>
    %cst_13 = arith.constant dense<0.000000e+00> : vector<16x32xf32>
    %34 = tpu.matmul %9, %15, %cst_13 {dimension_numbers = #tpu.dot_dimension_numbers<[1], [0], [0], [1], [0, 0, 1, 1], [], []>} : vector<16x32xbf16>, vector<32x32xbf16>, vector<16x32xf32> -> vector<16x32xf32>
    %35 = vector.broadcast %20 : vector<1x32xf32> to vector<16x32xf32>
    %36 = arith.addf %34, %35 : vector<16x32xf32>
    %37 = arith.truncf %36 : vector<16x32xf32> to vector<16x32xbf16>
    %38 = vector.shape_cast %37 : vector<16x32xbf16> to vector<2x8x32xbf16>
    %39 = vector.extract_strided_slice %28 {offsets = [0, 0, 0], sizes = [2, 8, 8], strides = [1, 1, 1]} : vector<2x8x32xbf16> to vector<2x8x8xbf16>
    %40 = vector.extract_strided_slice %33 {offsets = [0, 0, 0], sizes = [2, 8, 8], strides = [1, 1, 1]} : vector<2x8x32xbf16> to vector<2x8x8xbf16>
    "tpu.trace_start"() <{level = 10 : i32, message = "bqd,bkd->bqk"}> : () -> ()
    %cst_14 = arith.constant dense<0.000000e+00> : vector<2x8x8xf32>
    %41 = tpu.matmul %39, %40, %cst_14 {dimension_numbers = #tpu.dot_dimension_numbers<[2], [2], [1], [1], [0, 0, 0, 1, 1, 1], [0], [0]>} : vector<2x8x8xbf16>, vector<2x8x8xbf16>, vector<2x8x8xf32> -> vector<2x8x8xf32>
    "tpu.trace_stop"() : () -> ()
    %cst_15 = arith.constant dense<0xFF800000> : vector<2x8xf32>
    %42 = vector.multi_reduction <maximumf>, %41, %cst_15 [2] : vector<2x8x8xf32> to vector<2x8xf32>
    %43 = vector.shape_cast %42 : vector<2x8xf32> to vector<2x8x1xf32>
    %44 = vector.broadcast %43 : vector<2x8x1xf32> to vector<2x8x8xf32>
    %45 = arith.subf %41, %44 : vector<2x8x8xf32>
    %46 = math.exp %45 : vector<2x8x8xf32>
    %cst_16 = arith.constant dense<0.000000e+00> : vector<2x8xf32>
    %47 = vector.multi_reduction <add>, %46, %cst_16 [2] : vector<2x8x8xf32> to vector<2x8xf32>
    %48 = vector.shape_cast %47 : vector<2x8xf32> to vector<2x8x1xf32>
    %49 = tpu.reciprocal %48 {approx = true} : vector<2x8x1xf32> -> vector<2x8x1xf32>
    %50 = vector.broadcast %49 : vector<2x8x1xf32> to vector<2x8x8xf32>
    %51 = arith.mulf %46, %50 : vector<2x8x8xf32>
    %52 = arith.truncf %51 : vector<2x8x8xf32> to vector<2x8x8xbf16>
    %53 = vector.extract_strided_slice %38 {offsets = [0, 0, 0], sizes = [2, 8, 8], strides = [1, 1, 1]} : vector<2x8x32xbf16> to vector<2x8x8xbf16>
    "tpu.trace_start"() <{level = 10 : i32, message = "bqk,bkd->bqd"}> : () -> ()
    %cst_17 = arith.constant dense<0.000000e+00> : vector<2x8x8xf32>
    %54 = tpu.matmul %52, %53, %cst_17 {dimension_numbers = #tpu.dot_dimension_numbers<[2], [1], [1], [2], [0, 0, 0, 1, 1, 2], [0], [0]>} : vector<2x8x8xbf16>, vector<2x8x8xbf16>, vector<2x8x8xf32> -> vector<2x8x8xf32>
    "tpu.trace_stop"() : () -> ()
    %55 = vector.extract_strided_slice %28 {offsets = [0, 0, 8], sizes = [2, 8, 8], strides = [1, 1, 1]} : vector<2x8x32xbf16> to vector<2x8x8xbf16>
    %56 = vector.extract_strided_slice %33 {offsets = [0, 0, 8], sizes = [2, 8, 8], strides = [1, 1, 1]} : vector<2x8x32xbf16> to vector<2x8x8xbf16>
    "tpu.trace_start"() <{level = 10 : i32, message = "bqd,bkd->bqk"}> : () -> ()
    %cst_18 = arith.constant dense<0.000000e+00> : vector<2x8x8xf32>
    %57 = tpu.matmul %55, %56, %cst_18 {dimension_numbers = #tpu.dot_dimension_numbers<[2], [2], [1], [1], [0, 0, 0, 1, 1, 1], [0], [0]>} : vector<2x8x8xbf16>, vector<2x8x8xbf16>, vector<2x8x8xf32> -> vector<2x8x8xf32>
    "tpu.trace_stop"() : () -> ()
    %cst_19 = arith.constant dense<0xFF800000> : vector<2x8xf32>
    %58 = vector.multi_reduction <maximumf>, %57, %cst_19 [2] : vector<2x8x8xf32> to vector<2x8xf32>
    %59 = vector.shape_cast %58 : vector<2x8xf32> to vector<2x8x1xf32>
    %60 = vector.broadcast %59 : vector<2x8x1xf32> to vector<2x8x8xf32>
    %61 = arith.subf %57, %60 : vector<2x8x8xf32>
    %62 = math.exp %61 : vector<2x8x8xf32>
    %cst_20 = arith.constant dense<0.000000e+00> : vector<2x8xf32>
    %63 = vector.multi_reduction <add>, %62, %cst_20 [2] : vector<2x8x8xf32> to vector<2x8xf32>
    %64 = vector.shape_cast %63 : vector<2x8xf32> to vector<2x8x1xf32>
    %65 = tpu.reciprocal %64 {approx = true} : vector<2x8x1xf32> -> vector<2x8x1xf32>
    %66 = vector.broadcast %65 : vector<2x8x1xf32> to vector<2x8x8xf32>
    %67 = arith.mulf %62, %66 : vector<2x8x8xf32>
    %68 = arith.truncf %67 : vector<2x8x8xf32> to vector<2x8x8xbf16>
    %69 = vector.extract_strided_slice %38 {offsets = [0, 0, 8], sizes = [2, 8, 8], strides = [1, 1, 1]} : vector<2x8x32xbf16> to vector<2x8x8xbf16>
    "tpu.trace_start"() <{level = 10 : i32, message = "bqk,bkd->bqd"}> : () -> ()
    %cst_21 = arith.constant dense<0.000000e+00> : vector<2x8x8xf32>
    %70 = tpu.matmul %68, %69, %cst_21 {dimension_numbers = #tpu.dot_dimension_numbers<[2], [1], [1], [2], [0, 0, 0, 1, 1, 2], [0], [0]>} : vector<2x8x8xbf16>, vector<2x8x8xbf16>, vector<2x8x8xf32> -> vector<2x8x8xf32>
    "tpu.trace_stop"() : () -> ()
    %71 = vector.extract_strided_slice %28 {offsets = [0, 0, 16], sizes = [2, 8, 8], strides = [1, 1, 1]} : vector<2x8x32xbf16> to vector<2x8x8xbf16>
    %72 = vector.extract_strided_slice %33 {offsets = [0, 0, 16], sizes = [2, 8, 8], strides = [1, 1, 1]} : vector<2x8x32xbf16> to vector<2x8x8xbf16>
    "tpu.trace_start"() <{level = 10 : i32, message = "bqd,bkd->bqk"}> : () -> ()
    %cst_22 = arith.constant dense<0.000000e+00> : vector<2x8x8xf32>
    %73 = tpu.matmul %71, %72, %cst_22 {dimension_numbers = #tpu.dot_dimension_numbers<[2], [2], [1], [1], [0, 0, 0, 1, 1, 1], [0], [0]>} : vector<2x8x8xbf16>, vector<2x8x8xbf16>, vector<2x8x8xf32> -> vector<2x8x8xf32>
    "tpu.trace_stop"() : () -> ()
    %cst_23 = arith.constant dense<0xFF800000> : vector<2x8xf32>
    %74 = vector.multi_reduction <maximumf>, %73, %cst_23 [2] : vector<2x8x8xf32> to vector<2x8xf32>
    %75 = vector.shape_cast %74 : vector<2x8xf32> to vector<2x8x1xf32>
    %76 = vector.broadcast %75 : vector<2x8x1xf32> to vector<2x8x8xf32>
    %77 = arith.subf %73, %76 : vector<2x8x8xf32>
    %78 = math.exp %77 : vector<2x8x8xf32>
    %cst_24 = arith.constant dense<0.000000e+00> : vector<2x8xf32>
    %79 = vector.multi_reduction <add>, %78, %cst_24 [2] : vector<2x8x8xf32> to vector<2x8xf32>
    %80 = vector.shape_cast %79 : vector<2x8xf32> to vector<2x8x1xf32>
    %81 = tpu.reciprocal %80 {approx = true} : vector<2x8x1xf32> -> vector<2x8x1xf32>
    %82 = vector.broadcast %81 : vector<2x8x1xf32> to vector<2x8x8xf32>
    %83 = arith.mulf %78, %82 : vector<2x8x8xf32>
    %84 = arith.truncf %83 : vector<2x8x8xf32> to vector<2x8x8xbf16>
    %85 = vector.extract_strided_slice %38 {offsets = [0, 0, 16], sizes = [2, 8, 8], strides = [1, 1, 1]} : vector<2x8x32xbf16> to vector<2x8x8xbf16>
    "tpu.trace_start"() <{level = 10 : i32, message = "bqk,bkd->bqd"}> : () -> ()
    %cst_25 = arith.constant dense<0.000000e+00> : vector<2x8x8xf32>
    %86 = tpu.matmul %84, %85, %cst_25 {dimension_numbers = #tpu.dot_dimension_numbers<[2], [1], [1], [2], [0, 0, 0, 1, 1, 2], [0], [0]>} : vector<2x8x8xbf16>, vector<2x8x8xbf16>, vector<2x8x8xf32> -> vector<2x8x8xf32>
    "tpu.trace_stop"() : () -> ()
    %87 = vector.extract_strided_slice %28 {offsets = [0, 0, 24], sizes = [2, 8, 8], strides = [1, 1, 1]} : vector<2x8x32xbf16> to vector<2x8x8xbf16>
    %88 = vector.extract_strided_slice %33 {offsets = [0, 0, 24], sizes = [2, 8, 8], strides = [1, 1, 1]} : vector<2x8x32xbf16> to vector<2x8x8xbf16>
    "tpu.trace_start"() <{level = 10 : i32, message = "bqd,bkd->bqk"}> : () -> ()
    %cst_26 = arith.constant dense<0.000000e+00> : vector<2x8x8xf32>
    %89 = tpu.matmul %87, %88, %cst_26 {dimension_numbers = #tpu.dot_dimension_numbers<[2], [2], [1], [1], [0, 0, 0, 1, 1, 1], [0], [0]>} : vector<2x8x8xbf16>, vector<2x8x8xbf16>, vector<2x8x8xf32> -> vector<2x8x8xf32>
    "tpu.trace_stop"() : () -> ()
    %cst_27 = arith.constant dense<0xFF800000> : vector<2x8xf32>
    %90 = vector.multi_reduction <maximumf>, %89, %cst_27 [2] : vector<2x8x8xf32> to vector<2x8xf32>
    %91 = vector.shape_cast %90 : vector<2x8xf32> to vector<2x8x1xf32>
    %92 = vector.broadcast %91 : vector<2x8x1xf32> to vector<2x8x8xf32>
    %93 = arith.subf %89, %92 : vector<2x8x8xf32>
    %94 = math.exp %93 : vector<2x8x8xf32>
    %cst_28 = arith.constant dense<0.000000e+00> : vector<2x8xf32>
    %95 = vector.multi_reduction <add>, %94, %cst_28 [2] : vector<2x8x8xf32> to vector<2x8xf32>
    %96 = vector.shape_cast %95 : vector<2x8xf32> to vector<2x8x1xf32>
    %97 = tpu.reciprocal %96 {approx = true} : vector<2x8x1xf32> -> vector<2x8x1xf32>
    %98 = vector.broadcast %97 : vector<2x8x1xf32> to vector<2x8x8xf32>
    %99 = arith.mulf %94, %98 : vector<2x8x8xf32>
    %100 = arith.truncf %99 : vector<2x8x8xf32> to vector<2x8x8xbf16>
    %101 = vector.extract_strided_slice %38 {offsets = [0, 0, 24], sizes = [2, 8, 8], strides = [1, 1, 1]} : vector<2x8x32xbf16> to vector<2x8x8xbf16>
    "tpu.trace_start"() <{level = 10 : i32, message = "bqk,bkd->bqd"}> : () -> ()
    %cst_29 = arith.constant dense<0.000000e+00> : vector<2x8x8xf32>
    %102 = tpu.matmul %100, %101, %cst_29 {dimension_numbers = #tpu.dot_dimension_numbers<[2], [1], [1], [2], [0, 0, 0, 1, 1, 2], [0], [0]>} : vector<2x8x8xbf16>, vector<2x8x8xbf16>, vector<2x8x8xf32> -> vector<2x8x8xf32>
    "tpu.trace_stop"() : () -> ()
    %103 = tpu.concatenate %54, %70, %86, %102 in 2 : vector<2x8x8xf32>, vector<2x8x8xf32>, vector<2x8x8xf32>, vector<2x8x8xf32> -> vector<2x8x32xf32>
    %104 = vector.shape_cast %103 : vector<2x8x32xf32> to vector<16x32xf32>
    %105 = arith.truncf %104 : vector<16x32xf32> to vector<16x32xbf16>
    %cst_30 = arith.constant dense<0.000000e+00> : vector<16x32xf32>
    %106 = tpu.matmul %105, %17, %cst_30 {dimension_numbers = #tpu.dot_dimension_numbers<[1], [0], [0], [1], [0, 0, 1, 1], [], []>} : vector<16x32xbf16>, vector<32x32xbf16>, vector<16x32xf32> -> vector<16x32xf32>
    %107 = vector.broadcast %21 : vector<1x32xf32> to vector<16x32xf32>
    %108 = arith.addf %106, %107 : vector<16x32xf32>
    %109 = arith.addf %3, %108 : vector<16x32xf32>
    %110 = vector.extract_strided_slice %8 {offsets = [8, 0], sizes = [1, 32], strides = [1, 1]} : vector<15x32xf32> to vector<1x32xf32>
    %111 = vector.extract_strided_slice %8 {offsets = [9, 0], sizes = [1, 32], strides = [1, 1]} : vector<15x32xf32> to vector<1x32xf32>
    %cst_31 = arith.constant dense<0.000000e+00> : vector<16xf32>
    %112 = vector.multi_reduction <add>, %109, %cst_31 [1] : vector<16x32xf32> to vector<16xf32>
    %113 = vector.shape_cast %112 : vector<16xf32> to vector<16x1xf32>
    %cst_32 = arith.constant 3.200000e+01 : f32
    %114 = vector.broadcast %cst_32 : f32 to vector<16x1xf32>
    %115 = arith.divf %113, %114 : vector<16x1xf32>
    %116 = vector.broadcast %115 : vector<16x1xf32> to vector<16x32xf32>
    %117 = arith.subf %109, %116 : vector<16x32xf32>
    %118 = arith.mulf %117, %117 : vector<16x32xf32>
    %cst_33 = arith.constant dense<0.000000e+00> : vector<16xf32>
    %119 = vector.multi_reduction <add>, %118, %cst_33 [1] : vector<16x32xf32> to vector<16xf32>
    %120 = vector.shape_cast %119 : vector<16xf32> to vector<16x1xf32>
    %cst_34 = arith.constant 3.200000e+01 : f32
    %121 = vector.broadcast %cst_34 : f32 to vector<16x1xf32>
    %122 = arith.divf %120, %121 : vector<16x1xf32>
    %123 = vector.broadcast %115 : vector<16x1xf32> to vector<16x32xf32>
    %124 = arith.subf %109, %123 : vector<16x32xf32>
    %cst_35 = arith.constant 9.99999974E-6 : f32
    %125 = vector.broadcast %cst_35 : f32 to vector<16x1xf32>
    %126 = arith.addf %122, %125 : vector<16x1xf32>
    %127 = math.rsqrt %126 : vector<16x1xf32>
    %128 = vector.broadcast %127 : vector<16x1xf32> to vector<16x32xf32>
    %129 = arith.mulf %124, %128 : vector<16x32xf32>
    %130 = vector.broadcast %110 : vector<1x32xf32> to vector<16x32xf32>
    %131 = arith.mulf %129, %130 : vector<16x32xf32>
    %132 = vector.broadcast %111 : vector<1x32xf32> to vector<16x32xf32>
    %133 = arith.addf %131, %132 : vector<16x32xf32>
    %134 = arith.truncf %133 : vector<16x32xf32> to vector<16x32xbf16>
    %135 = vector.extract_strided_slice %6 {offsets = [4, 0, 0], sizes = [1, 32, 32], strides = [1, 1, 1]} : vector<8x32x32xbf16> to vector<1x32x32xbf16>
    %136 = vector.shape_cast %135 : vector<1x32x32xbf16> to vector<32x32xbf16>
    %137 = vector.extract_strided_slice %6 {offsets = [5, 0, 0], sizes = [1, 32, 32], strides = [1, 1, 1]} : vector<8x32x32xbf16> to vector<1x32x32xbf16>
    %138 = vector.shape_cast %137 : vector<1x32x32xbf16> to vector<32x32xbf16>
    %139 = vector.extract_strided_slice %6 {offsets = [6, 0, 0], sizes = [1, 32, 32], strides = [1, 1, 1]} : vector<8x32x32xbf16> to vector<1x32x32xbf16>
    %140 = vector.shape_cast %139 : vector<1x32x32xbf16> to vector<32x32xbf16>
    %141 = vector.extract_strided_slice %6 {offsets = [7, 0, 0], sizes = [1, 32, 32], strides = [1, 1, 1]} : vector<8x32x32xbf16> to vector<1x32x32xbf16>
    %142 = vector.shape_cast %141 : vector<1x32x32xbf16> to vector<32x32xbf16>
    %143 = vector.extract_strided_slice %8 {offsets = [4, 0], sizes = [1, 32], strides = [1, 1]} : vector<15x32xf32> to vector<1x32xf32>
    %144 = vector.extract_strided_slice %8 {offsets = [5, 0], sizes = [1, 32], strides = [1, 1]} : vector<15x32xf32> to vector<1x32xf32>
    %145 = vector.extract_strided_slice %8 {offsets = [6, 0], sizes = [1, 32], strides = [1, 1]} : vector<15x32xf32> to vector<1x32xf32>
    %146 = vector.extract_strided_slice %8 {offsets = [7, 0], sizes = [1, 32], strides = [1, 1]} : vector<15x32xf32> to vector<1x32xf32>
    %cst_36 = arith.constant dense<0.000000e+00> : vector<16x32xf32>
    %147 = tpu.matmul %134, %136, %cst_36 {dimension_numbers = #tpu.dot_dimension_numbers<[1], [0], [0], [1], [0, 0, 1, 1], [], []>} : vector<16x32xbf16>, vector<32x32xbf16>, vector<16x32xf32> -> vector<16x32xf32>
    %148 = vector.broadcast %143 : vector<1x32xf32> to vector<16x32xf32>
    %149 = arith.addf %147, %148 : vector<16x32xf32>
    %cst_37 = arith.constant 0.353553385 : f32
    %150 = vector.broadcast %cst_37 : f32 to vector<16x32xf32>
    %151 = arith.mulf %149, %150 : vector<16x32xf32>
    %152 = arith.truncf %151 : vector<16x32xf32> to vector<16x32xbf16>
    %153 = vector.shape_cast %152 : vector<16x32xbf16> to vector<2x8x32xbf16>
    %cst_38 = arith.constant dense<0.000000e+00> : vector<20x32xf32>
    %154 = tpu.matmul %4, %138, %cst_38 {dimension_numbers = #tpu.dot_dimension_numbers<[1], [0], [0], [1], [0, 0, 1, 1], [], []>} : vector<20x32xbf16>, vector<32x32xbf16>, vector<20x32xf32> -> vector<20x32xf32>
    %155 = vector.broadcast %144 : vector<1x32xf32> to vector<20x32xf32>
    %156 = arith.addf %154, %155 : vector<20x32xf32>
    %157 = arith.truncf %156 : vector<20x32xf32> to vector<20x32xbf16>
    %158 = vector.shape_cast %157 : vector<20x32xbf16> to vector<2x10x32xbf16>
    %cst_39 = arith.constant dense<0.000000e+00> : vector<20x32xf32>
    %159 = tpu.matmul %4, %140, %cst_39 {dimension_numbers = #tpu.dot_dimension_numbers<[1], [0], [0], [1], [0, 0, 1, 1], [], []>} : vector<20x32xbf16>, vector<32x32xbf16>, vector<20x32xf32> -> vector<20x32xf32>
    %160 = vector.broadcast %145 : vector<1x32xf32> to vector<20x32xf32>
    %161 = arith.addf %159, %160 : vector<20x32xf32>
    %162 = arith.truncf %161 : vector<20x32xf32> to vector<20x32xbf16>
    %163 = vector.shape_cast %162 : vector<20x32xbf16> to vector<2x10x32xbf16>
    %164 = vector.extract_strided_slice %153 {offsets = [0, 0, 0], sizes = [2, 8, 8], strides = [1, 1, 1]} : vector<2x8x32xbf16> to vector<2x8x8xbf16>
    %165 = vector.extract_strided_slice %158 {offsets = [0, 0, 0], sizes = [2, 10, 8], strides = [1, 1, 1]} : vector<2x10x32xbf16> to vector<2x10x8xbf16>
    "tpu.trace_start"() <{level = 10 : i32, message = "bqd,bkd->bqk"}> : () -> ()
    %cst_40 = arith.constant dense<0.000000e+00> : vector<2x8x10xf32>
    %166 = tpu.matmul %164, %165, %cst_40 {dimension_numbers = #tpu.dot_dimension_numbers<[2], [2], [1], [1], [0, 0, 0, 1, 1, 1], [0], [0]>} : vector<2x8x8xbf16>, vector<2x10x8xbf16>, vector<2x8x10xf32> -> vector<2x8x10xf32>
    "tpu.trace_stop"() : () -> ()
    %cst_41 = arith.constant dense<0xFF800000> : vector<2x8xf32>
    %167 = vector.multi_reduction <maximumf>, %166, %cst_41 [2] : vector<2x8x10xf32> to vector<2x8xf32>
    %168 = vector.shape_cast %167 : vector<2x8xf32> to vector<2x8x1xf32>
    %169 = vector.broadcast %168 : vector<2x8x1xf32> to vector<2x8x10xf32>
    %170 = arith.subf %166, %169 : vector<2x8x10xf32>
    %171 = math.exp %170 : vector<2x8x10xf32>
    %cst_42 = arith.constant dense<0.000000e+00> : vector<2x8xf32>
    %172 = vector.multi_reduction <add>, %171, %cst_42 [2] : vector<2x8x10xf32> to vector<2x8xf32>
    %173 = vector.shape_cast %172 : vector<2x8xf32> to vector<2x8x1xf32>
    %174 = tpu.reciprocal %173 {approx = true} : vector<2x8x1xf32> -> vector<2x8x1xf32>
    %175 = vector.broadcast %174 : vector<2x8x1xf32> to vector<2x8x10xf32>
    %176 = arith.mulf %171, %175 : vector<2x8x10xf32>
    %177 = arith.truncf %176 : vector<2x8x10xf32> to vector<2x8x10xbf16>
    %178 = vector.extract_strided_slice %163 {offsets = [0, 0, 0], sizes = [2, 10, 8], strides = [1, 1, 1]} : vector<2x10x32xbf16> to vector<2x10x8xbf16>
    "tpu.trace_start"() <{level = 10 : i32, message = "bqk,bkd->bqd"}> : () -> ()
    %cst_43 = arith.constant dense<0.000000e+00> : vector<2x8x8xf32>
    %179 = tpu.matmul %177, %178, %cst_43 {dimension_numbers = #tpu.dot_dimension_numbers<[2], [1], [1], [2], [0, 0, 0, 1, 1, 2], [0], [0]>} : vector<2x8x10xbf16>, vector<2x10x8xbf16>, vector<2x8x8xf32> -> vector<2x8x8xf32>
    "tpu.trace_stop"() : () -> ()
    %180 = vector.extract_strided_slice %153 {offsets = [0, 0, 8], sizes = [2, 8, 8], strides = [1, 1, 1]} : vector<2x8x32xbf16> to vector<2x8x8xbf16>
    %181 = vector.extract_strided_slice %158 {offsets = [0, 0, 8], sizes = [2, 10, 8], strides = [1, 1, 1]} : vector<2x10x32xbf16> to vector<2x10x8xbf16>
    "tpu.trace_start"() <{level = 10 : i32, message = "bqd,bkd->bqk"}> : () -> ()
    %cst_44 = arith.constant dense<0.000000e+00> : vector<2x8x10xf32>
    %182 = tpu.matmul %180, %181, %cst_44 {dimension_numbers = #tpu.dot_dimension_numbers<[2], [2], [1], [1], [0, 0, 0, 1, 1, 1], [0], [0]>} : vector<2x8x8xbf16>, vector<2x10x8xbf16>, vector<2x8x10xf32> -> vector<2x8x10xf32>
    "tpu.trace_stop"() : () -> ()
    %cst_45 = arith.constant dense<0xFF800000> : vector<2x8xf32>
    %183 = vector.multi_reduction <maximumf>, %182, %cst_45 [2] : vector<2x8x10xf32> to vector<2x8xf32>
    %184 = vector.shape_cast %183 : vector<2x8xf32> to vector<2x8x1xf32>
    %185 = vector.broadcast %184 : vector<2x8x1xf32> to vector<2x8x10xf32>
    %186 = arith.subf %182, %185 : vector<2x8x10xf32>
    %187 = math.exp %186 : vector<2x8x10xf32>
    %cst_46 = arith.constant dense<0.000000e+00> : vector<2x8xf32>
    %188 = vector.multi_reduction <add>, %187, %cst_46 [2] : vector<2x8x10xf32> to vector<2x8xf32>
    %189 = vector.shape_cast %188 : vector<2x8xf32> to vector<2x8x1xf32>
    %190 = tpu.reciprocal %189 {approx = true} : vector<2x8x1xf32> -> vector<2x8x1xf32>
    %191 = vector.broadcast %190 : vector<2x8x1xf32> to vector<2x8x10xf32>
    %192 = arith.mulf %187, %191 : vector<2x8x10xf32>
    %193 = arith.truncf %192 : vector<2x8x10xf32> to vector<2x8x10xbf16>
    %194 = vector.extract_strided_slice %163 {offsets = [0, 0, 8], sizes = [2, 10, 8], strides = [1, 1, 1]} : vector<2x10x32xbf16> to vector<2x10x8xbf16>
    "tpu.trace_start"() <{level = 10 : i32, message = "bqk,bkd->bqd"}> : () -> ()
    %cst_47 = arith.constant dense<0.000000e+00> : vector<2x8x8xf32>
    %195 = tpu.matmul %193, %194, %cst_47 {dimension_numbers = #tpu.dot_dimension_numbers<[2], [1], [1], [2], [0, 0, 0, 1, 1, 2], [0], [0]>} : vector<2x8x10xbf16>, vector<2x10x8xbf16>, vector<2x8x8xf32> -> vector<2x8x8xf32>
    "tpu.trace_stop"() : () -> ()
    %196 = vector.extract_strided_slice %153 {offsets = [0, 0, 16], sizes = [2, 8, 8], strides = [1, 1, 1]} : vector<2x8x32xbf16> to vector<2x8x8xbf16>
    %197 = vector.extract_strided_slice %158 {offsets = [0, 0, 16], sizes = [2, 10, 8], strides = [1, 1, 1]} : vector<2x10x32xbf16> to vector<2x10x8xbf16>
    "tpu.trace_start"() <{level = 10 : i32, message = "bqd,bkd->bqk"}> : () -> ()
    %cst_48 = arith.constant dense<0.000000e+00> : vector<2x8x10xf32>
    %198 = tpu.matmul %196, %197, %cst_48 {dimension_numbers = #tpu.dot_dimension_numbers<[2], [2], [1], [1], [0, 0, 0, 1, 1, 1], [0], [0]>} : vector<2x8x8xbf16>, vector<2x10x8xbf16>, vector<2x8x10xf32> -> vector<2x8x10xf32>
    "tpu.trace_stop"() : () -> ()
    %cst_49 = arith.constant dense<0xFF800000> : vector<2x8xf32>
    %199 = vector.multi_reduction <maximumf>, %198, %cst_49 [2] : vector<2x8x10xf32> to vector<2x8xf32>
    %200 = vector.shape_cast %199 : vector<2x8xf32> to vector<2x8x1xf32>
    %201 = vector.broadcast %200 : vector<2x8x1xf32> to vector<2x8x10xf32>
    %202 = arith.subf %198, %201 : vector<2x8x10xf32>
    %203 = math.exp %202 : vector<2x8x10xf32>
    %cst_50 = arith.constant dense<0.000000e+00> : vector<2x8xf32>
    %204 = vector.multi_reduction <add>, %203, %cst_50 [2] : vector<2x8x10xf32> to vector<2x8xf32>
    %205 = vector.shape_cast %204 : vector<2x8xf32> to vector<2x8x1xf32>
    %206 = tpu.reciprocal %205 {approx = true} : vector<2x8x1xf32> -> vector<2x8x1xf32>
    %207 = vector.broadcast %206 : vector<2x8x1xf32> to vector<2x8x10xf32>
    %208 = arith.mulf %203, %207 : vector<2x8x10xf32>
    %209 = arith.truncf %208 : vector<2x8x10xf32> to vector<2x8x10xbf16>
    %210 = vector.extract_strided_slice %163 {offsets = [0, 0, 16], sizes = [2, 10, 8], strides = [1, 1, 1]} : vector<2x10x32xbf16> to vector<2x10x8xbf16>
    "tpu.trace_start"() <{level = 10 : i32, message = "bqk,bkd->bqd"}> : () -> ()
    %cst_51 = arith.constant dense<0.000000e+00> : vector<2x8x8xf32>
    %211 = tpu.matmul %209, %210, %cst_51 {dimension_numbers = #tpu.dot_dimension_numbers<[2], [1], [1], [2], [0, 0, 0, 1, 1, 2], [0], [0]>} : vector<2x8x10xbf16>, vector<2x10x8xbf16>, vector<2x8x8xf32> -> vector<2x8x8xf32>
    "tpu.trace_stop"() : () -> ()
    %212 = vector.extract_strided_slice %153 {offsets = [0, 0, 24], sizes = [2, 8, 8], strides = [1, 1, 1]} : vector<2x8x32xbf16> to vector<2x8x8xbf16>
    %213 = vector.extract_strided_slice %158 {offsets = [0, 0, 24], sizes = [2, 10, 8], strides = [1, 1, 1]} : vector<2x10x32xbf16> to vector<2x10x8xbf16>
    "tpu.trace_start"() <{level = 10 : i32, message = "bqd,bkd->bqk"}> : () -> ()
    %cst_52 = arith.constant dense<0.000000e+00> : vector<2x8x10xf32>
    %214 = tpu.matmul %212, %213, %cst_52 {dimension_numbers = #tpu.dot_dimension_numbers<[2], [2], [1], [1], [0, 0, 0, 1, 1, 1], [0], [0]>} : vector<2x8x8xbf16>, vector<2x10x8xbf16>, vector<2x8x10xf32> -> vector<2x8x10xf32>
    "tpu.trace_stop"() : () -> ()
    %cst_53 = arith.constant dense<0xFF800000> : vector<2x8xf32>
    %215 = vector.multi_reduction <maximumf>, %214, %cst_53 [2] : vector<2x8x10xf32> to vector<2x8xf32>
    %216 = vector.shape_cast %215 : vector<2x8xf32> to vector<2x8x1xf32>
    %217 = vector.broadcast %216 : vector<2x8x1xf32> to vector<2x8x10xf32>
    %218 = arith.subf %214, %217 : vector<2x8x10xf32>
    %219 = math.exp %218 : vector<2x8x10xf32>
    %cst_54 = arith.constant dense<0.000000e+00> : vector<2x8xf32>
    %220 = vector.multi_reduction <add>, %219, %cst_54 [2] : vector<2x8x10xf32> to vector<2x8xf32>
    %221 = vector.shape_cast %220 : vector<2x8xf32> to vector<2x8x1xf32>
    %222 = tpu.reciprocal %221 {approx = true} : vector<2x8x1xf32> -> vector<2x8x1xf32>
    %223 = vector.broadcast %222 : vector<2x8x1xf32> to vector<2x8x10xf32>
    %224 = arith.mulf %219, %223 : vector<2x8x10xf32>
    %225 = arith.truncf %224 : vector<2x8x10xf32> to vector<2x8x10xbf16>
    %226 = vector.extract_strided_slice %163 {offsets = [0, 0, 24], sizes = [2, 10, 8], strides = [1, 1, 1]} : vector<2x10x32xbf16> to vector<2x10x8xbf16>
    "tpu.trace_start"() <{level = 10 : i32, message = "bqk,bkd->bqd"}> : () -> ()
    %cst_55 = arith.constant dense<0.000000e+00> : vector<2x8x8xf32>
    %227 = tpu.matmul %225, %226, %cst_55 {dimension_numbers = #tpu.dot_dimension_numbers<[2], [1], [1], [2], [0, 0, 0, 1, 1, 2], [0], [0]>} : vector<2x8x10xbf16>, vector<2x10x8xbf16>, vector<2x8x8xf32> -> vector<2x8x8xf32>
    "tpu.trace_stop"() : () -> ()
    %228 = tpu.concatenate %179, %195, %211, %227 in 2 : vector<2x8x8xf32>, vector<2x8x8xf32>, vector<2x8x8xf32>, vector<2x8x8xf32> -> vector<2x8x32xf32>
    %229 = vector.shape_cast %228 : vector<2x8x32xf32> to vector<16x32xf32>
    %230 = arith.truncf %229 : vector<16x32xf32> to vector<16x32xbf16>
    %cst_56 = arith.constant dense<0.000000e+00> : vector<16x32xf32>
    %231 = tpu.matmul %230, %142, %cst_56 {dimension_numbers = #tpu.dot_dimension_numbers<[1], [0], [0], [1], [0, 0, 1, 1], [], []>} : vector<16x32xbf16>, vector<32x32xbf16>, vector<16x32xf32> -> vector<16x32xf32>
    %232 = vector.broadcast %146 : vector<1x32xf32> to vector<16x32xf32>
    %233 = arith.addf %231, %232 : vector<16x32xf32>
    %234 = arith.addf %133, %233 : vector<16x32xf32>
    %235 = vector.extract_strided_slice %8 {offsets = [10, 0], sizes = [1, 32], strides = [1, 1]} : vector<15x32xf32> to vector<1x32xf32>
    %236 = vector.extract_strided_slice %8 {offsets = [11, 0], sizes = [1, 32], strides = [1, 1]} : vector<15x32xf32> to vector<1x32xf32>
    %cst_57 = arith.constant dense<0.000000e+00> : vector<16xf32>
    %237 = vector.multi_reduction <add>, %234, %cst_57 [1] : vector<16x32xf32> to vector<16xf32>
    %238 = vector.shape_cast %237 : vector<16xf32> to vector<16x1xf32>
    %cst_58 = arith.constant 3.200000e+01 : f32
    %239 = vector.broadcast %cst_58 : f32 to vector<16x1xf32>
    %240 = arith.divf %238, %239 : vector<16x1xf32>
    %241 = vector.broadcast %240 : vector<16x1xf32> to vector<16x32xf32>
    %242 = arith.subf %234, %241 : vector<16x32xf32>
    %243 = arith.mulf %242, %242 : vector<16x32xf32>
    %cst_59 = arith.constant dense<0.000000e+00> : vector<16xf32>
    %244 = vector.multi_reduction <add>, %243, %cst_59 [1] : vector<16x32xf32> to vector<16xf32>
    %245 = vector.shape_cast %244 : vector<16xf32> to vector<16x1xf32>
    %cst_60 = arith.constant 3.200000e+01 : f32
    %246 = vector.broadcast %cst_60 : f32 to vector<16x1xf32>
    %247 = arith.divf %245, %246 : vector<16x1xf32>
    %248 = vector.broadcast %240 : vector<16x1xf32> to vector<16x32xf32>
    %249 = arith.subf %234, %248 : vector<16x32xf32>
    %cst_61 = arith.constant 9.99999974E-6 : f32
    %250 = vector.broadcast %cst_61 : f32 to vector<16x1xf32>
    %251 = arith.addf %247, %250 : vector<16x1xf32>
    %252 = math.rsqrt %251 : vector<16x1xf32>
    %253 = vector.broadcast %252 : vector<16x1xf32> to vector<16x32xf32>
    %254 = arith.mulf %249, %253 : vector<16x32xf32>
    %255 = vector.broadcast %235 : vector<1x32xf32> to vector<16x32xf32>
    %256 = arith.mulf %254, %255 : vector<16x32xf32>
    %257 = vector.broadcast %236 : vector<1x32xf32> to vector<16x32xf32>
    %258 = arith.addf %256, %257 : vector<16x32xf32>
    %259 = arith.truncf %258 : vector<16x32xf32> to vector<16x32xbf16>
    %c0_62 = arith.constant 0 : index
    %c0_63 = arith.constant 0 : index
    %c0_64 = arith.constant 0 : index
    %260 = vector.load %arg5[%c0_62, %c0_63, %c0_64] : memref<1x32x2048xbf16, #tpu.memory_space<vmem>>, vector<1x32x2048xbf16>
    %261 = vector.shape_cast %260 : vector<1x32x2048xbf16> to vector<32x2048xbf16>
    %cst_65 = arith.constant dense<0.000000e+00> : vector<16x2048xf32>
    %262 = tpu.matmul %259, %261, %cst_65 {dimension_numbers = #tpu.dot_dimension_numbers<[1], [0], [0], [1], [0, 0, 1, 1], [], []>} : vector<16x32xbf16>, vector<32x2048xbf16>, vector<16x2048xf32> -> vector<16x2048xf32>
    %c0_66 = arith.constant 0 : index
    %c0_67 = arith.constant 0 : index
    %c0_68 = arith.constant 0 : index
    %263 = vector.load %arg6[%c0_66, %c0_67, %c0_68] : memref<1x1x2048xf32, #tpu.memory_space<vmem>>, vector<1x1x2048xf32>
    %264 = vector.shape_cast %263 : vector<1x1x2048xf32> to vector<1x2048xf32>
    %265 = vector.broadcast %264 : vector<1x2048xf32> to vector<16x2048xf32>
    %266 = arith.addf %262, %265 : vector<16x2048xf32>
    %cst_69 = arith.constant 0.000000e+00 : f32
    %267 = vector.broadcast %cst_69 : f32 to vector<16x2048xf32>
    %268 = arith.maximumf %266, %267 : vector<16x2048xf32>
    %269 = arith.truncf %268 : vector<16x2048xf32> to vector<16x2048xbf16>
    %c0_70 = arith.constant 0 : index
    %c0_71 = arith.constant 0 : index
    %c0_72 = arith.constant 0 : index
    %270 = vector.load %arg7[%c0_70, %c0_71, %c0_72] : memref<1x2048x32xbf16, #tpu.memory_space<vmem>>, vector<1x2048x32xbf16>
    %271 = vector.shape_cast %270 : vector<1x2048x32xbf16> to vector<2048x32xbf16>
    %cst_73 = arith.constant dense<0.000000e+00> : vector<16x32xf32>
    %272 = tpu.matmul %269, %271, %cst_73 {dimension_numbers = #tpu.dot_dimension_numbers<[1], [0], [0], [1], [0, 0, 1, 1], [], []>} : vector<16x2048xbf16>, vector<2048x32xbf16>, vector<16x32xf32> -> vector<16x32xf32>
    %273 = vector.extract_strided_slice %8 {offsets = [14, 0], sizes = [1, 32], strides = [1, 1]} : vector<15x32xf32> to vector<1x32xf32>
    %274 = vector.broadcast %273 : vector<1x32xf32> to vector<16x32xf32>
    %275 = arith.addf %272, %274 : vector<16x32xf32>
    %276 = arith.addf %258, %275 : vector<16x32xf32>
    %277 = vector.extract_strided_slice %8 {offsets = [12, 0], sizes = [1, 32], strides = [1, 1]} : vector<15x32xf32> to vector<1x32xf32>
    %278 = vector.extract_strided_slice %8 {offsets = [13, 0], sizes = [1, 32], strides = [1, 1]} : vector<15x32xf32> to vector<1x32xf32>
    %cst_74 = arith.constant dense<0.000000e+00> : vector<16xf32>
    %279 = vector.multi_reduction <add>, %276, %cst_74 [1] : vector<16x32xf32> to vector<16xf32>
    %280 = vector.shape_cast %279 : vector<16xf32> to vector<16x1xf32>
    %cst_75 = arith.constant 3.200000e+01 : f32
    %281 = vector.broadcast %cst_75 : f32 to vector<16x1xf32>
    %282 = arith.divf %280, %281 : vector<16x1xf32>
    %283 = vector.broadcast %282 : vector<16x1xf32> to vector<16x32xf32>
    %284 = arith.subf %276, %283 : vector<16x32xf32>
    %285 = arith.mulf %284, %284 : vector<16x32xf32>
    %cst_76 = arith.constant dense<0.000000e+00> : vector<16xf32>
    %286 = vector.multi_reduction <add>, %285, %cst_76 [1] : vector<16x32xf32> to vector<16xf32>
    %287 = vector.shape_cast %286 : vector<16xf32> to vector<16x1xf32>
    %cst_77 = arith.constant 3.200000e+01 : f32
    %288 = vector.broadcast %cst_77 : f32 to vector<16x1xf32>
    %289 = arith.divf %287, %288 : vector<16x1xf32>
    %290 = vector.broadcast %282 : vector<16x1xf32> to vector<16x32xf32>
    %291 = arith.subf %276, %290 : vector<16x32xf32>
    %cst_78 = arith.constant 9.99999974E-6 : f32
    %292 = vector.broadcast %cst_78 : f32 to vector<16x1xf32>
    %293 = arith.addf %289, %292 : vector<16x1xf32>
    %294 = math.rsqrt %293 : vector<16x1xf32>
    %295 = vector.broadcast %294 : vector<16x1xf32> to vector<16x32xf32>
    %296 = arith.mulf %291, %295 : vector<16x32xf32>
    %297 = vector.broadcast %277 : vector<1x32xf32> to vector<16x32xf32>
    %298 = arith.mulf %296, %297 : vector<16x32xf32>
    %299 = vector.broadcast %278 : vector<1x32xf32> to vector<16x32xf32>
    %300 = arith.addf %298, %299 : vector<16x32xf32>
    %c0_79 = arith.constant 0 : index
    %c0_80 = arith.constant 0 : index
    %301 = vector.load %arg11[%c0_79, %c0_80] : memref<16x32xf32, #tpu.memory_space<vmem>>, vector<16x32xf32>
    tpu.vector_store %arg11[%c0_79, %c0_80], %300 {strides = array<i32>} : memref<16x32xf32, #tpu.memory_space<vmem>>, vector<16x32xf32>,
    %c1_i32 = arith.constant 1 : i32
    %302 = arith.cmpi eq, %arg0, %c1_i32 : i32
    %303 = arith.extui %302 : i1 to i32
    %c0_i32_81 = arith.constant 0 : i32
    %304 = arith.cmpi ne, %303, %c0_i32_81 : i32
    scf.if %304 {
      %305 = arith.truncf %300 : vector<16x32xf32> to vector<16x32xbf16>
      %c0_82 = arith.constant 0 : index
      %c0_83 = arith.constant 0 : index
      %306 = vector.load %arg8[%c0_82, %c0_83] : memref<32x32xbf16, #tpu.memory_space<vmem>>, vector<32x32xbf16>
      %cst_84 = arith.constant dense<0.000000e+00> : vector<16x32xf32>
      %307 = tpu.matmul %305, %306, %cst_84 {dimension_numbers = #tpu.dot_dimension_numbers<[1], [0], [0], [1], [0, 0, 1, 1], [], []>} : vector<16x32xbf16>, vector<32x32xbf16>, vector<16x32xf32> -> vector<16x32xf32>
      %c0_85 = arith.constant 0 : index
      %c0_86 = arith.constant 0 : index
      %308 = vector.load %arg9[%c0_85, %c0_86] : memref<1x32xf32, #tpu.memory_space<vmem>>, vector<1x32xf32>
      %309 = vector.broadcast %308 : vector<1x32xf32> to vector<16x32xf32>
      %310 = arith.addf %307, %309 : vector<16x32xf32>
      %c0_87 = arith.constant 0 : index
      %c0_88 = arith.constant 0 : index
      %311 = vector.load %arg10[%c0_87, %c0_88] : memref<16x32xf32, #tpu.memory_space<vmem>>, vector<16x32xf32>
      tpu.vector_store %arg10[%c0_87, %c0_88], %310 {strides = array<i32>} : memref<16x32xf32, #tpu.memory_space<vmem>>, vector<16x32xf32>,
    } else {
    }
    return
  }
  func.func @transform_0(%arg0: i32) -> (i32, i32) {
    %c0_i32 = arith.constant 0 : i32
    %c0_i32_0 = arith.constant 0 : i32
    %c0_i32_1 = arith.constant 0 : i32
    return %c0_i32, %c0_i32_0 : i32, i32
  }
  func.func @transform_1(%arg0: i32) -> (i32, i32) {
    %c0_i32 = arith.constant 0 : i32
    %c0_i32_0 = arith.constant 0 : i32
    %c0_i32_1 = arith.constant 0 : i32
    return %c0_i32, %c0_i32_0 : i32, i32
  }
  func.func @transform_2(%arg0: i32) -> (i32, i32, i32, i32) {
    %c0_i32 = arith.constant 0 : i32
    %c0_i32_0 = arith.constant 0 : i32
    %c0_i32_1 = arith.constant 0 : i32
    %c0_i32_2 = arith.constant 0 : i32
    return %arg0, %c0_i32, %c0_i32_0, %c0_i32_1 : i32, i32, i32, i32
  }
  func.func @transform_3(%arg0: i32) -> (i32, i32, i32) {
    %c0_i32 = arith.constant 0 : i32
    %c0_i32_0 = arith.constant 0 : i32
    %c0_i32_1 = arith.constant 0 : i32
    return %arg0, %c0_i32, %c0_i32_0 : i32, i32, i32
  }
  func.func @transform_4(%arg0: i32) -> (i32, i32, i32) {
    %c0_i32 = arith.constant 0 : i32
    %c0_i32_0 = arith.constant 0 : i32
    %c0_i32_1 = arith.constant 0 : i32
    return %arg0, %c0_i32, %c0_i32_0 : i32, i32, i32
  }
  func.func @transform_5(%arg0: i32) -> (i32, i32, i32) {
    %c0_i32 = arith.constant 0 : i32
    %c0_i32_0 = arith.constant 0 : i32
    %c0_i32_1 = arith.constant 0 : i32
    return %arg0, %c0_i32, %c0_i32_0 : i32, i32, i32
  }
  func.func @transform_6(%arg0: i32) -> (i32, i32, i32) {
    %c0_i32 = arith.constant 0 : i32
    %c0_i32_0 = arith.constant 0 : i32
    %c0_i32_1 = arith.constant 0 : i32
    return %arg0, %c0_i32, %c0_i32_0 : i32, i32, i32
  }
  func.func @transform_7(%arg0: i32) -> (i32, i32) {
    %c0_i32 = arith.constant 0 : i32
    %c0_i32_0 = arith.constant 0 : i32
    %c0_i32_1 = arith.constant 0 : i32
    return %c0_i32, %c0_i32_0 : i32, i32
  }
  func.func @transform_8(%arg0: i32) -> (i32, i32) {
    %c0_i32 = arith.constant 0 : i32
    %c0_i32_0 = arith.constant 0 : i32
    %c0_i32_1 = arith.constant 0 : i32
    return %c0_i32, %c0_i32_0 : i32, i32
  }
  func.func @transform_9(%arg0: i32) -> (i32, i32) {
    %c0_i32 = arith.constant 0 : i32
    %c0_i32_0 = arith.constant 0 : i32
    %c0_i32_1 = arith.constant 0 : i32
    return %c0_i32, %c0_i32_0 : i32, i32
  }
}

</mosaic_0001>

<llo_original>
// kernel: transformer_decoder_forward.1
$region0: #{transformer_decoder_forward.1}
  #allocation0 [shape = 'u32[]', space=smem, size = 0x4, offset = 0x4, fixed_abs, tag = 'smem constant byte address 0x4 - core index']
  #allocation1 [shape = 'u32[72,128]{1,0:T(1,128)}', space=vmem, size = 0x9000, scoped, tag = 'internal scratch']
  #allocation2 [shape = 'f32[16,32]{1,0:T(8,128)}', space=vmem, size = 0x2000, scoped, tag = 'scratch operand']
  %s0 = inlined_call_operand.vmem [shape: f32[16,32], index: 0, kind: input, shape index: {}]
  %s1 = inlined_call_operand.vmem [shape: bf16[20,32], index: 1, kind: input, shape index: {}]
  %s2 = inlined_call_operand.vmem [shape: bf16[2,8,32,32], index: 2, kind: input, shape index: {}]
  %s3 = inlined_call_operand.vmem [shape: f32[2,15,32], index: 3, kind: input, shape index: {}]
  %s4 = inlined_call_operand.vmem [shape: bf16[2,32,2048], index: 4, kind: input, shape index: {}]
  %s5 = inlined_call_operand.vmem [shape: f32[2,1,2048], index: 5, kind: input, shape index: {}]
  %s6 = inlined_call_operand.vmem [shape: bf16[2,2048,32], index: 6, kind: input, shape index: {}]
  %s7 = inlined_call_operand.vmem [shape: bf16[32,32], index: 7, kind: input, shape index: {}]
  %s8 = inlined_call_operand.vmem [shape: f32[1,32], index: 8, kind: input, shape index: {}]
  %s9 = inlined_call_operand.vmem [shape: f32[16,32], index: 9, kind: output, shape index: {}]
  %s10 = sld [smem:[#allocation0]]
  $region77: #{transformer_decoder_forward.1} parent=0
    _
  %s12 = ssub.s32 1, %s10
  %s13 = scalar_select 0, %s12, %s10
  loop: start=0, step=1, limit=4
  $region2: #{transformer_decoder_forward.1} parent=0 // loop_pre_header
    _
  $region3: #{transformer_decoder_forward.1} parent=0 // loop_header
    %s15 = sphi 0, %s19
    %p16 = scmp.ge.s32.totalorder %s15, 4
    %s23 = sphi 0, %s23
    %s25 = sphi 0, %s23
    %s26 = sphi 0, %s25
    %s40 = sphi 0, %s26
    %s44 = sphi 0, %s44
    %s46 = sphi 0, %s44
    %s47 = sphi 0, %s46
    %s61 = sphi 0, %s47
    %s67 = sphi 0, %s69
    %s70 = sphi 0, %s67
    %s71 = sphi 0, %s70
    %s87 = sphi 0, %s71
    %s93 = sphi 0, %s95
    %s96 = sphi 0, %s93
    %s97 = sphi 0, %s96
    %s113 = sphi 0, %s97
    %s119 = sphi 0, %s121
    %s122 = sphi 0, %s119
    %s123 = sphi 0, %s122
    %s139 = sphi 0, %s123
    %s145 = sphi 0, %s147
    %s148 = sphi 0, %s145
    %s149 = sphi 0, %s148
    %s165 = sphi 0, %s149
    %s171 = sphi 0, %s173
    %s174 = sphi 0, %s171
    %s175 = sphi 0, %s174
    %s191 = sphi 0, %s175
    %s195 = sphi 0, %s195
    %s197 = sphi 0, %s195
    %s198 = sphi 0, %s197
    %s212 = sphi 0, %s198
    %s216 = sphi 0, %s216
    %s218 = sphi 0, %s216
    %s219 = sphi 0, %s218
    %s233 = sphi 0, %s219
    %s237 = sphi 0, %s237
    %s239 = sphi 0, %s237
    %s240 = sphi 0, %s239
    %s254 = sphi 0, %s240
  $region4: #{transformer_decoder_forward.1} parent=0 // loop_header_branch
    %18 = sbr.rel (%p16) target = $region8
  $region5: #{transformer_decoder_forward.1} parent=0 // loop_body
    %s20 = ssub.s32 %s15, 1
    %s21 = ssub.s32 %s15, 2
    %s22 = sadd.s32 %s15, 1
    %s24 = sadd.s32 %s23, 1
    %p27 = scmp.eq.s32.totalorder %s15, 1
    %p28 = scmp.ne.s32.totalorder %s23, %s25
    %p29 = scmp.eq.s32.totalorder %s15, 0
    %p30 = por %p28, %p29
    %p31 = scmp.ne.s32.totalorder %s23, %s25
    %p32 = scmp.eq.s32.totalorder %s20, 1
    %p33 = por %p31, %p32
    %p34 = scmp.ne.s32.totalorder %s25, %s26
    %p35 = scmp.eq.s32.totalorder %s20, 0
    %p36 = por %p34, %p35
    %p37 = scmp.ne.s32.totalorder %s25, %s26
    %p38 = scmp.eq.s32.totalorder %s21, 1
    %p39 = por %p37, %p38
    %p41 = scmp.ne.s32.totalorder %s26, %s40
    %p42 = scmp.eq.s32.totalorder %s21, 0
    %p43 = por %p41, %p42
    %s45 = sadd.s32 %s44, 1
    %p48 = scmp.eq.s32.totalorder %s15, 1
    %p49 = scmp.ne.s32.totalorder %s44, %s46
    %p50 = scmp.eq.s32.totalorder %s15, 0
    %p51 = por %p49, %p50
    %p52 = scmp.ne.s32.totalorder %s44, %s46
    %p53 = scmp.eq.s32.totalorder %s20, 1
    %p54 = por %p52, %p53
    %p55 = scmp.ne.s32.totalorder %s46, %s47
    %p56 = scmp.eq.s32.totalorder %s20, 0
    %p57 = por %p55, %p56
    %p58 = scmp.ne.s32.totalorder %s46, %s47
    %p59 = scmp.eq.s32.totalorder %s21, 1
    %p60 = por %p58, %p59
    %p62 = scmp.ne.s32.totalorder %s47, %s61
    %p63 = scmp.eq.s32.totalorder %s21, 0
    %p64 = por %p62, %p63
    %s65 = ssub.s32 %s15, %s22
    %p66 = scmp.eq.s32.totalorder %s65, 0
    %s68 = sadd.s32 %s67, 1
    %s69 = scalar_select %p66, %s67, %s68
    %p72 = pneg %p66
    %p73 = scmp.eq.s32.totalorder %s15, 1
    %p74 = por %p72, %p73
    %p75 = scmp.ne.s32.totalorder %s67, %s70
    %p76 = scmp.eq.s32.totalorder %s15, 0
    %p77 = por %p75, %p76
    %p78 = scmp.ne.s32.totalorder %s67, %s70
    %p79 = scmp.eq.s32.totalorder %s20, 1
    %p80 = por %p78, %p79
    %p81 = scmp.ne.s32.totalorder %s70, %s71
    %p82 = scmp.eq.s32.totalorder %s20, 0
    %p83 = por %p81, %p82
    %p84 = scmp.ne.s32.totalorder %s70, %s71
    %p85 = scmp.eq.s32.totalorder %s21, 1
    %p86 = por %p84, %p85
    %p88 = scmp.ne.s32.totalorder %s71, %s87
    %p89 = scmp.eq.s32.totalorder %s21, 0
    %p90 = por %p88, %p89
    %s91 = ssub.s32 %s15, %s22
    %p92 = scmp.eq.s32.totalorder %s91, 0
    %s94 = sadd.s32 %s93, 1
    %s95 = scalar_select %p92, %s93, %s94
    %p98 = pneg %p92
    %p99 = scmp.eq.s32.totalorder %s15, 1
    %p100 = por %p98, %p99
    %p101 = scmp.ne.s32.totalorder %s93, %s96
    %p102 = scmp.eq.s32.totalorder %s15, 0
    %p103 = por %p101, %p102
    %p104 = scmp.ne.s32.totalorder %s93, %s96
    %p105 = scmp.eq.s32.totalorder %s20, 1
    %p106 = por %p104, %p105
    %p107 = scmp.ne.s32.totalorder %s96, %s97
    %p108 = scmp.eq.s32.totalorder %s20, 0
    %p109 = por %p107, %p108
    %p110 = scmp.ne.s32.totalorder %s96, %s97
    %p111 = scmp.eq.s32.totalorder %s21, 1
    %p112 = por %p110, %p111
    %p114 = scmp.ne.s32.totalorder %s97, %s113
    %p115 = scmp.eq.s32.totalorder %s21, 0
    %p116 = por %p114, %p115
    %s117 = ssub.s32 %s15, %s22
    %p118 = scmp.eq.s32.totalorder %s117, 0
    %s120 = sadd.s32 %s119, 1
    %s121 = scalar_select %p118, %s119, %s120
    %p124 = pneg %p118
    %p125 = scmp.eq.s32.totalorder %s15, 1
    %p126 = por %p124, %p125
    %p127 = scmp.ne.s32.totalorder %s119, %s122
    %p128 = scmp.eq.s32.totalorder %s15, 0
    %p129 = por %p127, %p128
    %p130 = scmp.ne.s32.totalorder %s119, %s122
    %p131 = scmp.eq.s32.totalorder %s20, 1
    %p132 = por %p130, %p131
    %p133 = scmp.ne.s32.totalorder %s122, %s123
    %p134 = scmp.eq.s32.totalorder %s20, 0
    %p135 = por %p133, %p134
    %p136 = scmp.ne.s32.totalorder %s122, %s123
    %p137 = scmp.eq.s32.totalorder %s21, 1
    %p138 = por %p136, %p137
    %p140 = scmp.ne.s32.totalorder %s123, %s139
    %p141 = scmp.eq.s32.totalorder %s21, 0
    %p142 = por %p140, %p141
    %s143 = ssub.s32 %s15, %s22
    %p144 = scmp.eq.s32.totalorder %s143, 0
    %s146 = sadd.s32 %s145, 1
    %s147 = scalar_select %p144, %s145, %s146
    %p150 = pneg %p144
    %p151 = scmp.eq.s32.totalorder %s15, 1
    %p152 = por %p150, %p151
    %p153 = scmp.ne.s32.totalorder %s145, %s148
    %p154 = scmp.eq.s32.totalorder %s15, 0
    %p155 = por %p153, %p154
    %p156 = scmp.ne.s32.totalorder %s145, %s148
    %p157 = scmp.eq.s32.totalorder %s20, 1
    %p158 = por %p156, %p157
    %p159 = scmp.ne.s32.totalorder %s148, %s149
    %p160 = scmp.eq.s32.totalorder %s20, 0
    %p161 = por %p159, %p160
    %p162 = scmp.ne.s32.totalorder %s148, %s149
    %p163 = scmp.eq.s32.totalorder %s21, 1
    %p164 = por %p162, %p163
    %p166 = scmp.ne.s32.totalorder %s149, %s165
    %p167 = scmp.eq.s32.totalorder %s21, 0
    %p168 = por %p166, %p167
    %s169 = ssub.s32 %s15, %s22
    %p170 = scmp.eq.s32.totalorder %s169, 0
    %s172 = sadd.s32 %s171, 1
    %s173 = scalar_select %p170, %s171, %s172
    %p176 = pneg %p170
    %p177 = scmp.eq.s32.totalorder %s15, 1
    %p178 = por %p176, %p177
    %p179 = scmp.ne.s32.totalorder %s171, %s174
    %p180 = scmp.eq.s32.totalorder %s15, 0
    %p181 = por %p179, %p180
    %p182 = scmp.ne.s32.totalorder %s171, %s174
    %p183 = scmp.eq.s32.totalorder %s20, 1
    %p184 = por %p182, %p183
    %p185 = scmp.ne.s32.totalorder %s174, %s175
    %p186 = scmp.eq.s32.totalorder %s20, 0
    %p187 = por %p185, %p186
    %p188 = scmp.ne.s32.totalorder %s174, %s175
    %p189 = scmp.eq.s32.totalorder %s21, 1
    %p190 = por %p188, %p189
    %p192 = scmp.ne.s32.totalorder %s175, %s191
    %p193 = scmp.eq.s32.totalorder %s21, 0
    %p194 = por %p192, %p193
    %s196 = sadd.s32 %s195, 1
    %p199 = scmp.eq.s32.totalorder %s15, 1
    %p200 = scmp.ne.s32.totalorder %s195, %s197
    %p201 = scmp.eq.s32.totalorder %s15, 0
    %p202 = por %p200, %p201
    %p203 = scmp.ne.s32.totalorder %s195, %s197
    %p204 = scmp.eq.s32.totalorder %s20, 1
    %p205 = por %p203, %p204
    %p206 = scmp.ne.s32.totalorder %s197, %s198
    %p207 = scmp.eq.s32.totalorder %s20, 0
    %p208 = por %p206, %p207
    %p209 = scmp.ne.s32.totalorder %s197, %s198
    %p210 = scmp.eq.s32.totalorder %s21, 1
    %p211 = por %p209, %p210
    %p213 = scmp.ne.s32.totalorder %s198, %s212
    %p214 = scmp.eq.s32.totalorder %s21, 0
    %p215 = por %p213, %p214
    %s217 = sadd.s32 %s216, 1
    %p220 = scmp.eq.s32.totalorder %s15, 1
    %p221 = scmp.ne.s32.totalorder %s216, %s218
    %p222 = scmp.eq.s32.totalorder %s15, 0
    %p223 = por %p221, %p222
    %p224 = scmp.ne.s32.totalorder %s216, %s218
    %p225 = scmp.eq.s32.totalorder %s20, 1
    %p226 = por %p224, %p225
    %p227 = scmp.ne.s32.totalorder %s218, %s219
    %p228 = scmp.eq.s32.totalorder %s20, 0
    %p229 = por %p227, %p228
    %p230 = scmp.ne.s32.totalorder %s218, %s219
    %p231 = scmp.eq.s32.totalorder %s21, 1
    %p232 = por %p230, %p231
    %p234 = scmp.ne.s32.totalorder %s219, %s233
    %p235 = scmp.eq.s32.totalorder %s21, 0
    %p236 = por %p234, %p235
    %s238 = sadd.s32 %s237, 1
    %p241 = scmp.eq.s32.totalorder %s15, 1
    %p242 = scmp.ne.s32.totalorder %s237, %s239
    %p243 = scmp.eq.s32.totalorder %s15, 0
    %p244 = por %p242, %p243
    %p245 = scmp.ne.s32.totalorder %s237, %s239
    %p246 = scmp.eq.s32.totalorder %s20, 1
    %p247 = por %p245, %p246
    %p248 = scmp.ne.s32.totalorder %s239, %s240
    %p249 = scmp.eq.s32.totalorder %s20, 0
    %p250 = por %p248, %p249
    %p251 = scmp.ne.s32.totalorder %s239, %s240
    %p252 = scmp.eq.s32.totalorder %s21, 1
    %p253 = por %p251, %p252
    %p255 = scmp.ne.s32.totalorder %s240, %s254
    %p256 = scmp.eq.s32.totalorder %s21, 0
    %p257 = por %p255, %p256
    %p258 = scmp.le.s32.totalorder 1, %s15
    %p259 = scmp.lt.s32.totalorder %s15, 3
    %p260 = pnand %p258, %p259
    %p261 = pneg %p260
    // Predicated region
    $region9: #{transformer_decoder_forward.1} parent=5 // pred_check
      _
    $region10: #{transformer_decoder_forward.1} parent=5 // pred_check_branch
      %263 = sbr.rel (%p260) target = $region12
    $region11: #{transformer_decoder_forward.1} parent=5 // pred_region
      %s264 = ssub.s32 %s15, 1
      // Predicated region
      $region13: #{transformer_decoder_forward.1} parent=11 // pred_check
        %p265 = pneg %p36
      $region14: #{transformer_decoder_forward.1} parent=11 // pred_check_branch
        %267 = sbr.rel (%p265) target = $region16
      $region15: #{transformer_decoder_forward.1} parent=11 // pred_region
        _
      $region16: #{transformer_decoder_forward.1} parent=11 // pred_fallthru
        _
      // Predicated region
      $region17: #{transformer_decoder_forward.1} parent=11 // pred_check
        %p268 = pneg %p57
      $region18: #{transformer_decoder_forward.1} parent=11 // pred_check_branch
        %270 = sbr.rel (%p268) target = $region20
      $region19: #{transformer_decoder_forward.1} parent=11 // pred_region
        _
      $region20: #{transformer_decoder_forward.1} parent=11 // pred_fallthru
        _
      // Predicated region
      $region21: #{transformer_decoder_forward.1} parent=11 // pred_check
        %p271 = pneg %p208
      $region22: #{transformer_decoder_forward.1} parent=11 // pred_check_branch
        %273 = sbr.rel (%p271) target = $region24
      $region23: #{transformer_decoder_forward.1} parent=11 // pred_region
        _
      $region24: #{transformer_decoder_forward.1} parent=11 // pred_fallthru
        _
      // Predicated region
      $region25: #{transformer_decoder_forward.1} parent=11 // pred_check
        %p274 = pneg %p229
      $region26: #{transformer_decoder_forward.1} parent=11 // pred_check_branch
        %276 = sbr.rel (%p274) target = $region28
      $region27: #{transformer_decoder_forward.1} parent=11 // pred_region
        _
      $region28: #{transformer_decoder_forward.1} parent=11 // pred_fallthru
        _
    $region12: #{transformer_decoder_forward.1} parent=5 // pred_fallthru
      _
    %p277 = scmp.lt.s32.totalorder %s15, 2
    // Predicated region
    $region29: #{transformer_decoder_forward.1} parent=5 // pred_check
      %p278 = pneg %p277
    $region30: #{transformer_decoder_forward.1} parent=5 // pred_check_branch
      %280 = sbr.rel (%p278) target = $region32
    $region31: #{transformer_decoder_forward.1} parent=5 // pred_region
      // Predicated region
      $region33: #{transformer_decoder_forward.1} parent=31 // pred_check
        %p281 = pneg %p77
      $region34: #{transformer_decoder_forward.1} parent=31 // pred_check_branch
        %283 = sbr.rel (%p281) target = $region36
      $region35: #{transformer_decoder_forward.1} parent=31 // pred_region
        %p284 = scmp.lt.s32.totalorder %s15, 1
        %s285 = scalar_select %p284, %s15, 1
        %s286 = smul.addr %s285, 32
        %s287 = smul.addr %s286, 4
        %s288 = scalar_lea.vmem %s2, %s287
      $region36: #{transformer_decoder_forward.1} parent=31 // pred_fallthru
        _
      // Predicated region
      $region37: #{transformer_decoder_forward.1} parent=31 // pred_check
        %p289 = pneg %p103
      $region38: #{transformer_decoder_forward.1} parent=31 // pred_check_branch
        %291 = sbr.rel (%p289) target = $region40
      $region39: #{transformer_decoder_forward.1} parent=31 // pred_region
        %p292 = scmp.lt.s32.totalorder %s15, 1
        %s293 = scalar_select %p292, %s15, 1
        %s294 = smul.addr %s293, 2
        %s295 = smul.addr %s294, 8
        %s296 = scalar_lea.vmem %s3, %s295
      $region40: #{transformer_decoder_forward.1} parent=31 // pred_fallthru
        _
      // Predicated region
      $region41: #{transformer_decoder_forward.1} parent=31 // pred_check
        %p297 = pneg %p129
      $region42: #{transformer_decoder_forward.1} parent=31 // pred_check_branch
        %299 = sbr.rel (%p297) target = $region44
      $region43: #{transformer_decoder_forward.1} parent=31 // pred_region
        %p300 = scmp.lt.s32.totalorder %s15, 1
        %s301 = scalar_select %p300, %s15, 1
        %s302 = smul.addr %s301, 64
        %s303 = smul.addr %s302, 4
        %s304 = scalar_lea.vmem %s4, %s303
      $region44: #{transformer_decoder_forward.1} parent=31 // pred_fallthru
        _
      // Predicated region
      $region45: #{transformer_decoder_forward.1} parent=31 // pred_check
        %p305 = pneg %p155
      $region46: #{transformer_decoder_forward.1} parent=31 // pred_check_branch
        %307 = sbr.rel (%p305) target = $region48
      $region47: #{transformer_decoder_forward.1} parent=31 // pred_region
        %p308 = scmp.lt.s32.totalorder %s15, 1
        %s309 = scalar_select %p308, %s15, 1
        %s310 = smul.addr %s309, 16
        %s311 = scalar_lea.vmem %s5, %s310
      $region48: #{transformer_decoder_forward.1} parent=31 // pred_fallthru
        _
      // Predicated region
      $region49: #{transformer_decoder_forward.1} parent=31 // pred_check
        %p312 = pneg %p181
      $region50: #{transformer_decoder_forward.1} parent=31 // pred_check_branch
        %314 = sbr.rel (%p312) target = $region52
      $region51: #{transformer_decoder_forward.1} parent=31 // pred_region
        %p315 = scmp.lt.s32.totalorder %s15, 1
        %s316 = scalar_select %p315, %s15, 1
        %s317 = smul.addr %s316, 256
        %s318 = smul.addr %s317, 4
        %s319 = scalar_lea.vmem %s6, %s318
      $region52: #{transformer_decoder_forward.1} parent=31 // pred_fallthru
        _
    $region32: #{transformer_decoder_forward.1} parent=5 // pred_fallthru
      _
    %p320 = scmp.le.s32.totalorder 1, %s15
    %p321 = scmp.lt.s32.totalorder %s15, 3
    %p322 = pnand %p320, %p321
    %p323 = pneg %p322
    // Predicated region
    $region53: #{transformer_decoder_forward.1} parent=5 // pred_check
      _
    $region54: #{transformer_decoder_forward.1} parent=5 // pred_check_branch
      %325 = sbr.rel (%p322) target = $region56
    $region55: #{transformer_decoder_forward.1} parent=5 // pred_region
      %s326 = ssub.s32 %s15, 1
      %p327 = pneg %p36
      %p328 = pneg %p33
      %p329 = pneg %p57
      %p330 = pneg %p54
      %p331 = scmp.lt.s32.totalorder %s20, 1
      %s332 = scalar_select %p331, %s20, 1
      %s333 = smul.addr %s332, 32
      %s334 = smul.addr %s333, 4
      %s335 = scalar_lea.vmem %s2, %s334
      %p336 = pneg %p83
      %p337 = pneg %p80
      %p338 = scmp.lt.s32.totalorder %s20, 1
      %s339 = scalar_select %p338, %s20, 1
      %s340 = smul.addr %s339, 2
      %s341 = smul.addr %s340, 8
      %s342 = scalar_lea.vmem %s3, %s341
      %p343 = pneg %p109
      %p344 = pneg %p106
      %p345 = scmp.lt.s32.totalorder %s20, 1
      %s346 = scalar_select %p345, %s20, 1
      %s347 = smul.addr %s346, 64
      %s348 = smul.addr %s347, 4
      %s349 = scalar_lea.vmem %s4, %s348
      %p350 = pneg %p135
      %p351 = pneg %p132
      %p352 = scmp.lt.s32.totalorder %s20, 1
      %s353 = scalar_select %p352, %s20, 1
      %s354 = smul.addr %s353, 16
      %s355 = scalar_lea.vmem %s5, %s354
      %p356 = pneg %p161
      %p357 = pneg %p158
      %p358 = scmp.lt.s32.totalorder %s20, 1
      %s359 = scalar_select %p358, %s20, 1
      %s360 = smul.addr %s359, 256
      %s361 = smul.addr %s360, 4
      %s362 = scalar_lea.vmem %s6, %s361
      %p363 = pneg %p187
      %p364 = pneg %p184
      %p365 = pneg %p208
      %p366 = pneg %p205
      %p367 = pneg %p229
      %p368 = pneg %p226
      %p369 = pneg %p250
      %p370 = pneg %p247
      %p371 = scmp.lt.s32.totalorder %s20, 1
      %s372 = scalar_select %p371, %s20, 1
      %s373 = smul.addr %s372, 32
      %s374 = smul.addr %s373, 4
      %s375 = scalar_lea.vmem %s2, %s374
      %p376 = scmp.lt.s32.totalorder %s20, 1
      %s377 = scalar_select %p376, %s20, 1
      %s378 = smul.addr %s377, 2
      %s379 = smul.addr %s378, 8
      %s380 = scalar_lea.vmem %s3, %s379
      %p381 = scmp.lt.s32.totalorder %s20, 1
      %s382 = scalar_select %p381, %s20, 1
      %s383 = smul.addr %s382, 64
      %s384 = smul.addr %s383, 4
      %s385 = scalar_lea.vmem %s4, %s384
      %p386 = scmp.lt.s32.totalorder %s20, 1
      %s387 = scalar_select %p386, %s20, 1
      %s388 = smul.addr %s387, 16
      %s389 = scalar_lea.vmem %s5, %s388
      %p390 = scmp.lt.s32.totalorder %s20, 1
      %s391 = scalar_select %p390, %s20, 1
      %s392 = smul.addr %s391, 256
      %s393 = smul.addr %s392, 4
      %s394 = scalar_lea.vmem %s6, %s393
      %p396 = scmp.eq.s32.totalorder %s20, 0
      // Predicated region
      $region57: #{transformer_decoder_forward.1} parent=55 // pred_check
        %p397 = pneg %p396
      $region58: #{transformer_decoder_forward.1} parent=55 // pred_check_branch
        %399 = sbr.rel (%p397) target = $region60
      $region59: #{transformer_decoder_forward.1} parent=55 // pred_region
        %v400 = vld [vmem:[%s0] sm:$0xff]
        %v401 = vld [vmem:[%s0 + $0x8] sm:$0xff]
        %vm402 = vcmask 261120
        %403 = vst.msk [vmem:[#allocation2] sm:$0xff] %vm402, %v400
        %404 = vst.msk [vmem:[#allocation2 + $0x8] sm:$0xff] %vm402, %v401
      $region60: #{transformer_decoder_forward.1} parent=55 // pred_fallthru
        _
      %v405 = vld [vmem:[#allocation2] sm:$0xff]
      %v406 = vld [vmem:[#allocation2 + $0x8] sm:$0xff]
      %v407 = vld [vmem:[%s1] sm:$0xf]
      %v408 = vld [vmem:[%s1 + $0x4] sm:$0xf]
      %v409 = vld [vmem:[%s1 + $0x8] sm:$0x3]
      %v410 = vld [vmem:[%s375] sm:$0xf]
      %v411 = vld [vmem:[%s375 + $0x4] sm:$0xf]
      %v412 = vld [vmem:[%s375 + $0x8] sm:$0xf]
      %v413 = vld [vmem:[%s375 + $0xc] sm:$0xf]
      %v414 = vld [vmem:[%s375 + $0x10] sm:$0xf]
      %v415 = vld [vmem:[%s375 + $0x14] sm:$0xf]
      %v416 = vld [vmem:[%s375 + $0x18] sm:$0xf]
      %v417 = vld [vmem:[%s375 + $0x1c] sm:$0xf]
      %v418 = vld [vmem:[%s375 + $0x20] sm:$0xf]
      %v419 = vld [vmem:[%s375 + $0x24] sm:$0xf]
      %v420 = vld [vmem:[%s375 + $0x28] sm:$0xf]
      %v421 = vld [vmem:[%s375 + $0x2c] sm:$0xf]
      %v422 = vld [vmem:[%s375 + $0x30] sm:$0xf]
      %v423 = vld [vmem:[%s375 + $0x34] sm:$0xf]
      %v424 = vld [vmem:[%s375 + $0x38] sm:$0xf]
      %v425 = vld [vmem:[%s375 + $0x3c] sm:$0xf]
      %v426 = vld [vmem:[%s375 + $0x40] sm:$0xf]
      %v427 = vld [vmem:[%s375 + $0x44] sm:$0xf]
      %v428 = vld [vmem:[%s375 + $0x48] sm:$0xf]
      %v429 = vld [vmem:[%s375 + $0x4c] sm:$0xf]
      %v430 = vld [vmem:[%s375 + $0x50] sm:$0xf]
      %v431 = vld [vmem:[%s375 + $0x54] sm:$0xf]
      %v432 = vld [vmem:[%s375 + $0x58] sm:$0xf]
      %v433 = vld [vmem:[%s375 + $0x5c] sm:$0xf]
      %v434 = vld [vmem:[%s375 + $0x60] sm:$0xf]
      %v435 = vld [vmem:[%s375 + $0x64] sm:$0xf]
      %v436 = vld [vmem:[%s375 + $0x68] sm:$0xf]
      %v437 = vld [vmem:[%s375 + $0x6c] sm:$0xf]
      %v438 = vld [vmem:[%s375 + $0x70] sm:$0xf]
      %v439 = vld [vmem:[%s375 + $0x74] sm:$0xf]
      %v440 = vld [vmem:[%s375 + $0x78] sm:$0xf]
      %v441 = vld [vmem:[%s375 + $0x7c] sm:$0xf]
      %v442 = vld [vmem:[%s380] sm:$0xff]
      %v443 = vld [vmem:[%s380 + $0x8] sm:$0x7f]
      %v444 = vpack.c.bf16 %v406, %v405
      %v445 = vperm.slane %v442, 0
      %v450 = vunpack.c.l.b16 %v410
      %v451 = vunpack.c.l.b16 %v411
      %v452 = vunpack.c.l.b16 %v412
      %v453 = vunpack.c.l.b16 %v413
      %v454 = vpack.c.b16 %v451, %v450
      %v455 = vpack.c.b16 %v453, %v452
      %vm458 = vcmask 261120
      %v460 = vsel %vm458, %v444, 0
      %462 = vmatpush.bf16.msra.mxu0 0
      %463 = vmatpush.bf16.msra.mxu0 0
      %464 = vmatpush.bf16.msra.mxu0 0
      %465 = vmatpush.bf16.msra.mxu0 0
      %466 = vmatpush.bf16.msra.mxu0 0
      %467 = vmatpush.bf16.msra.mxu0 0
      %468 = vmatpush.bf16.msra.mxu0 %v455
      %469 = vmatpush.bf16.msra.mxu0 %v454
      %470 = vmatmul.bf16.gmra.mxu0 %v460
      %v471 = vpop.f32.mrf.mxu0
      %v472 = vadd.f32 %v445, %v471
      %v473 = vpop.f32.mrf.mxu0
      %v474 = vadd.f32 %v445, %v473
      %475 = vdwg.mxu0
      %v476 = vmul.f32 %v472, 0.35355338
      %v477 = vmul.f32 %v474, 0.35355338
      %v478 = vpack.c.bf16 %v476, %v476
      %v479 = vpack.c.bf16 %v477, %v477
      %v480 = vperm.slane %v442, 1
      %v485 = vunpack.c.l.b16 %v414
      %v486 = vunpack.c.l.b16 %v415
      %v487 = vunpack.c.l.b16 %v416
      %v488 = vunpack.c.l.b16 %v417
      %v489 = vpack.c.b16 %v486, %v485
      %v490 = vpack.c.b16 %v488, %v487
      %493 = vmatpush.bf16.msra.mxu0 0
      %494 = vmatpush.bf16.msra.mxu0 0
      %495 = vmatpush.bf16.msra.mxu0 0
      %496 = vmatpush.bf16.msra.mxu0 0
      %497 = vmatpush.bf16.msra.mxu0 0
      %498 = vmatpush.bf16.msra.mxu0 0
      %499 = vmatpush.bf16.msra.mxu0 %v490
      %500 = vmatpush.bf16.msra.mxu0 %v489
      %501 = vmatmul.bf16.gmra.mxu0 %v460
      %v502 = vpop.f32.mrf.mxu0
      %v503 = vadd.f32 %v480, %v502
      %v504 = vpop.f32.mrf.mxu0
      %v505 = vadd.f32 %v480, %v504
      %506 = vdwg.mxu0
      %v507 = vpack.c.bf16 %v503, %v503
      %v508 = vpack.c.bf16 %v505, %v505
      %v509 = vperm.slane %v442, 2
      %v514 = vunpack.c.l.b16 %v418
      %v515 = vunpack.c.l.b16 %v419
      %v516 = vunpack.c.l.b16 %v420
      %v517 = vunpack.c.l.b16 %v421
      %v518 = vpack.c.b16 %v515, %v514
      %v519 = vpack.c.b16 %v517, %v516
      %522 = vmatpush.bf16.msra.mxu0 0
      %523 = vmatpush.bf16.msra.mxu0 0
      %524 = vmatpush.bf16.msra.mxu0 0
      %525 = vmatpush.bf16.msra.mxu0 0
      %526 = vmatpush.bf16.msra.mxu0 0
      %527 = vmatpush.bf16.msra.mxu0 0
      %528 = vmatpush.bf16.msra.mxu0 %v519
      %529 = vmatpush.bf16.msra.mxu0 %v518
      %530 = vmatmul.bf16.gmra.mxu0 %v460
      %v531 = vpop.f32.mrf.mxu0
      %v532 = vadd.f32 %v509, %v531
      %v533 = vpop.f32.mrf.mxu0
      %v534 = vadd.f32 %v509, %v533
      %535 = vdwg.mxu0
      %v536 = vpack.c.bf16 %v532, %v532
      %v537 = vpack.c.bf16 %v534, %v534
      %vm538 = vcmask 64512
      %v540 = vsel %vm538, %v478, 0
      %v543 = vsel %vm538, %v507, 0
      %545 = vmatpush.bf16.xpose.msra.mxu0 0
      %546 = vmatpush.bf16.xpose.msra.mxu0 0
      %547 = vmatpush.bf16.xpose.msra.mxu0 0
      %548 = vmatpush.bf16.xpose.msra.mxu0 0
      %549 = vmatpush.bf16.xpose.msra.mxu0 0
      %550 = vmatpush.bf16.xpose.msra.mxu0 0
      %551 = vmatpush.bf16.xpose.msra.mxu0 0
      %552 = vmatpush.bf16.xpose.msra.mxu0 %v543
      %553 = vmatmul.bf16.gmra.mxu0 %v540
      %v554 = vpop.f32.mrf.mxu0
      %v555 = vadd.f32 0.0, %v554
      %v556 = vpop.f32.mrf.mxu0
      %557 = vdwg.mxu0
      %v559 = vsel %vm538, %v479, 0
      %v562 = vsel %vm538, %v508, 0
      %564 = vmatpush.bf16.xpose.msra.mxu0 0
      %565 = vmatpush.bf16.xpose.msra.mxu0 0
      %566 = vmatpush.bf16.xpose.msra.mxu0 0
      %567 = vmatpush.bf16.xpose.msra.mxu0 0
      %568 = vmatpush.bf16.xpose.msra.mxu0 0
      %569 = vmatpush.bf16.xpose.msra.mxu0 0
      %570 = vmatpush.bf16.xpose.msra.mxu0 0
      %571 = vmatpush.bf16.xpose.msra.mxu0 %v562
      %572 = vmatmul.bf16.gmra.mxu0 %v559
      %v573 = vpop.f32.mrf.mxu0
      %v574 = vadd.f32 0.0, %v573
      %v575 = vpop.f32.mrf.mxu0
      %576 = vdwg.mxu0
      %v577 = vsel %vm538, %v555, -inf
      %578 = vmax.xlane.f32.xlu0 %v577
      %v579 = vpop.xlane.xlu0 %578
      %v580 = vsel %vm538, %v574, -inf
      %581 = vmax.xlane.f32.xlu0 %v580
      %v582 = vpop.xlane.xlu0 %581
      %v583 = vsub.f32 %v555, %v579
      %v584 = vsub.f32 %v574, %v582
      %v585 = vmul.f32 %v583, 1.442695
      %v586 = vpow.pop %v585
      %v587 = vmul.f32 %v584, 1.442695
      %v588 = vpow.pop %v587
      %v589 = vsel %vm538, %v586, 0.0
      %590 = vadd.xlane.f32.xlu0 %v589
      %v591 = vpop.xlane.xlu0 %590
      %v592 = vsel %vm538, %v588, 0.0
      %593 = vadd.xlane.f32.xlu0 %v592
      %v594 = vpop.xlane.xlu0 %593
      %v595 = vrcp.pop %v591
      %v596 = vrcp.pop %v594
      %v597 = vmul.f32 %v586, %v595
      %v598 = vmul.f32 %v588, %v596
      %v599 = vpack.c.bf16 %v597, %v597
      %v600 = vpack.c.bf16 %v598, %v598
      %v602 = vsel %vm538, %v599, 0
      %vm604 = vcmask 1043456
      %v606 = vsel %vm604, %v536, 0
      %608 = vmatpush.bf16.msra.mxu0 0
      %609 = vmatpush.bf16.msra.mxu0 0
      %610 = vmatpush.bf16.msra.mxu0 0
      %611 = vmatpush.bf16.msra.mxu0 0
      %612 = vmatpush.bf16.msra.mxu0 0
      %613 = vmatpush.bf16.msra.mxu0 0
      %614 = vmatpush.bf16.msra.mxu0 0
      %615 = vmatpush.bf16.msra.mxu0 %v606
      %616 = vmatmul.bf16.gmra.mxu0 %v602
      %v617 = vpop.f32.mrf.mxu0
      %v618 = vadd.f32 0.0, %v617
      %v619 = vpop.f32.mrf.mxu0
      %620 = vdwg.mxu0
      %v622 = vsel %vm538, %v600, 0
      %v625 = vsel %vm604, %v537, 0
      %627 = vmatpush.bf16.msra.mxu0 0
      %628 = vmatpush.bf16.msra.mxu0 0
      %629 = vmatpush.bf16.msra.mxu0 0
      %630 = vmatpush.bf16.msra.mxu0 0
      %631 = vmatpush.bf16.msra.mxu0 0
      %632 = vmatpush.bf16.msra.mxu0 0
      %633 = vmatpush.bf16.msra.mxu0 0
      %634 = vmatpush.bf16.msra.mxu0 %v625
      %635 = vmatmul.bf16.gmra.mxu0 %v622
      %v636 = vpop.f32.mrf.mxu0
      %v637 = vadd.f32 0.0, %v636
      %v638 = vpop.f32.mrf.mxu0
      %639 = vdwg.mxu0
      %v641 = vunpack.c.l.b16 %v478
      %v642 = vpack.c.b16 %v641, %v641
      %643 = vrot.lane.b32.xlu0 %v642, 120
      %v644 = vpop.permute.xlu0 %643
      %v646 = vunpack.c.l.b16 %v507
      %v647 = vpack.c.b16 %v646, %v646
      %648 = vrot.lane.b32.xlu0 %v647, 120
      %v649 = vpop.permute.xlu0 %648
      %v651 = vsel %vm538, %v644, 0
      %v654 = vsel %vm538, %v649, 0
      %656 = vmatpush.bf16.xpose.msra.mxu0 0
      %657 = vmatpush.bf16.xpose.msra.mxu0 0
      %658 = vmatpush.bf16.xpose.msra.mxu0 0
      %659 = vmatpush.bf16.xpose.msra.mxu0 0
      %660 = vmatpush.bf16.xpose.msra.mxu0 0
      %661 = vmatpush.bf16.xpose.msra.mxu0 0
      %662 = vmatpush.bf16.xpose.msra.mxu0 0
      %663 = vmatpush.bf16.xpose.msra.mxu0 %v654
      %664 = vmatmul.bf16.gmra.mxu0 %v651
      %v665 = vpop.f32.mrf.mxu0
      %v666 = vadd.f32 0.0, %v665
      %v667 = vpop.f32.mrf.mxu0
      %668 = vdwg.mxu0
      %v670 = vunpack.c.l.b16 %v479
      %v671 = vpack.c.b16 %v670, %v670
      %672 = vrot.lane.b32.xlu0 %v671, 120
      %v673 = vpop.permute.xlu0 %672
      %v675 = vunpack.c.l.b16 %v508
      %v676 = vpack.c.b16 %v675, %v675
      %677 = vrot.lane.b32.xlu0 %v676, 120
      %v678 = vpop.permute.xlu0 %677
      %v680 = vsel %vm538, %v673, 0
      %v683 = vsel %vm538, %v678, 0
      %685 = vmatpush.bf16.xpose.msra.mxu0 0
      %686 = vmatpush.bf16.xpose.msra.mxu0 0
      %687 = vmatpush.bf16.xpose.msra.mxu0 0
      %688 = vmatpush.bf16.xpose.msra.mxu0 0
      %689 = vmatpush.bf16.xpose.msra.mxu0 0
      %690 = vmatpush.bf16.xpose.msra.mxu0 0
      %691 = vmatpush.bf16.xpose.msra.mxu0 0
      %692 = vmatpush.bf16.xpose.msra.mxu0 %v683
      %693 = vmatmul.bf16.gmra.mxu0 %v680
      %v694 = vpop.f32.mrf.mxu0
      %v695 = vadd.f32 0.0, %v694
      %v696 = vpop.f32.mrf.mxu0
      %697 = vdwg.mxu0
      %v698 = vsel %vm538, %v666, -inf
      %699 = vmax.xlane.f32.xlu0 %v698
      %v700 = vpop.xlane.xlu0 %699
      %v701 = vsel %vm538, %v695, -inf
      %702 = vmax.xlane.f32.xlu0 %v701
      %v703 = vpop.xlane.xlu0 %702
      %v704 = vsub.f32 %v666, %v700
      %v705 = vsub.f32 %v695, %v703
      %v706 = vmul.f32 %v704, 1.442695
      %v707 = vpow.pop %v706
      %v708 = vmul.f32 %v705, 1.442695
      %v709 = vpow.pop %v708
      %v710 = vsel %vm538, %v707, 0.0
      %711 = vadd.xlane.f32.xlu0 %v710
      %v712 = vpop.xlane.xlu0 %711
      %v713 = vsel %vm538, %v709, 0.0
      %714 = vadd.xlane.f32.xlu0 %v713
      %v715 = vpop.xlane.xlu0 %714
      %v716 = vrcp.pop %v712
      %v717 = vrcp.pop %v715
      %v718 = vmul.f32 %v707, %v716
      %v719 = vmul.f32 %v709, %v717
      %v720 = vpack.c.bf16 %v718, %v718
      %v721 = vpack.c.bf16 %v719, %v719
      %v723 = vunpack.c.l.b16 %v536
      %v724 = vpack.c.b16 %v723, %v723
      %725 = vrot.lane.b32.xlu0 %v724, 120
      %v726 = vpop.permute.xlu0 %725
      %v728 = vsel %vm538, %v720, 0
      %v731 = vsel %vm604, %v726, 0
      %733 = vmatpush.bf16.msra.mxu0 0
      %734 = vmatpush.bf16.msra.mxu0 0
      %735 = vmatpush.bf16.msra.mxu0 0
      %736 = vmatpush.bf16.msra.mxu0 0
      %737 = vmatpush.bf16.msra.mxu0 0
      %738 = vmatpush.bf16.msra.mxu0 0
      %739 = vmatpush.bf16.msra.mxu0 0
      %740 = vmatpush.bf16.msra.mxu0 %v731
      %741 = vmatmul.bf16.gmra.mxu0 %v728
      %v742 = vpop.f32.mrf.mxu0
      %v743 = vadd.f32 0.0, %v742
      %v744 = vpop.f32.mrf.mxu0
      %745 = vdwg.mxu0
      %v747 = vunpack.c.l.b16 %v537
      %v748 = vpack.c.b16 %v747, %v747
      %749 = vrot.lane.b32.xlu0 %v748, 120
      %v750 = vpop.permute.xlu0 %749
      %v752 = vsel %vm538, %v721, 0
      %v755 = vsel %vm604, %v750, 0
      %757 = vmatpush.bf16.msra.mxu0 0
      %758 = vmatpush.bf16.msra.mxu0 0
      %759 = vmatpush.bf16.msra.mxu0 0
      %760 = vmatpush.bf16.msra.mxu0 0
      %761 = vmatpush.bf16.msra.mxu0 0
      %762 = vmatpush.bf16.msra.mxu0 0
      %763 = vmatpush.bf16.msra.mxu0 0
      %764 = vmatpush.bf16.msra.mxu0 %v755
      %765 = vmatmul.bf16.gmra.mxu0 %v752
      %v766 = vpop.f32.mrf.mxu0
      %v767 = vadd.f32 0.0, %v766
      %v768 = vpop.f32.mrf.mxu0
      %769 = vdwg.mxu0
      %770 = vrot.lane.b32.xlu0 %v642, 112
      %v771 = vpop.permute.xlu0 %770
      %772 = vrot.lane.b32.xlu0 %v647, 112
      %v773 = vpop.permute.xlu0 %772
      %v775 = vsel %vm538, %v771, 0
      %v778 = vsel %vm538, %v773, 0
      %780 = vmatpush.bf16.xpose.msra.mxu0 0
      %781 = vmatpush.bf16.xpose.msra.mxu0 0
      %782 = vmatpush.bf16.xpose.msra.mxu0 0
      %783 = vmatpush.bf16.xpose.msra.mxu0 0
      %784 = vmatpush.bf16.xpose.msra.mxu0 0
      %785 = vmatpush.bf16.xpose.msra.mxu0 0
      %786 = vmatpush.bf16.xpose.msra.mxu0 0
      %787 = vmatpush.bf16.xpose.msra.mxu0 %v778
      %788 = vmatmul.bf16.gmra.mxu0 %v775
      %v789 = vpop.f32.mrf.mxu0
      %v790 = vadd.f32 0.0, %v789
      %v791 = vpop.f32.mrf.mxu0
      %792 = vdwg.mxu0
      %793 = vrot.lane.b32.xlu0 %v671, 112
      %v794 = vpop.permute.xlu0 %793
      %795 = vrot.lane.b32.xlu0 %v676, 112
      %v796 = vpop.permute.xlu0 %795
      %v798 = vsel %vm538, %v794, 0
      %v801 = vsel %vm538, %v796, 0
      %803 = vmatpush.bf16.xpose.msra.mxu0 0
      %804 = vmatpush.bf16.xpose.msra.mxu0 0
      %805 = vmatpush.bf16.xpose.msra.mxu0 0
      %806 = vmatpush.bf16.xpose.msra.mxu0 0
      %807 = vmatpush.bf16.xpose.msra.mxu0 0
      %808 = vmatpush.bf16.xpose.msra.mxu0 0
      %809 = vmatpush.bf16.xpose.msra.mxu0 0
      %810 = vmatpush.bf16.xpose.msra.mxu0 %v801
      %811 = vmatmul.bf16.gmra.mxu0 %v798
      %v812 = vpop.f32.mrf.mxu0
      %v813 = vadd.f32 0.0, %v812
      %v814 = vpop.f32.mrf.mxu0
      %815 = vdwg.mxu0
      %v816 = vsel %vm538, %v790, -inf
      %817 = vmax.xlane.f32.xlu0 %v816
      %v818 = vpop.xlane.xlu0 %817
      %v819 = vsel %vm538, %v813, -inf
      %820 = vmax.xlane.f32.xlu0 %v819
      %v821 = vpop.xlane.xlu0 %820
      %v822 = vsub.f32 %v790, %v818
      %v823 = vsub.f32 %v813, %v821
      %v824 = vmul.f32 %v822, 1.442695
      %v825 = vpow.pop %v824
      %v826 = vmul.f32 %v823, 1.442695
      %v827 = vpow.pop %v826
      %v828 = vsel %vm538, %v825, 0.0
      %829 = vadd.xlane.f32.xlu0 %v828
      %v830 = vpop.xlane.xlu0 %829
      %v831 = vsel %vm538, %v827, 0.0
      %832 = vadd.xlane.f32.xlu0 %v831
      %v833 = vpop.xlane.xlu0 %832
      %v834 = vrcp.pop %v830
      %v835 = vrcp.pop %v833
      %v836 = vmul.f32 %v825, %v834
      %v837 = vmul.f32 %v827, %v835
      %v838 = vpack.c.bf16 %v836, %v836
      %v839 = vpack.c.bf16 %v837, %v837
      %840 = vrot.lane.b32.xlu0 %v724, 112
      %v841 = vpop.permute.xlu0 %840
      %v843 = vsel %vm538, %v838, 0
      %v846 = vsel %vm604, %v841, 0
      %848 = vmatpush.bf16.msra.mxu0 0
      %849 = vmatpush.bf16.msra.mxu0 0
      %850 = vmatpush.bf16.msra.mxu0 0
      %851 = vmatpush.bf16.msra.mxu0 0
      %852 = vmatpush.bf16.msra.mxu0 0
      %853 = vmatpush.bf16.msra.mxu0 0
      %854 = vmatpush.bf16.msra.mxu0 0
      %855 = vmatpush.bf16.msra.mxu0 %v846
      %856 = vmatmul.bf16.gmra.mxu0 %v843
      %v857 = vpop.f32.mrf.mxu0
      %v858 = vadd.f32 0.0, %v857
      %v859 = vpop.f32.mrf.mxu0
      %860 = vdwg.mxu0
      %861 = vrot.lane.b32.xlu0 %v748, 112
      %v862 = vpop.permute.xlu0 %861
      %v864 = vsel %vm538, %v839, 0
      %v867 = vsel %vm604, %v862, 0
      %869 = vmatpush.bf16.msra.mxu0 0
      %870 = vmatpush.bf16.msra.mxu0 0
      %871 = vmatpush.bf16.msra.mxu0 0
      %872 = vmatpush.bf16.msra.mxu0 0
      %873 = vmatpush.bf16.msra.mxu0 0
      %874 = vmatpush.bf16.msra.mxu0 0
      %875 = vmatpush.bf16.msra.mxu0 0
      %876 = vmatpush.bf16.msra.mxu0 %v867
      %877 = vmatmul.bf16.gmra.mxu0 %v864
      %v878 = vpop.f32.mrf.mxu0
      %v879 = vadd.f32 0.0, %v878
      %v880 = vpop.f32.mrf.mxu0
      %881 = vdwg.mxu0
      %882 = vrot.lane.b32.xlu0 %v642, 104
      %v883 = vpop.permute.xlu0 %882
      %884 = vrot.lane.b32.xlu0 %v647, 104
      %v885 = vpop.permute.xlu0 %884
      %v887 = vsel %vm538, %v883, 0
      %v890 = vsel %vm538, %v885, 0
      %892 = vmatpush.bf16.xpose.msra.mxu0 0
      %893 = vmatpush.bf16.xpose.msra.mxu0 0
      %894 = vmatpush.bf16.xpose.msra.mxu0 0
      %895 = vmatpush.bf16.xpose.msra.mxu0 0
      %896 = vmatpush.bf16.xpose.msra.mxu0 0
      %897 = vmatpush.bf16.xpose.msra.mxu0 0
      %898 = vmatpush.bf16.xpose.msra.mxu0 0
      %899 = vmatpush.bf16.xpose.msra.mxu0 %v890
      %900 = vmatmul.bf16.gmra.mxu0 %v887
      %v901 = vpop.f32.mrf.mxu0
      %v902 = vadd.f32 0.0, %v901
      %v903 = vpop.f32.mrf.mxu0
      %904 = vdwg.mxu0
      %905 = vrot.lane.b32.xlu0 %v671, 104
      %v906 = vpop.permute.xlu0 %905
      %907 = vrot.lane.b32.xlu0 %v676, 104
      %v908 = vpop.permute.xlu0 %907
      %v910 = vsel %vm538, %v906, 0
      %v913 = vsel %vm538, %v908, 0
      %915 = vmatpush.bf16.xpose.msra.mxu0 0
      %916 = vmatpush.bf16.xpose.msra.mxu0 0
      %917 = vmatpush.bf16.xpose.msra.mxu0 0
      %918 = vmatpush.bf16.xpose.msra.mxu0 0
      %919 = vmatpush.bf16.xpose.msra.mxu0 0
      %920 = vmatpush.bf16.xpose.msra.mxu0 0
      %921 = vmatpush.bf16.xpose.msra.mxu0 0
      %922 = vmatpush.bf16.xpose.msra.mxu0 %v913
      %923 = vmatmul.bf16.gmra.mxu0 %v910
      %v924 = vpop.f32.mrf.mxu0
      %v925 = vadd.f32 0.0, %v924
      %v926 = vpop.f32.mrf.mxu0
      %927 = vdwg.mxu0
      %v928 = vsel %vm538, %v902, -inf
      %929 = vmax.xlane.f32.xlu0 %v928
      %v930 = vpop.xlane.xlu0 %929
      %v931 = vsel %vm538, %v925, -inf
      %932 = vmax.xlane.f32.xlu0 %v931
      %v933 = vpop.xlane.xlu0 %932
      %v934 = vsub.f32 %v902, %v930
      %v935 = vsub.f32 %v925, %v933
      %v936 = vmul.f32 %v934, 1.442695
      %v937 = vpow.pop %v936
      %v938 = vmul.f32 %v935, 1.442695
      %v939 = vpow.pop %v938
      %v940 = vsel %vm538, %v937, 0.0
      %941 = vadd.xlane.f32.xlu0 %v940
      %v942 = vpop.xlane.xlu0 %941
      %v943 = vsel %vm538, %v939, 0.0
      %944 = vadd.xlane.f32.xlu0 %v943
      %v945 = vpop.xlane.xlu0 %944
      %v946 = vrcp.pop %v942
      %v947 = vrcp.pop %v945
      %v948 = vmul.f32 %v937, %v946
      %v949 = vmul.f32 %v939, %v947
      %v950 = vpack.c.bf16 %v948, %v948
      %v951 = vpack.c.bf16 %v949, %v949
      %952 = vrot.lane.b32.xlu0 %v724, 104
      %v953 = vpop.permute.xlu0 %952
      %v955 = vsel %vm538, %v950, 0
      %v958 = vsel %vm604, %v953, 0
      %960 = vmatpush.bf16.msra.mxu0 0
      %961 = vmatpush.bf16.msra.mxu0 0
      %962 = vmatpush.bf16.msra.mxu0 0
      %963 = vmatpush.bf16.msra.mxu0 0
      %964 = vmatpush.bf16.msra.mxu0 0
      %965 = vmatpush.bf16.msra.mxu0 0
      %966 = vmatpush.bf16.msra.mxu0 0
      %967 = vmatpush.bf16.msra.mxu0 %v958
      %968 = vmatmul.bf16.gmra.mxu0 %v955
      %v969 = vpop.f32.mrf.mxu0
      %v970 = vadd.f32 0.0, %v969
      %v971 = vpop.f32.mrf.mxu0
      %972 = vdwg.mxu0
      %973 = vrot.lane.b32.xlu0 %v748, 104
      %v974 = vpop.permute.xlu0 %973
      %v976 = vsel %vm538, %v951, 0
      %v979 = vsel %vm604, %v974, 0
      %981 = vmatpush.bf16.msra.mxu0 0
      %982 = vmatpush.bf16.msra.mxu0 0
      %983 = vmatpush.bf16.msra.mxu0 0
      %984 = vmatpush.bf16.msra.mxu0 0
      %985 = vmatpush.bf16.msra.mxu0 0
      %986 = vmatpush.bf16.msra.mxu0 0
      %987 = vmatpush.bf16.msra.mxu0 0
      %988 = vmatpush.bf16.msra.mxu0 %v979
      %989 = vmatmul.bf16.gmra.mxu0 %v976
      %v990 = vpop.f32.mrf.mxu0
      %v991 = vadd.f32 0.0, %v990
      %v992 = vpop.f32.mrf.mxu0
      %993 = vdwg.mxu0
      %996 = vrot.lane.b32.xlu0 %v743, 8
      %v997 = vpop.permute.xlu0 %996
      %998 = vrot.lane.b32.xlu0 %v767, 8
      %v999 = vpop.permute.xlu0 %998
      %1004 = vrot.lane.b32.xlu0 %v858, 16
      %v1005 = vpop.permute.xlu0 %1004
      %1006 = vrot.lane.b32.xlu0 %v879, 16
      %v1007 = vpop.permute.xlu0 %1006
      %1012 = vrot.lane.b32.xlu0 %v970, 24
      %v1013 = vpop.permute.xlu0 %1012
      %1014 = vrot.lane.b32.xlu0 %v991, 24
      %v1015 = vpop.permute.xlu0 %1014
      %v1018 = vsel %vm538, %v618, %v997
      %v1019 = vsel %vm538, %v637, %v999
      %vm1020 = vcmask 130048
      %v1021 = vsel %vm1020, %v1018, %v1005
      %v1022 = vsel %vm1020, %v1019, %v1007
      %vm1023 = vcmask 195584
      %v1024 = vsel %vm1023, %v1021, %v1013
      %v1025 = vsel %vm1023, %v1022, %v1015
      %v1026 = vpack.c.bf16 %v1025, %v1024
      %v1027 = vperm.slane %v442, 3
      %v1032 = vunpack.c.l.b16 %v422
      %v1033 = vunpack.c.l.b16 %v423
      %v1034 = vunpack.c.l.b16 %v424
      %v1035 = vunpack.c.l.b16 %v425
      %v1036 = vpack.c.b16 %v1033, %v1032
      %v1037 = vpack.c.b16 %v1035, %v1034
      %v1041 = vsel %vm458, %v1026, 0
      %1043 = vmatpush.bf16.msra.mxu0 0
      %1044 = vmatpush.bf16.msra.mxu0 0
      %1045 = vmatpush.bf16.msra.mxu0 0
      %1046 = vmatpush.bf16.msra.mxu0 0
      %1047 = vmatpush.bf16.msra.mxu0 0
      %1048 = vmatpush.bf16.msra.mxu0 0
      %1049 = vmatpush.bf16.msra.mxu0 %v1037
      %1050 = vmatpush.bf16.msra.mxu0 %v1036
      %1051 = vmatmul.bf16.gmra.mxu0 %v1041
      %v1052 = vpop.f32.mrf.mxu0
      %v1053 = vadd.f32 %v1027, %v1052
      %v1054 = vpop.f32.mrf.mxu0
      %v1055 = vadd.f32 %v1027, %v1054
      %1056 = vdwg.mxu0
      %v1057 = vadd.f32 %v405, %v1053
      %v1058 = vadd.f32 %v406, %v1055
      %v1059 = vsel %vm458, %v1057, 0.0
      %1060 = vadd.xlane.f32.xlu0 %v1059
      %v1061 = vpop.xlane.xlu0 %1060
      %v1062 = vsel %vm458, %v1058, 0.0
      %1063 = vadd.xlane.f32.xlu0 %v1062
      %v1064 = vpop.xlane.xlu0 %1063
      %v1065 = vrcp.pop 32.0
      %v1066 = vmul.f32 32.0, %v1065
      %v1067 = vsub.f32 1.0, %v1066
      %v1068 = vmul.f32 %v1065, %v1067
      %v1069 = vadd.f32 %v1065, %v1068
      %vm1070 = vweird.f32 %v1065
      %v1071 = vsel %vm1070, %v1065, %v1069
      %v1072 = vmul.f32 %v1061, %v1071
      %v1073 = vmul.f32 %v1064, %v1071
      %v1074 = vsub.f32 %v1057, %v1072
      %v1075 = vsub.f32 %v1058, %v1073
      %v1076 = vmul.f32 %v1074, %v1074
      %v1077 = vmul.f32 %v1075, %v1075
      %v1078 = vsel %vm458, %v1076, 0.0
      %1079 = vadd.xlane.f32.xlu0 %v1078
      %v1080 = vpop.xlane.xlu0 %1079
      %v1081 = vsel %vm458, %v1077, 0.0
      %1082 = vadd.xlane.f32.xlu0 %v1081
      %v1083 = vpop.xlane.xlu0 %1082
      %v1084 = vmul.f32 %v1080, %v1071
      %v1085 = vmul.f32 %v1083, %v1071
      %v1086 = vadd.f32 %v1084, 1e-05
      %v1087 = vadd.f32 %v1085, 1e-05
      %v1088 = vrsqrt.pop %v1086
      %v1089 = vmul.f32 %v1088, %v1086
      %v1090 = vmul.f32 %v1089, %v1088
      %v1091 = vmul.f32 0.5, %v1090
      %v1092 = vsub.f32 1.5, %v1091
      %v1093 = vmul.f32 %v1088, %v1092
      %vm1094 = vweird.f32 %v1086
      %vm1095 = vweird.f32 %v1088
      %vm1096 = vmor %vm1094, %vm1095
      %v1097 = vsel %vm1096, %v1088, %v1093
      %v1098 = vrsqrt.pop %v1087
      %v1099 = vmul.f32 %v1098, %v1087
      %v1100 = vmul.f32 %v1099, %v1098
      %v1101 = vmul.f32 0.5, %v1100
      %v1102 = vsub.f32 1.5, %v1101
      %v1103 = vmul.f32 %v1098, %v1102
      %vm1104 = vweird.f32 %v1087
      %vm1105 = vweird.f32 %v1098
      %vm1106 = vmor %vm1104, %vm1105
      %v1107 = vsel %vm1106, %v1098, %v1103
      %v1108 = vmul.f32 %v1074, %v1097
      %v1109 = vmul.f32 %v1075, %v1107
      %v1110 = vperm.slane %v443, 0
      %v1111 = vmul.f32 %v1108, %v1110
      %v1112 = vmul.f32 %v1109, %v1110
      %v1113 = vperm.slane %v443, 1
      %v1114 = vadd.f32 %v1111, %v1113
      %v1115 = vadd.f32 %v1112, %v1113
      %v1116 = vpack.c.bf16 %v1115, %v1114
      %v1117 = vperm.slane %v442, 4
      %v1122 = vunpack.c.l.b16 %v426
      %v1123 = vunpack.c.l.b16 %v427
      %v1124 = vunpack.c.l.b16 %v428
      %v1125 = vunpack.c.l.b16 %v429
      %v1126 = vpack.c.b16 %v1123, %v1122
      %v1127 = vpack.c.b16 %v1125, %v1124
      %v1131 = vsel %vm458, %v1116, 0
      %1133 = vmatpush.bf16.msra.mxu0 0
      %1134 = vmatpush.bf16.msra.mxu0 0
      %1135 = vmatpush.bf16.msra.mxu0 0
      %1136 = vmatpush.bf16.msra.mxu0 0
      %1137 = vmatpush.bf16.msra.mxu0 0
      %1138 = vmatpush.bf16.msra.mxu0 0
      %1139 = vmatpush.bf16.msra.mxu0 %v1127
      %1140 = vmatpush.bf16.msra.mxu0 %v1126
      %1141 = vmatmul.bf16.gmra.mxu0 %v1131
      %v1142 = vpop.f32.mrf.mxu0
      %v1143 = vadd.f32 %v1117, %v1142
      %v1144 = vpop.f32.mrf.mxu0
      %v1145 = vadd.f32 %v1117, %v1144
      %1146 = vdwg.mxu0
      %v1147 = vmul.f32 %v1143, 0.35355338
      %v1148 = vmul.f32 %v1145, 0.35355338
      %v1149 = vpack.c.bf16 %v1147, %v1147
      %v1150 = vpack.c.bf16 %v1148, %v1148
      %v1151 = vperm.slane %v442, 5
      %v1155 = vunpack.c.l.b16 %v407
      %v1156 = vunpack.c.l.b16 %v408
      %v1157 = vunpack.c.l.b16 %v409
      %v1158 = vpack.c.b16 %v1156, %v1155
      %v1159 = vpack.c.b16 %v1157, %v1157
      %v1164 = vunpack.c.l.b16 %v430
      %v1165 = vunpack.c.l.b16 %v431
      %v1166 = vunpack.c.l.b16 %v432
      %v1167 = vunpack.c.l.b16 %v433
      %v1168 = vpack.c.b16 %v1165, %v1164
      %v1169 = vpack.c.b16 %v1167, %v1166
      %v1173 = vsel %vm458, %v1158, 0
      %v1176 = vsel %vm458, %v1159, 0
      %1178 = vmatpush.bf16.msra.mxu0 0
      %1179 = vmatpush.bf16.msra.mxu0 0
      %1180 = vmatpush.bf16.msra.mxu0 0
      %1181 = vmatpush.bf16.msra.mxu0 0
      %1182 = vmatpush.bf16.msra.mxu0 0
      %1183 = vmatpush.bf16.msra.mxu0 0
      %1184 = vmatpush.bf16.msra.mxu0 %v1169
      %1185 = vmatpush.bf16.msra.mxu0 %v1168
      %1186 = vmatmul.bf16.gmra.mxu0 %v1173
      %v1187 = vpop.f32.mrf.mxu0
      %v1188 = vadd.f32 %v1151, %v1187
      %v1189 = vpop.f32.mrf.mxu0
      %v1190 = vadd.f32 %v1151, %v1189
      %1191 = vmatmul.bf16.gmra.mxu0 %v1176
      %v1192 = vpop.f32.mrf.mxu0
      %v1193 = vadd.f32 %v1151, %v1192
      %v1194 = vpop.f32.mrf.mxu0
      %1195 = vdwg.mxu0
      %v1196 = vpack.c.bf16 %v1188, %v1188
      %v1197 = vpack.c.bf16 %v1190, %v1190
      %v1198 = vpack.c.bf16 %v1193, %v1193
      %v1202 = vrot.slane %v1196, 3
      %v1203 = vrot.slane %v1197, 3
      %v1204 = vrot.slane %v1198, 3
      %vm1205 = vcmask 1040384
      %v1208 = vsel %vm1205, %v1196, %v1202
      %vm1209 = vcmask 1041409
      %v1210 = vsel %vm1209, %v1196, %v1202
      %v1212 = vrot.slane %v1210, 1
      %vm1213 = vcmask 1042434
      %v1214 = vsel %vm1213, %v1196, %v1202
      %v1216 = vrot.slane %v1214, 2
      %vm1217 = vcmask 1043459
      %v1218 = vsel %vm1217, %v1196, %v1202
      %v1220 = vrot.slane %v1218, 3
      %v1223 = vsel %vm1205, %v1197, %v1203
      %v1224 = vsel %vm1209, %v1197, %v1203
      %v1226 = vrot.slane %v1224, 1
      %v1227 = vsel %vm1213, %v1197, %v1203
      %v1229 = vrot.slane %v1227, 2
      %v1230 = vsel %vm1217, %v1197, %v1203
      %v1232 = vrot.slane %v1230, 3
      %v1235 = vsel %vm1205, %v1198, %v1204
      %v1236 = vsel %vm1209, %v1198, %v1204
      %v1238 = vrot.slane %v1236, 1
      %v1239 = vperm.slane %v442, 6
      %v1244 = vunpack.c.l.b16 %v434
      %v1245 = vunpack.c.l.b16 %v435
      %v1246 = vunpack.c.l.b16 %v436
      %v1247 = vunpack.c.l.b16 %v437
      %v1248 = vpack.c.b16 %v1245, %v1244
      %v1249 = vpack.c.b16 %v1247, %v1246
      %1252 = vmatpush.bf16.msra.mxu0 0
      %1253 = vmatpush.bf16.msra.mxu0 0
      %1254 = vmatpush.bf16.msra.mxu0 0
      %1255 = vmatpush.bf16.msra.mxu0 0
      %1256 = vmatpush.bf16.msra.mxu0 0
      %1257 = vmatpush.bf16.msra.mxu0 0
      %1258 = vmatpush.bf16.msra.mxu0 %v1249
      %1259 = vmatpush.bf16.msra.mxu0 %v1248
      %1260 = vmatmul.bf16.gmra.mxu0 %v1173
      %v1261 = vpop.f32.mrf.mxu0
      %v1262 = vadd.f32 %v1239, %v1261
      %v1263 = vpop.f32.mrf.mxu0
      %v1264 = vadd.f32 %v1239, %v1263
      %1265 = vmatmul.bf16.gmra.mxu0 %v1176
      %v1266 = vpop.f32.mrf.mxu0
      %v1267 = vadd.f32 %v1239, %v1266
      %v1268 = vpop.f32.mrf.mxu0
      %1269 = vdwg.mxu0
      %v1270 = vpack.c.bf16 %v1262, %v1262
      %v1271 = vpack.c.bf16 %v1264, %v1264
      %v1272 = vpack.c.bf16 %v1267, %v1267
      %v1276 = vrot.slane %v1270, 3
      %v1277 = vrot.slane %v1271, 3
      %v1278 = vrot.slane %v1272, 3
      %v1281 = vsel %vm1205, %v1270, %v1276
      %v1282 = vsel %vm1209, %v1270, %v1276
      %v1284 = vrot.slane %v1282, 1
      %v1285 = vsel %vm1213, %v1270, %v1276
      %v1287 = vrot.slane %v1285, 2
      %v1288 = vsel %vm1217, %v1270, %v1276
      %v1290 = vrot.slane %v1288, 3
      %v1293 = vsel %vm1205, %v1271, %v1277
      %v1294 = vsel %vm1209, %v1271, %v1277
      %v1296 = vrot.slane %v1294, 1
      %v1297 = vsel %vm1213, %v1271, %v1277
      %v1299 = vrot.slane %v1297, 2
      %v1300 = vsel %vm1217, %v1271, %v1277
      %v1302 = vrot.slane %v1300, 3
      %v1305 = vsel %vm1205, %v1272, %v1278
      %v1306 = vsel %vm1209, %v1272, %v1278
      %v1308 = vrot.slane %v1306, 1
      %1309 = vst [vmem:[#allocation1] ss:$9 sm:$0xff] %v1208
      %s1311 = scalar_lea.vmem [#allocation1], 1
      %1312 = vst [vmem:[%s1311] ss:$9 sm:$0xff] %v1212
      %s1314 = scalar_lea.vmem [#allocation1], 2
      %1315 = vst [vmem:[%s1314] ss:$9 sm:$0xff] %v1216
      %s1317 = scalar_lea.vmem [#allocation1], 3
      %1318 = vst [vmem:[%s1317] ss:$9 sm:$0xff] %v1220
      %s1319 = scalar_lea.vmem [#allocation1], 4
      %1320 = vst [vmem:[%s1319] ss:$9 sm:$0xff] %v1223
      %v1321 = vld [vmem:[#allocation1] sm:$0xff]
      %v1323 = vsel %vm538, %v1149, 0
      %v1325 = vsel %vm538, %v1321, 0
      %1327 = vmatpush.bf16.xpose.msra.mxu0 0
      %1328 = vmatpush.bf16.xpose.msra.mxu0 0
      %1329 = vmatpush.bf16.xpose.msra.mxu0 0
      %1330 = vmatpush.bf16.xpose.msra.mxu0 0
      %1331 = vmatpush.bf16.xpose.msra.mxu0 0
      %1332 = vmatpush.bf16.xpose.msra.mxu0 0
      %1333 = vmatpush.bf16.xpose.msra.mxu0 0
      %1334 = vmatpush.bf16.xpose.msra.mxu0 %v1325
      %1335 = vmatmul.bf16.gmra.mxu0 %v1323
      %v1336 = vpop.f32.mrf.mxu0
      %v1337 = vadd.f32 0.0, %v1336
      %v1338 = vpop.f32.mrf.mxu0
      %1339 = vdwg.mxu0
      %1341 = vst [vmem:[#allocation1] ss:$9 sm:$0xff] %v1226
      %s1343 = scalar_lea.vmem [#allocation1], 1
      %1344 = vst [vmem:[%s1343] ss:$9 sm:$0xff] %v1229
      %s1346 = scalar_lea.vmem [#allocation1], 2
      %1347 = vst [vmem:[%s1346] ss:$9 sm:$0xff] %v1232
      %s1348 = scalar_lea.vmem [#allocation1], 3
      %1349 = vst [vmem:[%s1348] ss:$9 sm:$0xff] %v1235
      %s1351 = scalar_lea.vmem [#allocation1], 4
      %1352 = vst [vmem:[%s1351] ss:$9 sm:$0xff] %v1238
      %v1353 = vld [vmem:[#allocation1] sm:$0xff]
      %v1355 = vsel %vm538, %v1150, 0
      %v1357 = vsel %vm538, %v1353, 0
      %1359 = vmatpush.bf16.xpose.msra.mxu0 0
      %1360 = vmatpush.bf16.xpose.msra.mxu0 0
      %1361 = vmatpush.bf16.xpose.msra.mxu0 0
      %1362 = vmatpush.bf16.xpose.msra.mxu0 0
      %1363 = vmatpush.bf16.xpose.msra.mxu0 0
      %1364 = vmatpush.bf16.xpose.msra.mxu0 0
      %1365 = vmatpush.bf16.xpose.msra.mxu0 0
      %1366 = vmatpush.bf16.xpose.msra.mxu0 %v1357
      %1367 = vmatmul.bf16.gmra.mxu0 %v1355
      %v1368 = vpop.f32.mrf.mxu0
      %v1369 = vadd.f32 0.0, %v1368
      %v1370 = vpop.f32.mrf.mxu0
      %1371 = vdwg.mxu0
      %vm1372 = vcmask 80896
      %v1373 = vsel %vm1372, %v1337, -inf
      %1374 = vmax.xlane.f32.xlu0 %v1373
      %v1375 = vpop.xlane.xlu0 %1374
      %v1376 = vsel %vm1372, %v1369, -inf
      %1377 = vmax.xlane.f32.xlu0 %v1376
      %v1378 = vpop.xlane.xlu0 %1377
      %v1379 = vsub.f32 %v1337, %v1375
      %v1380 = vsub.f32 %v1369, %v1378
      %v1381 = vmul.f32 %v1379, 1.442695
      %v1382 = vpow.pop %v1381
      %v1383 = vmul.f32 %v1380, 1.442695
      %v1384 = vpow.pop %v1383
      %v1385 = vsel %vm1372, %v1382, 0.0
      %1386 = vadd.xlane.f32.xlu0 %v1385
      %v1387 = vpop.xlane.xlu0 %1386
      %v1388 = vsel %vm1372, %v1384, 0.0
      %1389 = vadd.xlane.f32.xlu0 %v1388
      %v1390 = vpop.xlane.xlu0 %1389
      %v1391 = vrcp.pop %v1387
      %v1392 = vrcp.pop %v1390
      %v1393 = vmul.f32 %v1382, %v1391
      %v1394 = vmul.f32 %v1384, %v1392
      %v1395 = vpack.c.bf16 %v1393, %v1393
      %v1396 = vpack.c.bf16 %v1394, %v1394
      %1397 = vst [vmem:[#allocation1] ss:$9 sm:$0xff] %v1281
      %s1399 = scalar_lea.vmem [#allocation1], 1
      %1400 = vst [vmem:[%s1399] ss:$9 sm:$0xff] %v1284
      %s1402 = scalar_lea.vmem [#allocation1], 2
      %1403 = vst [vmem:[%s1402] ss:$9 sm:$0xff] %v1287
      %s1405 = scalar_lea.vmem [#allocation1], 3
      %1406 = vst [vmem:[%s1405] ss:$9 sm:$0xff] %v1290
      %s1407 = scalar_lea.vmem [#allocation1], 4
      %1408 = vst [vmem:[%s1407] ss:$9 sm:$0xff] %v1293
      %v1409 = vld [vmem:[#allocation1] sm:$0xff]
      %v1411 = vsel %vm1372, %v1395, 0
      %vm1413 = vcmask 1044480
      %v1414 = vsel %vm1413, %v1409, 0
      %1416 = vmatpush.bf16.msra.mxu0 0
      %1417 = vmatpush.bf16.msra.mxu0 0
      %1418 = vmatpush.bf16.msra.mxu0 0
      %1419 = vmatpush.bf16.msra.mxu0 0
      %1420 = vmatpush.bf16.msra.mxu0 0
      %1421 = vmatpush.bf16.msra.mxu0 0
      %1422 = vmatpush.bf16.msra.mxu0 0
      %1423 = vmatpush.bf16.msra.mxu0 %v1414
      %1424 = vmatmul.bf16.gmra.mxu0 %v1411
      %v1425 = vpop.f32.mrf.mxu0
      %v1426 = vadd.f32 0.0, %v1425
      %v1427 = vpop.f32.mrf.mxu0
      %1428 = vdwg.mxu0
      %1430 = vst [vmem:[#allocation1] ss:$9 sm:$0xff] %v1296
      %s1432 = scalar_lea.vmem [#allocation1], 1
      %1433 = vst [vmem:[%s1432] ss:$9 sm:$0xff] %v1299
      %s1435 = scalar_lea.vmem [#allocation1], 2
      %1436 = vst [vmem:[%s1435] ss:$9 sm:$0xff] %v1302
      %s1437 = scalar_lea.vmem [#allocation1], 3
      %1438 = vst [vmem:[%s1437] ss:$9 sm:$0xff] %v1305
      %s1440 = scalar_lea.vmem [#allocation1], 4
      %1441 = vst [vmem:[%s1440] ss:$9 sm:$0xff] %v1308
      %v1442 = vld [vmem:[#allocation1] sm:$0xff]
      %v1444 = vsel %vm1372, %v1396, 0
      %v1446 = vsel %vm1413, %v1442, 0
      %1448 = vmatpush.bf16.msra.mxu0 0
      %1449 = vmatpush.bf16.msra.mxu0 0
      %1450 = vmatpush.bf16.msra.mxu0 0
      %1451 = vmatpush.bf16.msra.mxu0 0
      %1452 = vmatpush.bf16.msra.mxu0 0
      %1453 = vmatpush.bf16.msra.mxu0 0
      %1454 = vmatpush.bf16.msra.mxu0 0
      %1455 = vmatpush.bf16.msra.mxu0 %v1446
      %1456 = vmatmul.bf16.gmra.mxu0 %v1444
      %v1457 = vpop.f32.mrf.mxu0
      %v1458 = vadd.f32 0.0, %v1457
      %v1459 = vpop.f32.mrf.mxu0
      %1460 = vdwg.mxu0
      %v1462 = vunpack.c.l.b16 %v1149
      %v1463 = vpack.c.b16 %v1462, %v1462
      %1464 = vrot.lane.b32.xlu0 %v1463, 120
      %v1465 = vpop.permute.xlu0 %1464
      %1466 = vst [vmem:[#allocation1] ss:$9 sm:$0xff] %v1208
      %s1467 = scalar_lea.vmem [#allocation1], 1
      %1468 = vst [vmem:[%s1467] ss:$9 sm:$0xff] %v1212
      %s1469 = scalar_lea.vmem [#allocation1], 2
      %1470 = vst [vmem:[%s1469] ss:$9 sm:$0xff] %v1216
      %s1471 = scalar_lea.vmem [#allocation1], 3
      %1472 = vst [vmem:[%s1471] ss:$9 sm:$0xff] %v1220
      %s1473 = scalar_lea.vmem [#allocation1], 4
      %1474 = vst [vmem:[%s1473] ss:$9 sm:$0xff] %v1223
      %v1475 = vld [vmem:[#allocation1] sm:$0xff]
      %1477 = vrot.lane.b32.xlu0 %v1475, 120
      %v1478 = vpop.permute.xlu0 %1477
      %v1480 = vsel %vm538, %v1465, 0
      %v1483 = vsel %vm538, %v1478, 0
      %1485 = vmatpush.bf16.xpose.msra.mxu0 0
      %1486 = vmatpush.bf16.xpose.msra.mxu0 0
      %1487 = vmatpush.bf16.xpose.msra.mxu0 0
      %1488 = vmatpush.bf16.xpose.msra.mxu0 0
      %1489 = vmatpush.bf16.xpose.msra.mxu0 0
      %1490 = vmatpush.bf16.xpose.msra.mxu0 0
      %1491 = vmatpush.bf16.xpose.msra.mxu0 0
      %1492 = vmatpush.bf16.xpose.msra.mxu0 %v1483
      %1493 = vmatmul.bf16.gmra.mxu0 %v1480
      %v1494 = vpop.f32.mrf.mxu0
      %v1495 = vadd.f32 0.0, %v1494
      %v1496 = vpop.f32.mrf.mxu0
      %1497 = vdwg.mxu0
      %v1499 = vunpack.c.l.b16 %v1150
      %v1500 = vpack.c.b16 %v1499, %v1499
      %1501 = vrot.lane.b32.xlu0 %v1500, 120
      %v1502 = vpop.permute.xlu0 %1501
      %1503 = vst [vmem:[#allocation1] ss:$9 sm:$0xff] %v1226
      %s1504 = scalar_lea.vmem [#allocation1], 1
      %1505 = vst [vmem:[%s1504] ss:$9 sm:$0xff] %v1229
      %s1506 = scalar_lea.vmem [#allocation1], 2
      %1507 = vst [vmem:[%s1506] ss:$9 sm:$0xff] %v1232
      %s1508 = scalar_lea.vmem [#allocation1], 3
      %1509 = vst [vmem:[%s1508] ss:$9 sm:$0xff] %v1235
      %s1510 = scalar_lea.vmem [#allocation1], 4
      %1511 = vst [vmem:[%s1510] ss:$9 sm:$0xff] %v1238
      %v1512 = vld [vmem:[#allocation1] sm:$0xff]
      %1514 = vrot.lane.b32.xlu0 %v1512, 120
      %v1515 = vpop.permute.xlu0 %1514
      %v1517 = vsel %vm538, %v1502, 0
      %v1520 = vsel %vm538, %v1515, 0
      %1522 = vmatpush.bf16.xpose.msra.mxu0 0
      %1523 = vmatpush.bf16.xpose.msra.mxu0 0
      %1524 = vmatpush.bf16.xpose.msra.mxu0 0
      %1525 = vmatpush.bf16.xpose.msra.mxu0 0
      %1526 = vmatpush.bf16.xpose.msra.mxu0 0
      %1527 = vmatpush.bf16.xpose.msra.mxu0 0
      %1528 = vmatpush.bf16.xpose.msra.mxu0 0
      %1529 = vmatpush.bf16.xpose.msra.mxu0 %v1520
      %1530 = vmatmul.bf16.gmra.mxu0 %v1517
      %v1531 = vpop.f32.mrf.mxu0
      %v1532 = vadd.f32 0.0, %v1531
      %v1533 = vpop.f32.mrf.mxu0
      %1534 = vdwg.mxu0
      %v1535 = vsel %vm1372, %v1495, -inf
      %1536 = vmax.xlane.f32.xlu0 %v1535
      %v1537 = vpop.xlane.xlu0 %1536
      %v1538 = vsel %vm1372, %v1532, -inf
      %1539 = vmax.xlane.f32.xlu0 %v1538
      %v1540 = vpop.xlane.xlu0 %1539
      %v1541 = vsub.f32 %v1495, %v1537
      %v1542 = vsub.f32 %v1532, %v1540
      %v1543 = vmul.f32 %v1541, 1.442695
      %v1544 = vpow.pop %v1543
      %v1545 = vmul.f32 %v1542, 1.442695
      %v1546 = vpow.pop %v1545
      %v1547 = vsel %vm1372, %v1544, 0.0
      %1548 = vadd.xlane.f32.xlu0 %v1547
      %v1549 = vpop.xlane.xlu0 %1548
      %v1550 = vsel %vm1372, %v1546, 0.0
      %1551 = vadd.xlane.f32.xlu0 %v1550
      %v1552 = vpop.xlane.xlu0 %1551
      %v1553 = vrcp.pop %v1549
      %v1554 = vrcp.pop %v1552
      %v1555 = vmul.f32 %v1544, %v1553
      %v1556 = vmul.f32 %v1546, %v1554
      %v1557 = vpack.c.bf16 %v1555, %v1555
      %v1558 = vpack.c.bf16 %v1556, %v1556
      %1559 = vst [vmem:[#allocation1] ss:$9 sm:$0xff] %v1281
      %s1560 = scalar_lea.vmem [#allocation1], 1
      %1561 = vst [vmem:[%s1560] ss:$9 sm:$0xff] %v1284
      %s1562 = scalar_lea.vmem [#allocation1], 2
      %1563 = vst [vmem:[%s1562] ss:$9 sm:$0xff] %v1287
      %s1564 = scalar_lea.vmem [#allocation1], 3
      %1565 = vst [vmem:[%s1564] ss:$9 sm:$0xff] %v1290
      %s1566 = scalar_lea.vmem [#allocation1], 4
      %1567 = vst [vmem:[%s1566] ss:$9 sm:$0xff] %v1293
      %v1568 = vld [vmem:[#allocation1] sm:$0xff]
      %1570 = vrot.lane.b32.xlu0 %v1568, 120
      %v1571 = vpop.permute.xlu0 %1570
      %v1573 = vsel %vm1372, %v1557, 0
      %v1576 = vsel %vm1413, %v1571, 0
      %1578 = vmatpush.bf16.msra.mxu0 0
      %1579 = vmatpush.bf16.msra.mxu0 0
      %1580 = vmatpush.bf16.msra.mxu0 0
      %1581 = vmatpush.bf16.msra.mxu0 0
      %1582 = vmatpush.bf16.msra.mxu0 0
      %1583 = vmatpush.bf16.msra.mxu0 0
      %1584 = vmatpush.bf16.msra.mxu0 0
      %1585 = vmatpush.bf16.msra.mxu0 %v1576
      %1586 = vmatmul.bf16.gmra.mxu0 %v1573
      %v1587 = vpop.f32.mrf.mxu0
      %v1588 = vadd.f32 0.0, %v1587
      %v1589 = vpop.f32.mrf.mxu0
      %1590 = vdwg.mxu0
      %1591 = vst [vmem:[#allocation1] ss:$9 sm:$0xff] %v1296
      %s1592 = scalar_lea.vmem [#allocation1], 1
      %1593 = vst [vmem:[%s1592] ss:$9 sm:$0xff] %v1299
      %s1594 = scalar_lea.vmem [#allocation1], 2
      %1595 = vst [vmem:[%s1594] ss:$9 sm:$0xff] %v1302
      %s1596 = scalar_lea.vmem [#allocation1], 3
      %1597 = vst [vmem:[%s1596] ss:$9 sm:$0xff] %v1305
      %s1598 = scalar_lea.vmem [#allocation1], 4
      %1599 = vst [vmem:[%s1598] ss:$9 sm:$0xff] %v1308
      %v1600 = vld [vmem:[#allocation1] sm:$0xff]
      %1602 = vrot.lane.b32.xlu0 %v1600, 120
      %v1603 = vpop.permute.xlu0 %1602
      %v1605 = vsel %vm1372, %v1558, 0
      %v1608 = vsel %vm1413, %v1603, 0
      %1610 = vmatpush.bf16.msra.mxu0 0
      %1611 = vmatpush.bf16.msra.mxu0 0
      %1612 = vmatpush.bf16.msra.mxu0 0
      %1613 = vmatpush.bf16.msra.mxu0 0
      %1614 = vmatpush.bf16.msra.mxu0 0
      %1615 = vmatpush.bf16.msra.mxu0 0
      %1616 = vmatpush.bf16.msra.mxu0 0
      %1617 = vmatpush.bf16.msra.mxu0 %v1608
      %1618 = vmatmul.bf16.gmra.mxu0 %v1605
      %v1619 = vpop.f32.mrf.mxu0
      %v1620 = vadd.f32 0.0, %v1619
      %v1621 = vpop.f32.mrf.mxu0
      %1622 = vdwg.mxu0
      %1623 = vrot.lane.b32.xlu0 %v1463, 112
      %v1624 = vpop.permute.xlu0 %1623
      %1625 = vst [vmem:[#allocation1] ss:$9 sm:$0xff] %v1208
      %s1626 = scalar_lea.vmem [#allocation1], 1
      %1627 = vst [vmem:[%s1626] ss:$9 sm:$0xff] %v1212
      %s1628 = scalar_lea.vmem [#allocation1], 2
      %1629 = vst [vmem:[%s1628] ss:$9 sm:$0xff] %v1216
      %s1630 = scalar_lea.vmem [#allocation1], 3
      %1631 = vst [vmem:[%s1630] ss:$9 sm:$0xff] %v1220
      %s1632 = scalar_lea.vmem [#allocation1], 4
      %1633 = vst [vmem:[%s1632] ss:$9 sm:$0xff] %v1223
      %v1634 = vld [vmem:[#allocation1] sm:$0xff]
      %1636 = vrot.lane.b32.xlu0 %v1634, 112
      %v1637 = vpop.permute.xlu0 %1636
      %v1639 = vsel %vm538, %v1624, 0
      %v1642 = vsel %vm538, %v1637, 0
      %1644 = vmatpush.bf16.xpose.msra.mxu0 0
      %1645 = vmatpush.bf16.xpose.msra.mxu0 0
      %1646 = vmatpush.bf16.xpose.msra.mxu0 0
      %1647 = vmatpush.bf16.xpose.msra.mxu0 0
      %1648 = vmatpush.bf16.xpose.msra.mxu0 0
      %1649 = vmatpush.bf16.xpose.msra.mxu0 0
      %1650 = vmatpush.bf16.xpose.msra.mxu0 0
      %1651 = vmatpush.bf16.xpose.msra.mxu0 %v1642
      %1652 = vmatmul.bf16.gmra.mxu0 %v1639
      %v1653 = vpop.f32.mrf.mxu0
      %v1654 = vadd.f32 0.0, %v1653
      %v1655 = vpop.f32.mrf.mxu0
      %1656 = vdwg.mxu0
      %1657 = vrot.lane.b32.xlu0 %v1500, 112
      %v1658 = vpop.permute.xlu0 %1657
      %1659 = vst [vmem:[#allocation1] ss:$9 sm:$0xff] %v1226
      %s1660 = scalar_lea.vmem [#allocation1], 1
      %1661 = vst [vmem:[%s1660] ss:$9 sm:$0xff] %v1229
      %s1662 = scalar_lea.vmem [#allocation1], 2
      %1663 = vst [vmem:[%s1662] ss:$9 sm:$0xff] %v1232
      %s1664 = scalar_lea.vmem [#allocation1], 3
      %1665 = vst [vmem:[%s1664] ss:$9 sm:$0xff] %v1235
      %s1666 = scalar_lea.vmem [#allocation1], 4
      %1667 = vst [vmem:[%s1666] ss:$9 sm:$0xff] %v1238
      %v1668 = vld [vmem:[#allocation1] sm:$0xff]
      %1670 = vrot.lane.b32.xlu0 %v1668, 112
      %v1671 = vpop.permute.xlu0 %1670
      %v1673 = vsel %vm538, %v1658, 0
      %v1676 = vsel %vm538, %v1671, 0
      %1678 = vmatpush.bf16.xpose.msra.mxu0 0
      %1679 = vmatpush.bf16.xpose.msra.mxu0 0
      %1680 = vmatpush.bf16.xpose.msra.mxu0 0
      %1681 = vmatpush.bf16.xpose.msra.mxu0 0
      %1682 = vmatpush.bf16.xpose.msra.mxu0 0
      %1683 = vmatpush.bf16.xpose.msra.mxu0 0
      %1684 = vmatpush.bf16.xpose.msra.mxu0 0
      %1685 = vmatpush.bf16.xpose.msra.mxu0 %v1676
      %1686 = vmatmul.bf16.gmra.mxu0 %v1673
      %v1687 = vpop.f32.mrf.mxu0
      %v1688 = vadd.f32 0.0, %v1687
      %v1689 = vpop.f32.mrf.mxu0
      %1690 = vdwg.mxu0
      %v1691 = vsel %vm1372, %v1654, -inf
      %1692 = vmax.xlane.f32.xlu0 %v1691
      %v1693 = vpop.xlane.xlu0 %1692
      %v1694 = vsel %vm1372, %v1688, -inf
      %1695 = vmax.xlane.f32.xlu0 %v1694
      %v1696 = vpop.xlane.xlu0 %1695
      %v1697 = vsub.f32 %v1654, %v1693
      %v1698 = vsub.f32 %v1688, %v1696
      %v1699 = vmul.f32 %v1697, 1.442695
      %v1700 = vpow.pop %v1699
      %v1701 = vmul.f32 %v1698, 1.442695
      %v1702 = vpow.pop %v1701
      %v1703 = vsel %vm1372, %v1700, 0.0
      %1704 = vadd.xlane.f32.xlu0 %v1703
      %v1705 = vpop.xlane.xlu0 %1704
      %v1706 = vsel %vm1372, %v1702, 0.0
      %1707 = vadd.xlane.f32.xlu0 %v1706
      %v1708 = vpop.xlane.xlu0 %1707
      %v1709 = vrcp.pop %v1705
      %v1710 = vrcp.pop %v1708
      %v1711 = vmul.f32 %v1700, %v1709
      %v1712 = vmul.f32 %v1702, %v1710
      %v1713 = vpack.c.bf16 %v1711, %v1711
      %v1714 = vpack.c.bf16 %v1712, %v1712
      %1715 = vst [vmem:[#allocation1] ss:$9 sm:$0xff] %v1281
      %s1716 = scalar_lea.vmem [#allocation1], 1
      %1717 = vst [vmem:[%s1716] ss:$9 sm:$0xff] %v1284
      %s1718 = scalar_lea.vmem [#allocation1], 2
      %1719 = vst [vmem:[%s1718] ss:$9 sm:$0xff] %v1287
      %s1720 = scalar_lea.vmem [#allocation1], 3
      %1721 = vst [vmem:[%s1720] ss:$9 sm:$0xff] %v1290
      %s1722 = scalar_lea.vmem [#allocation1], 4
      %1723 = vst [vmem:[%s1722] ss:$9 sm:$0xff] %v1293
      %v1724 = vld [vmem:[#allocation1] sm:$0xff]
      %1726 = vrot.lane.b32.xlu0 %v1724, 112
      %v1727 = vpop.permute.xlu0 %1726
      %v1729 = vsel %vm1372, %v1713, 0
      %v1732 = vsel %vm1413, %v1727, 0
      %1734 = vmatpush.bf16.msra.mxu0 0
      %1735 = vmatpush.bf16.msra.mxu0 0
      %1736 = vmatpush.bf16.msra.mxu0 0
      %1737 = vmatpush.bf16.msra.mxu0 0
      %1738 = vmatpush.bf16.msra.mxu0 0
      %1739 = vmatpush.bf16.msra.mxu0 0
      %1740 = vmatpush.bf16.msra.mxu0 0
      %1741 = vmatpush.bf16.msra.mxu0 %v1732
      %1742 = vmatmul.bf16.gmra.mxu0 %v1729
      %v1743 = vpop.f32.mrf.mxu0
      %v1744 = vadd.f32 0.0, %v1743
      %v1745 = vpop.f32.mrf.mxu0
      %1746 = vdwg.mxu0
      %1747 = vst [vmem:[#allocation1] ss:$9 sm:$0xff] %v1296
      %s1748 = scalar_lea.vmem [#allocation1], 1
      %1749 = vst [vmem:[%s1748] ss:$9 sm:$0xff] %v1299
      %s1750 = scalar_lea.vmem [#allocation1], 2
      %1751 = vst [vmem:[%s1750] ss:$9 sm:$0xff] %v1302
      %s1752 = scalar_lea.vmem [#allocation1], 3
      %1753 = vst [vmem:[%s1752] ss:$9 sm:$0xff] %v1305
      %s1754 = scalar_lea.vmem [#allocation1], 4
      %1755 = vst [vmem:[%s1754] ss:$9 sm:$0xff] %v1308
      %v1756 = vld [vmem:[#allocation1] sm:$0xff]
      %1758 = vrot.lane.b32.xlu0 %v1756, 112
      %v1759 = vpop.permute.xlu0 %1758
      %v1761 = vsel %vm1372, %v1714, 0
      %v1764 = vsel %vm1413, %v1759, 0
      %1766 = vmatpush.bf16.msra.mxu0 0
      %1767 = vmatpush.bf16.msra.mxu0 0
      %1768 = vmatpush.bf16.msra.mxu0 0
      %1769 = vmatpush.bf16.msra.mxu0 0
      %1770 = vmatpush.bf16.msra.mxu0 0
      %1771 = vmatpush.bf16.msra.mxu0 0
      %1772 = vmatpush.bf16.msra.mxu0 0
      %1773 = vmatpush.bf16.msra.mxu0 %v1764
      %1774 = vmatmul.bf16.gmra.mxu0 %v1761
      %v1775 = vpop.f32.mrf.mxu0
      %v1776 = vadd.f32 0.0, %v1775
      %v1777 = vpop.f32.mrf.mxu0
      %1778 = vdwg.mxu0
      %1779 = vrot.lane.b32.xlu0 %v1463, 104
      %v1780 = vpop.permute.xlu0 %1779
      %1781 = vst [vmem:[#allocation1] ss:$9 sm:$0xff] %v1208
      %s1782 = scalar_lea.vmem [#allocation1], 1
      %1783 = vst [vmem:[%s1782] ss:$9 sm:$0xff] %v1212
      %s1784 = scalar_lea.vmem [#allocation1], 2
      %1785 = vst [vmem:[%s1784] ss:$9 sm:$0xff] %v1216
      %s1786 = scalar_lea.vmem [#allocation1], 3
      %1787 = vst [vmem:[%s1786] ss:$9 sm:$0xff] %v1220
      %s1788 = scalar_lea.vmem [#allocation1], 4
      %1789 = vst [vmem:[%s1788] ss:$9 sm:$0xff] %v1223
      %v1790 = vld [vmem:[#allocation1] sm:$0xff]
      %1792 = vrot.lane.b32.xlu0 %v1790, 104
      %v1793 = vpop.permute.xlu0 %1792
      %v1795 = vsel %vm538, %v1780, 0
      %v1798 = vsel %vm538, %v1793, 0
      %1800 = vmatpush.bf16.xpose.msra.mxu0 0
      %1801 = vmatpush.bf16.xpose.msra.mxu0 0
      %1802 = vmatpush.bf16.xpose.msra.mxu0 0
      %1803 = vmatpush.bf16.xpose.msra.mxu0 0
      %1804 = vmatpush.bf16.xpose.msra.mxu0 0
      %1805 = vmatpush.bf16.xpose.msra.mxu0 0
      %1806 = vmatpush.bf16.xpose.msra.mxu0 0
      %1807 = vmatpush.bf16.xpose.msra.mxu0 %v1798
      %1808 = vmatmul.bf16.gmra.mxu0 %v1795
      %v1809 = vpop.f32.mrf.mxu0
      %v1810 = vadd.f32 0.0, %v1809
      %v1811 = vpop.f32.mrf.mxu0
      %1812 = vdwg.mxu0
      %1813 = vrot.lane.b32.xlu0 %v1500, 104
      %v1814 = vpop.permute.xlu0 %1813
      %1815 = vst [vmem:[#allocation1] ss:$9 sm:$0xff] %v1226
      %s1816 = scalar_lea.vmem [#allocation1], 1
      %1817 = vst [vmem:[%s1816] ss:$9 sm:$0xff] %v1229
      %s1818 = scalar_lea.vmem [#allocation1], 2
      %1819 = vst [vmem:[%s1818] ss:$9 sm:$0xff] %v1232
      %s1820 = scalar_lea.vmem [#allocation1], 3
      %1821 = vst [vmem:[%s1820] ss:$9 sm:$0xff] %v1235
      %s1822 = scalar_lea.vmem [#allocation1], 4
      %1823 = vst [vmem:[%s1822] ss:$9 sm:$0xff] %v1238
      %v1824 = vld [vmem:[#allocation1] sm:$0xff]
      %1826 = vrot.lane.b32.xlu0 %v1824, 104
      %v1827 = vpop.permute.xlu0 %1826
      %v1829 = vsel %vm538, %v1814, 0
      %v1832 = vsel %vm538, %v1827, 0
      %1834 = vmatpush.bf16.xpose.msra.mxu0 0
      %1835 = vmatpush.bf16.xpose.msra.mxu0 0
      %1836 = vmatpush.bf16.xpose.msra.mxu0 0
      %1837 = vmatpush.bf16.xpose.msra.mxu0 0
      %1838 = vmatpush.bf16.xpose.msra.mxu0 0
      %1839 = vmatpush.bf16.xpose.msra.mxu0 0
      %1840 = vmatpush.bf16.xpose.msra.mxu0 0
      %1841 = vmatpush.bf16.xpose.msra.mxu0 %v1832
      %1842 = vmatmul.bf16.gmra.mxu0 %v1829
      %v1843 = vpop.f32.mrf.mxu0
      %v1844 = vadd.f32 0.0, %v1843
      %v1845 = vpop.f32.mrf.mxu0
      %1846 = vdwg.mxu0
      %v1847 = vsel %vm1372, %v1810, -inf
      %1848 = vmax.xlane.f32.xlu0 %v1847
      %v1849 = vpop.xlane.xlu0 %1848
      %v1850 = vsel %vm1372, %v1844, -inf
      %1851 = vmax.xlane.f32.xlu0 %v1850
      %v1852 = vpop.xlane.xlu0 %1851
      %v1853 = vsub.f32 %v1810, %v1849
      %v1854 = vsub.f32 %v1844, %v1852
      %v1855 = vmul.f32 %v1853, 1.442695
      %v1856 = vpow.pop %v1855
      %v1857 = vmul.f32 %v1854, 1.442695
      %v1858 = vpow.pop %v1857
      %v1859 = vsel %vm1372, %v1856, 0.0
      %1860 = vadd.xlane.f32.xlu0 %v1859
      %v1861 = vpop.xlane.xlu0 %1860
      %v1862 = vsel %vm1372, %v1858, 0.0
      %1863 = vadd.xlane.f32.xlu0 %v1862
      %v1864 = vpop.xlane.xlu0 %1863
      %v1865 = vrcp.pop %v1861
      %v1866 = vrcp.pop %v1864
      %v1867 = vmul.f32 %v1856, %v1865
      %v1868 = vmul.f32 %v1858, %v1866
      %v1869 = vpack.c.bf16 %v1867, %v1867
      %v1870 = vpack.c.bf16 %v1868, %v1868
      %1871 = vst [vmem:[#allocation1] ss:$9 sm:$0xff] %v1281
      %s1872 = scalar_lea.vmem [#allocation1], 1
      %1873 = vst [vmem:[%s1872] ss:$9 sm:$0xff] %v1284
      %s1874 = scalar_lea.vmem [#allocation1], 2
      %1875 = vst [vmem:[%s1874] ss:$9 sm:$0xff] %v1287
      %s1876 = scalar_lea.vmem [#allocation1], 3
      %1877 = vst [vmem:[%s1876] ss:$9 sm:$0xff] %v1290
      %s1878 = scalar_lea.vmem [#allocation1], 4
      %1879 = vst [vmem:[%s1878] ss:$9 sm:$0xff] %v1293
      %v1880 = vld [vmem:[#allocation1] sm:$0xff]
      %1882 = vrot.lane.b32.xlu0 %v1880, 104
      %v1883 = vpop.permute.xlu0 %1882
      %v1885 = vsel %vm1372, %v1869, 0
      %v1888 = vsel %vm1413, %v1883, 0
      %1890 = vmatpush.bf16.msra.mxu0 0
      %1891 = vmatpush.bf16.msra.mxu0 0
      %1892 = vmatpush.bf16.msra.mxu0 0
      %1893 = vmatpush.bf16.msra.mxu0 0
      %1894 = vmatpush.bf16.msra.mxu0 0
      %1895 = vmatpush.bf16.msra.mxu0 0
      %1896 = vmatpush.bf16.msra.mxu0 0
      %1897 = vmatpush.bf16.msra.mxu0 %v1888
      %1898 = vmatmul.bf16.gmra.mxu0 %v1885
      %v1899 = vpop.f32.mrf.mxu0
      %v1900 = vadd.f32 0.0, %v1899
      %v1901 = vpop.f32.mrf.mxu0
      %1902 = vdwg.mxu0
      %1903 = vst [vmem:[#allocation1] ss:$9 sm:$0xff] %v1296
      %s1904 = scalar_lea.vmem [#allocation1], 1
      %1905 = vst [vmem:[%s1904] ss:$9 sm:$0xff] %v1299
      %s1906 = scalar_lea.vmem [#allocation1], 2
      %1907 = vst [vmem:[%s1906] ss:$9 sm:$0xff] %v1302
      %s1908 = scalar_lea.vmem [#allocation1], 3
      %1909 = vst [vmem:[%s1908] ss:$9 sm:$0xff] %v1305
      %s1910 = scalar_lea.vmem [#allocation1], 4
      %1911 = vst [vmem:[%s1910] ss:$9 sm:$0xff] %v1308
      %v1912 = vld [vmem:[#allocation1] sm:$0xff]
      %1914 = vrot.lane.b32.xlu0 %v1912, 104
      %v1915 = vpop.permute.xlu0 %1914
      %v1917 = vsel %vm1372, %v1870, 0
      %v1920 = vsel %vm1413, %v1915, 0
      %1922 = vmatpush.bf16.msra.mxu0 0
      %1923 = vmatpush.bf16.msra.mxu0 0
      %1924 = vmatpush.bf16.msra.mxu0 0
      %1925 = vmatpush.bf16.msra.mxu0 0
      %1926 = vmatpush.bf16.msra.mxu0 0
      %1927 = vmatpush.bf16.msra.mxu0 0
      %1928 = vmatpush.bf16.msra.mxu0 0
      %1929 = vmatpush.bf16.msra.mxu0 %v1920
      %1930 = vmatmul.bf16.gmra.mxu0 %v1917
      %v1931 = vpop.f32.mrf.mxu0
      %v1932 = vadd.f32 0.0, %v1931
      %v1933 = vpop.f32.mrf.mxu0
      %1934 = vdwg.mxu0
      %1937 = vrot.lane.b32.xlu0 %v1588, 8
      %v1938 = vpop.permute.xlu0 %1937
      %1939 = vrot.lane.b32.xlu0 %v1620, 8
      %v1940 = vpop.permute.xlu0 %1939
      %1945 = vrot.lane.b32.xlu0 %v1744, 16
      %v1946 = vpop.permute.xlu0 %1945
      %1947 = vrot.lane.b32.xlu0 %v1776, 16
      %v1948 = vpop.permute.xlu0 %1947
      %1953 = vrot.lane.b32.xlu0 %v1900, 24
      %v1954 = vpop.permute.xlu0 %1953
      %1955 = vrot.lane.b32.xlu0 %v1932, 24
      %v1956 = vpop.permute.xlu0 %1955
      %v1959 = vsel %vm538, %v1426, %v1938
      %v1960 = vsel %vm538, %v1458, %v1940
      %v1961 = vsel %vm1020, %v1959, %v1946
      %v1962 = vsel %vm1020, %v1960, %v1948
      %v1963 = vsel %vm1023, %v1961, %v1954
      %v1964 = vsel %vm1023, %v1962, %v1956
      %v1965 = vpack.c.bf16 %v1964, %v1963
      %v1966 = vperm.slane %v442, 7
      %v1971 = vunpack.c.l.b16 %v438
      %v1972 = vunpack.c.l.b16 %v439
      %v1973 = vunpack.c.l.b16 %v440
      %v1974 = vunpack.c.l.b16 %v441
      %v1975 = vpack.c.b16 %v1972, %v1971
      %v1976 = vpack.c.b16 %v1974, %v1973
      %v1980 = vsel %vm458, %v1965, 0
      %1982 = vmatpush.bf16.msra.mxu0 0
      %1983 = vmatpush.bf16.msra.mxu0 0
      %1984 = vmatpush.bf16.msra.mxu0 0
      %1985 = vmatpush.bf16.msra.mxu0 0
      %1986 = vmatpush.bf16.msra.mxu0 0
      %1987 = vmatpush.bf16.msra.mxu0 0
      %1988 = vmatpush.bf16.msra.mxu0 %v1976
      %1989 = vmatpush.bf16.msra.mxu0 %v1975
      %1990 = vmatmul.bf16.gmra.mxu0 %v1980
      %v1991 = vpop.f32.mrf.mxu0
      %v1992 = vadd.f32 %v1966, %v1991
      %v1993 = vpop.f32.mrf.mxu0
      %v1994 = vadd.f32 %v1966, %v1993
      %1995 = vdwg.mxu0
      %v1996 = vadd.f32 %v1114, %v1992
      %v1997 = vadd.f32 %v1115, %v1994
      %v1998 = vsel %vm458, %v1996, 0.0
      %1999 = vadd.xlane.f32.xlu0 %v1998
      %v2000 = vpop.xlane.xlu0 %1999
      %v2001 = vsel %vm458, %v1997, 0.0
      %2002 = vadd.xlane.f32.xlu0 %v2001
      %v2003 = vpop.xlane.xlu0 %2002
      %v2004 = vmul.f32 %v2000, %v1071
      %v2005 = vmul.f32 %v2003, %v1071
      %v2006 = vsub.f32 %v1996, %v2004
      %v2007 = vsub.f32 %v1997, %v2005
      %v2008 = vmul.f32 %v2006, %v2006
      %v2009 = vmul.f32 %v2007, %v2007
      %v2010 = vsel %vm458, %v2008, 0.0
      %2011 = vadd.xlane.f32.xlu0 %v2010
      %v2012 = vpop.xlane.xlu0 %2011
      %v2013 = vsel %vm458, %v2009, 0.0
      %2014 = vadd.xlane.f32.xlu0 %v2013
      %v2015 = vpop.xlane.xlu0 %2014
      %v2016 = vmul.f32 %v2012, %v1071
      %v2017 = vmul.f32 %v2015, %v1071
      %v2018 = vadd.f32 %v2016, 1e-05
      %v2019 = vadd.f32 %v2017, 1e-05
      %v2020 = vrsqrt.pop %v2018
      %v2021 = vmul.f32 %v2020, %v2018
      %v2022 = vmul.f32 %v2021, %v2020
      %v2023 = vmul.f32 0.5, %v2022
      %v2024 = vsub.f32 1.5, %v2023
      %v2025 = vmul.f32 %v2020, %v2024
      %vm2026 = vweird.f32 %v2018
      %vm2027 = vweird.f32 %v2020
      %vm2028 = vmor %vm2026, %vm2027
      %v2029 = vsel %vm2028, %v2020, %v2025
      %v2030 = vrsqrt.pop %v2019
      %v2031 = vmul.f32 %v2030, %v2019
      %v2032 = vmul.f32 %v2031, %v2030
      %v2033 = vmul.f32 0.5, %v2032
      %v2034 = vsub.f32 1.5, %v2033
      %v2035 = vmul.f32 %v2030, %v2034
      %vm2036 = vweird.f32 %v2019
      %vm2037 = vweird.f32 %v2030
      %vm2038 = vmor %vm2036, %vm2037
      %v2039 = vsel %vm2038, %v2030, %v2035
      %v2040 = vmul.f32 %v2006, %v2029
      %v2041 = vmul.f32 %v2007, %v2039
      %v2042 = vperm.slane %v443, 2
      %v2043 = vmul.f32 %v2040, %v2042
      %v2044 = vmul.f32 %v2041, %v2042
      %v2045 = vperm.slane %v443, 3
      %v2046 = vadd.f32 %v2043, %v2045
      %v2047 = vadd.f32 %v2044, %v2045
      %v2048 = vpack.c.bf16 %v2047, %v2046
      %v2049 = vld [vmem:[%s385] sm:$0xff]
      %v2050 = vld [vmem:[%s385 + $0x8] sm:$0xff]
      %v2051 = vld [vmem:[%s385 + $0x10] sm:$0xff]
      %v2052 = vld [vmem:[%s385 + $0x18] sm:$0xff]
      %v2053 = vld [vmem:[%s385 + $0x20] sm:$0xff]
      %v2054 = vld [vmem:[%s385 + $0x28] sm:$0xff]
      %v2055 = vld [vmem:[%s385 + $0x30] sm:$0xff]
      %v2056 = vld [vmem:[%s385 + $0x38] sm:$0xff]
      %v2057 = vld [vmem:[%s385 + $0x40] sm:$0xff]
      %v2058 = vld [vmem:[%s385 + $0x48] sm:$0xff]
      %v2059 = vld [vmem:[%s385 + $0x50] sm:$0xff]
      %v2060 = vld [vmem:[%s385 + $0x58] sm:$0xff]
      %v2061 = vld [vmem:[%s385 + $0x60] sm:$0xff]
      %v2062 = vld [vmem:[%s385 + $0x68] sm:$0xff]
      %v2063 = vld [vmem:[%s385 + $0x70] sm:$0xff]
      %v2064 = vld [vmem:[%s385 + $0x78] sm:$0xff]
      %v2065 = vld [vmem:[%s385 + $0x80] sm:$0xff]
      %v2066 = vld [vmem:[%s385 + $0x88] sm:$0xff]
      %v2067 = vld [vmem:[%s385 + $0x90] sm:$0xff]
      %v2068 = vld [vmem:[%s385 + $0x98] sm:$0xff]
      %v2069 = vld [vmem:[%s385 + $0xa0] sm:$0xff]
      %v2070 = vld [vmem:[%s385 + $0xa8] sm:$0xff]
      %v2071 = vld [vmem:[%s385 + $0xb0] sm:$0xff]
      %v2072 = vld [vmem:[%s385 + $0xb8] sm:$0xff]
      %v2073 = vld [vmem:[%s385 + $0xc0] sm:$0xff]
      %v2074 = vld [vmem:[%s385 + $0xc8] sm:$0xff]
      %v2075 = vld [vmem:[%s385 + $0xd0] sm:$0xff]
      %v2076 = vld [vmem:[%s385 + $0xd8] sm:$0xff]
      %v2077 = vld [vmem:[%s385 + $0xe0] sm:$0xff]
      %v2078 = vld [vmem:[%s385 + $0xe8] sm:$0xff]
      %v2079 = vld [vmem:[%s385 + $0xf0] sm:$0xff]
      %v2080 = vld [vmem:[%s385 + $0xf8] sm:$0xff]
      %v2081 = vld [vmem:[%s389] sm:$0xff]
      %v2082 = vld [vmem:[%s389 + $0x8] sm:$0xff]
      %v2085 = vperm.slane %v2081, 0
      %v2086 = vperm.slane %v2081, 1
      %v2087 = vperm.slane %v2081, 2
      %v2088 = vperm.slane %v2081, 3
      %v2089 = vperm.slane %v2081, 4
      %v2090 = vperm.slane %v2081, 5
      %v2091 = vperm.slane %v2081, 6
      %v2092 = vperm.slane %v2081, 7
      %v2093 = vperm.slane %v2082, 0
      %v2094 = vperm.slane %v2082, 1
      %v2095 = vperm.slane %v2082, 2
      %v2096 = vperm.slane %v2082, 3
      %v2097 = vperm.slane %v2082, 4
      %v2098 = vperm.slane %v2082, 5
      %v2099 = vperm.slane %v2082, 6
      %v2100 = vperm.slane %v2082, 7
      %v2149 = vunpack.c.l.b16 %v2049
      %v2150 = vunpack.c.h.b16 %v2049
      %v2151 = vunpack.c.l.b16 %v2050
      %v2152 = vunpack.c.h.b16 %v2050
      %v2153 = vunpack.c.l.b16 %v2051
      %v2154 = vunpack.c.h.b16 %v2051
      %v2155 = vunpack.c.l.b16 %v2052
      %v2156 = vunpack.c.h.b16 %v2052
      %v2157 = vunpack.c.l.b16 %v2053
      %v2158 = vunpack.c.h.b16 %v2053
      %v2159 = vunpack.c.l.b16 %v2054
      %v2160 = vunpack.c.h.b16 %v2054
      %v2161 = vunpack.c.l.b16 %v2055
      %v2162 = vunpack.c.h.b16 %v2055
      %v2163 = vunpack.c.l.b16 %v2056
      %v2164 = vunpack.c.h.b16 %v2056
      %v2165 = vunpack.c.l.b16 %v2057
      %v2166 = vunpack.c.h.b16 %v2057
      %v2167 = vunpack.c.l.b16 %v2058
      %v2168 = vunpack.c.h.b16 %v2058
      %v2169 = vunpack.c.l.b16 %v2059
      %v2170 = vunpack.c.h.b16 %v2059
      %v2171 = vunpack.c.l.b16 %v2060
      %v2172 = vunpack.c.h.b16 %v2060
      %v2173 = vunpack.c.l.b16 %v2061
      %v2174 = vunpack.c.h.b16 %v2061
      %v2175 = vunpack.c.l.b16 %v2062
      %v2176 = vunpack.c.h.b16 %v2062
      %v2177 = vunpack.c.l.b16 %v2063
      %v2178 = vunpack.c.h.b16 %v2063
      %v2179 = vunpack.c.l.b16 %v2064
      %v2180 = vunpack.c.h.b16 %v2064
      %v2181 = vunpack.c.l.b16 %v2065
      %v2182 = vunpack.c.h.b16 %v2065
      %v2183 = vunpack.c.l.b16 %v2066
      %v2184 = vunpack.c.h.b16 %v2066
      %v2185 = vunpack.c.l.b16 %v2067
      %v2186 = vunpack.c.h.b16 %v2067
      %v2187 = vunpack.c.l.b16 %v2068
      %v2188 = vunpack.c.h.b16 %v2068
      %v2189 = vunpack.c.l.b16 %v2069
      %v2190 = vunpack.c.h.b16 %v2069
      %v2191 = vunpack.c.l.b16 %v2070
      %v2192 = vunpack.c.h.b16 %v2070
      %v2193 = vunpack.c.l.b16 %v2071
      %v2194 = vunpack.c.h.b16 %v2071
      %v2195 = vunpack.c.l.b16 %v2072
      %v2196 = vunpack.c.h.b16 %v2072
      %v2197 = vunpack.c.l.b16 %v2073
      %v2198 = vunpack.c.h.b16 %v2073
      %v2199 = vunpack.c.l.b16 %v2074
      %v2200 = vunpack.c.h.b16 %v2074
      %v2201 = vunpack.c.l.b16 %v2075
      %v2202 = vunpack.c.h.b16 %v2075
      %v2203 = vunpack.c.l.b16 %v2076
      %v2204 = vunpack.c.h.b16 %v2076
      %v2205 = vunpack.c.l.b16 %v2077
      %v2206 = vunpack.c.h.b16 %v2077
      %v2207 = vunpack.c.l.b16 %v2078
      %v2208 = vunpack.c.h.b16 %v2078
      %v2209 = vunpack.c.l.b16 %v2079
      %v2210 = vunpack.c.h.b16 %v2079
      %v2211 = vunpack.c.l.b16 %v2080
      %v2212 = vunpack.c.h.b16 %v2080
      %v2213 = vpack.c.b16 %v2165, %v2149
      %v2214 = vpack.c.b16 %v2166, %v2150
      %v2215 = vpack.c.b16 %v2167, %v2151
      %v2216 = vpack.c.b16 %v2168, %v2152
      %v2217 = vpack.c.b16 %v2169, %v2153
      %v2218 = vpack.c.b16 %v2170, %v2154
      %v2219 = vpack.c.b16 %v2171, %v2155
      %v2220 = vpack.c.b16 %v2172, %v2156
      %v2221 = vpack.c.b16 %v2173, %v2157
      %v2222 = vpack.c.b16 %v2174, %v2158
      %v2223 = vpack.c.b16 %v2175, %v2159
      %v2224 = vpack.c.b16 %v2176, %v2160
      %v2225 = vpack.c.b16 %v2177, %v2161
      %v2226 = vpack.c.b16 %v2178, %v2162
      %v2227 = vpack.c.b16 %v2179, %v2163
      %v2228 = vpack.c.b16 %v2180, %v2164
      %v2229 = vpack.c.b16 %v2197, %v2181
      %v2230 = vpack.c.b16 %v2198, %v2182
      %v2231 = vpack.c.b16 %v2199, %v2183
      %v2232 = vpack.c.b16 %v2200, %v2184
      %v2233 = vpack.c.b16 %v2201, %v2185
      %v2234 = vpack.c.b16 %v2202, %v2186
      %v2235 = vpack.c.b16 %v2203, %v2187
      %v2236 = vpack.c.b16 %v2204, %v2188
      %v2237 = vpack.c.b16 %v2205, %v2189
      %v2238 = vpack.c.b16 %v2206, %v2190
      %v2239 = vpack.c.b16 %v2207, %v2191
      %v2240 = vpack.c.b16 %v2208, %v2192
      %v2241 = vpack.c.b16 %v2209, %v2193
      %v2242 = vpack.c.b16 %v2210, %v2194
      %v2243 = vpack.c.b16 %v2211, %v2195
      %v2244 = vpack.c.b16 %v2212, %v2196
      %v2278 = vsel %vm458, %v2048, 0
      %2280 = vmatpush.bf16.msra.mxu0 0
      %2281 = vmatpush.bf16.msra.mxu0 0
      %2282 = vmatpush.bf16.msra.mxu0 0
      %2283 = vmatpush.bf16.msra.mxu0 0
      %2284 = vmatpush.bf16.msra.mxu0 0
      %2285 = vmatpush.bf16.msra.mxu0 0
      %2286 = vmatpush.bf16.msra.mxu0 %v2229
      %2287 = vmatpush.bf16.msra.mxu0 %v2213
      %2288 = vmatmul.bf16.gmra.mxu0 %v2278
      %v2289 = vpop.f32.mrf.mxu0
      %v2290 = vadd.f32 %v2085, %v2289
      %v2291 = vpop.f32.mrf.mxu0
      %v2292 = vadd.f32 %v2085, %v2291
      %2293 = vdwg.mxu0
      %2294 = vmatpush.bf16.msra.mxu0 0
      %2295 = vmatpush.bf16.msra.mxu0 0
      %2296 = vmatpush.bf16.msra.mxu0 0
      %2297 = vmatpush.bf16.msra.mxu0 0
      %2298 = vmatpush.bf16.msra.mxu0 0
      %2299 = vmatpush.bf16.msra.mxu0 0
      %2300 = vmatpush.bf16.msra.mxu0 %v2230
      %2301 = vmatpush.bf16.msra.mxu0 %v2214
      %2302 = vmatmul.bf16.gmra.mxu0 %v2278
      %v2303 = vpop.f32.mrf.mxu0
      %v2304 = vadd.f32 %v2086, %v2303
      %v2305 = vpop.f32.mrf.mxu0
      %v2306 = vadd.f32 %v2086, %v2305
      %2307 = vdwg.mxu0
      %2308 = vmatpush.bf16.msra.mxu0 0
      %2309 = vmatpush.bf16.msra.mxu0 0
      %2310 = vmatpush.bf16.msra.mxu0 0
      %2311 = vmatpush.bf16.msra.mxu0 0
      %2312 = vmatpush.bf16.msra.mxu0 0
      %2313 = vmatpush.bf16.msra.mxu0 0
      %2314 = vmatpush.bf16.msra.mxu0 %v2231
      %2315 = vmatpush.bf16.msra.mxu0 %v2215
      %2316 = vmatmul.bf16.gmra.mxu0 %v2278
      %v2317 = vpop.f32.mrf.mxu0
      %v2318 = vadd.f32 %v2087, %v2317
      %v2319 = vpop.f32.mrf.mxu0
      %v2320 = vadd.f32 %v2087, %v2319
      %2321 = vdwg.mxu0
      %2322 = vmatpush.bf16.msra.mxu0 0
      %2323 = vmatpush.bf16.msra.mxu0 0
      %2324 = vmatpush.bf16.msra.mxu0 0
      %2325 = vmatpush.bf16.msra.mxu0 0
      %2326 = vmatpush.bf16.msra.mxu0 0
      %2327 = vmatpush.bf16.msra.mxu0 0
      %2328 = vmatpush.bf16.msra.mxu0 %v2232
      %2329 = vmatpush.bf16.msra.mxu0 %v2216
      %2330 = vmatmul.bf16.gmra.mxu0 %v2278
      %v2331 = vpop.f32.mrf.mxu0
      %v2332 = vadd.f32 %v2088, %v2331
      %v2333 = vpop.f32.mrf.mxu0
      %v2334 = vadd.f32 %v2088, %v2333
      %2335 = vdwg.mxu0
      %2336 = vmatpush.bf16.msra.mxu0 0
      %2337 = vmatpush.bf16.msra.mxu0 0
      %2338 = vmatpush.bf16.msra.mxu0 0
      %2339 = vmatpush.bf16.msra.mxu0 0
      %2340 = vmatpush.bf16.msra.mxu0 0
      %2341 = vmatpush.bf16.msra.mxu0 0
      %2342 = vmatpush.bf16.msra.mxu0 %v2233
      %2343 = vmatpush.bf16.msra.mxu0 %v2217
      %2344 = vmatmul.bf16.gmra.mxu0 %v2278
      %v2345 = vpop.f32.mrf.mxu0
      %v2346 = vadd.f32 %v2089, %v2345
      %v2347 = vpop.f32.mrf.mxu0
      %v2348 = vadd.f32 %v2089, %v2347
      %2349 = vdwg.mxu0
      %2350 = vmatpush.bf16.msra.mxu0 0
      %2351 = vmatpush.bf16.msra.mxu0 0
      %2352 = vmatpush.bf16.msra.mxu0 0
      %2353 = vmatpush.bf16.msra.mxu0 0
      %2354 = vmatpush.bf16.msra.mxu0 0
      %2355 = vmatpush.bf16.msra.mxu0 0
      %2356 = vmatpush.bf16.msra.mxu0 %v2234
      %2357 = vmatpush.bf16.msra.mxu0 %v2218
      %2358 = vmatmul.bf16.gmra.mxu0 %v2278
      %v2359 = vpop.f32.mrf.mxu0
      %v2360 = vadd.f32 %v2090, %v2359
      %v2361 = vpop.f32.mrf.mxu0
      %v2362 = vadd.f32 %v2090, %v2361
      %2363 = vdwg.mxu0
      %2364 = vmatpush.bf16.msra.mxu0 0
      %2365 = vmatpush.bf16.msra.mxu0 0
      %2366 = vmatpush.bf16.msra.mxu0 0
      %2367 = vmatpush.bf16.msra.mxu0 0
      %2368 = vmatpush.bf16.msra.mxu0 0
      %2369 = vmatpush.bf16.msra.mxu0 0
      %2370 = vmatpush.bf16.msra.mxu0 %v2235
      %2371 = vmatpush.bf16.msra.mxu0 %v2219
      %2372 = vmatmul.bf16.gmra.mxu0 %v2278
      %v2373 = vpop.f32.mrf.mxu0
      %v2374 = vadd.f32 %v2091, %v2373
      %v2375 = vpop.f32.mrf.mxu0
      %v2376 = vadd.f32 %v2091, %v2375
      %2377 = vdwg.mxu0
      %2378 = vmatpush.bf16.msra.mxu0 0
      %2379 = vmatpush.bf16.msra.mxu0 0
      %2380 = vmatpush.bf16.msra.mxu0 0
      %2381 = vmatpush.bf16.msra.mxu0 0
      %2382 = vmatpush.bf16.msra.mxu0 0
      %2383 = vmatpush.bf16.msra.mxu0 0
      %2384 = vmatpush.bf16.msra.mxu0 %v2236
      %2385 = vmatpush.bf16.msra.mxu0 %v2220
      %2386 = vmatmul.bf16.gmra.mxu0 %v2278
      %v2387 = vpop.f32.mrf.mxu0
      %v2388 = vadd.f32 %v2092, %v2387
      %v2389 = vpop.f32.mrf.mxu0
      %v2390 = vadd.f32 %v2092, %v2389
      %2391 = vdwg.mxu0
      %2392 = vmatpush.bf16.msra.mxu0 0
      %2393 = vmatpush.bf16.msra.mxu0 0
      %2394 = vmatpush.bf16.msra.mxu0 0
      %2395 = vmatpush.bf16.msra.mxu0 0
      %2396 = vmatpush.bf16.msra.mxu0 0
      %2397 = vmatpush.bf16.msra.mxu0 0
      %2398 = vmatpush.bf16.msra.mxu0 %v2237
      %2399 = vmatpush.bf16.msra.mxu0 %v2221
      %2400 = vmatmul.bf16.gmra.mxu0 %v2278
      %v2401 = vpop.f32.mrf.mxu0
      %v2402 = vadd.f32 %v2093, %v2401
      %v2403 = vpop.f32.mrf.mxu0
      %v2404 = vadd.f32 %v2093, %v2403
      %2405 = vdwg.mxu0
      %2406 = vmatpush.bf16.msra.mxu0 0
      %2407 = vmatpush.bf16.msra.mxu0 0
      %2408 = vmatpush.bf16.msra.mxu0 0
      %2409 = vmatpush.bf16.msra.mxu0 0
      %2410 = vmatpush.bf16.msra.mxu0 0
      %2411 = vmatpush.bf16.msra.mxu0 0
      %2412 = vmatpush.bf16.msra.mxu0 %v2238
      %2413 = vmatpush.bf16.msra.mxu0 %v2222
      %2414 = vmatmul.bf16.gmra.mxu0 %v2278
      %v2415 = vpop.f32.mrf.mxu0
      %v2416 = vadd.f32 %v2094, %v2415
      %v2417 = vpop.f32.mrf.mxu0
      %v2418 = vadd.f32 %v2094, %v2417
      %2419 = vdwg.mxu0
      %2420 = vmatpush.bf16.msra.mxu0 0
      %2421 = vmatpush.bf16.msra.mxu0 0
      %2422 = vmatpush.bf16.msra.mxu0 0
      %2423 = vmatpush.bf16.msra.mxu0 0
      %2424 = vmatpush.bf16.msra.mxu0 0
      %2425 = vmatpush.bf16.msra.mxu0 0
      %2426 = vmatpush.bf16.msra.mxu0 %v2239
      %2427 = vmatpush.bf16.msra.mxu0 %v2223
      %2428 = vmatmul.bf16.gmra.mxu0 %v2278
      %v2429 = vpop.f32.mrf.mxu0
      %v2430 = vadd.f32 %v2095, %v2429
      %v2431 = vpop.f32.mrf.mxu0
      %v2432 = vadd.f32 %v2095, %v2431
      %2433 = vdwg.mxu0
      %2434 = vmatpush.bf16.msra.mxu0 0
      %2435 = vmatpush.bf16.msra.mxu0 0
      %2436 = vmatpush.bf16.msra.mxu0 0
      %2437 = vmatpush.bf16.msra.mxu0 0
      %2438 = vmatpush.bf16.msra.mxu0 0
      %2439 = vmatpush.bf16.msra.mxu0 0
      %2440 = vmatpush.bf16.msra.mxu0 %v2240
      %2441 = vmatpush.bf16.msra.mxu0 %v2224
      %2442 = vmatmul.bf16.gmra.mxu0 %v2278
      %v2443 = vpop.f32.mrf.mxu0
      %v2444 = vadd.f32 %v2096, %v2443
      %v2445 = vpop.f32.mrf.mxu0
      %v2446 = vadd.f32 %v2096, %v2445
      %2447 = vdwg.mxu0
      %2448 = vmatpush.bf16.msra.mxu0 0
      %2449 = vmatpush.bf16.msra.mxu0 0
      %2450 = vmatpush.bf16.msra.mxu0 0
      %2451 = vmatpush.bf16.msra.mxu0 0
      %2452 = vmatpush.bf16.msra.mxu0 0
      %2453 = vmatpush.bf16.msra.mxu0 0
      %2454 = vmatpush.bf16.msra.mxu0 %v2241
      %2455 = vmatpush.bf16.msra.mxu0 %v2225
      %2456 = vmatmul.bf16.gmra.mxu0 %v2278
      %v2457 = vpop.f32.mrf.mxu0
      %v2458 = vadd.f32 %v2097, %v2457
      %v2459 = vpop.f32.mrf.mxu0
      %v2460 = vadd.f32 %v2097, %v2459
      %2461 = vdwg.mxu0
      %2462 = vmatpush.bf16.msra.mxu0 0
      %2463 = vmatpush.bf16.msra.mxu0 0
      %2464 = vmatpush.bf16.msra.mxu0 0
      %2465 = vmatpush.bf16.msra.mxu0 0
      %2466 = vmatpush.bf16.msra.mxu0 0
      %2467 = vmatpush.bf16.msra.mxu0 0
      %2468 = vmatpush.bf16.msra.mxu0 %v2242
      %2469 = vmatpush.bf16.msra.mxu0 %v2226
      %2470 = vmatmul.bf16.gmra.mxu0 %v2278
      %v2471 = vpop.f32.mrf.mxu0
      %v2472 = vadd.f32 %v2098, %v2471
      %v2473 = vpop.f32.mrf.mxu0
      %v2474 = vadd.f32 %v2098, %v2473
      %2475 = vdwg.mxu0
      %2476 = vmatpush.bf16.msra.mxu0 0
      %2477 = vmatpush.bf16.msra.mxu0 0
      %2478 = vmatpush.bf16.msra.mxu0 0
      %2479 = vmatpush.bf16.msra.mxu0 0
      %2480 = vmatpush.bf16.msra.mxu0 0
      %2481 = vmatpush.bf16.msra.mxu0 0
      %2482 = vmatpush.bf16.msra.mxu0 %v2243
      %2483 = vmatpush.bf16.msra.mxu0 %v2227
      %2484 = vmatmul.bf16.gmra.mxu0 %v2278
      %v2485 = vpop.f32.mrf.mxu0
      %v2486 = vadd.f32 %v2099, %v2485
      %v2487 = vpop.f32.mrf.mxu0
      %v2488 = vadd.f32 %v2099, %v2487
      %2489 = vdwg.mxu0
      %2490 = vmatpush.bf16.msra.mxu0 0
      %2491 = vmatpush.bf16.msra.mxu0 0
      %2492 = vmatpush.bf16.msra.mxu0 0
      %2493 = vmatpush.bf16.msra.mxu0 0
      %2494 = vmatpush.bf16.msra.mxu0 0
      %2495 = vmatpush.bf16.msra.mxu0 0
      %2496 = vmatpush.bf16.msra.mxu0 %v2244
      %2497 = vmatpush.bf16.msra.mxu0 %v2228
      %2498 = vmatmul.bf16.gmra.mxu0 %v2278
      %v2499 = vpop.f32.mrf.mxu0
      %v2500 = vadd.f32 %v2100, %v2499
      %v2501 = vpop.f32.mrf.mxu0
      %v2502 = vadd.f32 %v2100, %v2501
      %2503 = vdwg.mxu0
      %v2504 = vmax.f32 %v2290, 0.0
      %v2505 = vmax.f32 %v2304, 0.0
      %v2506 = vmax.f32 %v2318, 0.0
      %v2507 = vmax.f32 %v2332, 0.0
      %v2508 = vmax.f32 %v2346, 0.0
      %v2509 = vmax.f32 %v2360, 0.0
      %v2510 = vmax.f32 %v2374, 0.0
      %v2511 = vmax.f32 %v2388, 0.0
      %v2512 = vmax.f32 %v2402, 0.0
      %v2513 = vmax.f32 %v2416, 0.0
      %v2514 = vmax.f32 %v2430, 0.0
      %v2515 = vmax.f32 %v2444, 0.0
      %v2516 = vmax.f32 %v2458, 0.0
      %v2517 = vmax.f32 %v2472, 0.0
      %v2518 = vmax.f32 %v2486, 0.0
      %v2519 = vmax.f32 %v2500, 0.0
      %v2520 = vmax.f32 %v2292, 0.0
      %v2521 = vmax.f32 %v2306, 0.0
      %v2522 = vmax.f32 %v2320, 0.0
      %v2523 = vmax.f32 %v2334, 0.0
      %v2524 = vmax.f32 %v2348, 0.0
      %v2525 = vmax.f32 %v2362, 0.0
      %v2526 = vmax.f32 %v2376, 0.0
      %v2527 = vmax.f32 %v2390, 0.0
      %v2528 = vmax.f32 %v2404, 0.0
      %v2529 = vmax.f32 %v2418, 0.0
      %v2530 = vmax.f32 %v2432, 0.0
      %v2531 = vmax.f32 %v2446, 0.0
      %v2532 = vmax.f32 %v2460, 0.0
      %v2533 = vmax.f32 %v2474, 0.0
      %v2534 = vmax.f32 %v2488, 0.0
      %v2535 = vmax.f32 %v2502, 0.0
      %v2536 = vpack.c.bf16 %v2520, %v2504
      %v2537 = vpack.c.bf16 %v2521, %v2505
      %v2538 = vpack.c.bf16 %v2522, %v2506
      %v2539 = vpack.c.bf16 %v2523, %v2507
      %v2540 = vpack.c.bf16 %v2524, %v2508
      %v2541 = vpack.c.bf16 %v2525, %v2509
      %v2542 = vpack.c.bf16 %v2526, %v2510
      %v2543 = vpack.c.bf16 %v2527, %v2511
      %v2544 = vpack.c.bf16 %v2528, %v2512
      %v2545 = vpack.c.bf16 %v2529, %v2513
      %v2546 = vpack.c.bf16 %v2530, %v2514
      %v2547 = vpack.c.bf16 %v2531, %v2515
      %v2548 = vpack.c.bf16 %v2532, %v2516
      %v2549 = vpack.c.bf16 %v2533, %v2517
      %v2550 = vpack.c.bf16 %v2534, %v2518
      %v2551 = vpack.c.bf16 %v2535, %v2519
      %v2552 = vld [vmem:[%s394] sm:$0xf]
      %v2553 = vld [vmem:[%s394 + $0x4] sm:$0xf]
      %v2554 = vld [vmem:[%s394 + $0x8] sm:$0xf]
      %v2555 = vld [vmem:[%s394 + $0xc] sm:$0xf]
      %v2556 = vld [vmem:[%s394 + $0x10] sm:$0xf]
      %v2557 = vld [vmem:[%s394 + $0x14] sm:$0xf]
      %v2558 = vld [vmem:[%s394 + $0x18] sm:$0xf]
      %v2559 = vld [vmem:[%s394 + $0x1c] sm:$0xf]
      %v2560 = vld [vmem:[%s394 + $0x20] sm:$0xf]
      %v2561 = vld [vmem:[%s394 + $0x24] sm:$0xf]
      %v2562 = vld [vmem:[%s394 + $0x28] sm:$0xf]
      %v2563 = vld [vmem:[%s394 + $0x2c] sm:$0xf]
      %v2564 = vld [vmem:[%s394 + $0x30] sm:$0xf]
      %v2565 = vld [vmem:[%s394 + $0x34] sm:$0xf]
      %v2566 = vld [vmem:[%s394 + $0x38] sm:$0xf]
      %v2567 = vld [vmem:[%s394 + $0x3c] sm:$0xf]
      %v2568 = vld [vmem:[%s394 + $0x40] sm:$0xf]
      %v2569 = vld [vmem:[%s394 + $0x44] sm:$0xf]
      %v2570 = vld [vmem:[%s394 + $0x48] sm:$0xf]
      %v2571 = vld [vmem:[%s394 + $0x4c] sm:$0xf]
      %v2572 = vld [vmem:[%s394 + $0x50] sm:$0xf]
      %v2573 = vld [vmem:[%s394 + $0x54] sm:$0xf]
      %v2574 = vld [vmem:[%s394 + $0x58] sm:$0xf]
      %v2575 = vld [vmem:[%s394 + $0x5c] sm:$0xf]
      %v2576 = vld [vmem:[%s394 + $0x60] sm:$0xf]
      %v2577 = vld [vmem:[%s394 + $0x64] sm:$0xf]
      %v2578 = vld [vmem:[%s394 + $0x68] sm:$0xf]
      %v2579 = vld [vmem:[%s394 + $0x6c] sm:$0xf]
      %v2580 = vld [vmem:[%s394 + $0x70] sm:$0xf]
      %v2581 = vld [vmem:[%s394 + $0x74] sm:$0xf]
      %v2582 = vld [vmem:[%s394 + $0x78] sm:$0xf]
      %v2583 = vld [vmem:[%s394 + $0x7c] sm:$0xf]
      %v2584 = vld [vmem:[%s394 + $0x80] sm:$0xf]
      %v2585 = vld [vmem:[%s394 + $0x84] sm:$0xf]
      %v2586 = vld [vmem:[%s394 + $0x88] sm:$0xf]
      %v2587 = vld [vmem:[%s394 + $0x8c] sm:$0xf]
      %v2588 = vld [vmem:[%s394 + $0x90] sm:$0xf]
      %v2589 = vld [vmem:[%s394 + $0x94] sm:$0xf]
      %v2590 = vld [vmem:[%s394 + $0x98] sm:$0xf]
      %v2591 = vld [vmem:[%s394 + $0x9c] sm:$0xf]
      %v2592 = vld [vmem:[%s394 + $0xa0] sm:$0xf]
      %v2593 = vld [vmem:[%s394 + $0xa4] sm:$0xf]
      %v2594 = vld [vmem:[%s394 + $0xa8] sm:$0xf]
      %v2595 = vld [vmem:[%s394 + $0xac] sm:$0xf]
      %v2596 = vld [vmem:[%s394 + $0xb0] sm:$0xf]
      %v2597 = vld [vmem:[%s394 + $0xb4] sm:$0xf]
      %v2598 = vld [vmem:[%s394 + $0xb8] sm:$0xf]
      %v2599 = vld [vmem:[%s394 + $0xbc] sm:$0xf]
      %v2600 = vld [vmem:[%s394 + $0xc0] sm:$0xf]
      %v2601 = vld [vmem:[%s394 + $0xc4] sm:$0xf]
      %v2602 = vld [vmem:[%s394 + $0xc8] sm:$0xf]
      %v2603 = vld [vmem:[%s394 + $0xcc] sm:$0xf]
      %v2604 = vld [vmem:[%s394 + $0xd0] sm:$0xf]
      %v2605 = vld [vmem:[%s394 + $0xd4] sm:$0xf]
      %v2606 = vld [vmem:[%s394 + $0xd8] sm:$0xf]
      %v2607 = vld [vmem:[%s394 + $0xdc] sm:$0xf]
      %v2608 = vld [vmem:[%s394 + $0xe0] sm:$0xf]
      %v2609 = vld [vmem:[%s394 + $0xe4] sm:$0xf]
      %v2610 = vld [vmem:[%s394 + $0xe8] sm:$0xf]
      %v2611 = vld [vmem:[%s394 + $0xec] sm:$0xf]
      %v2612 = vld [vmem:[%s394 + $0xf0] sm:$0xf]
      %v2613 = vld [vmem:[%s394 + $0xf4] sm:$0xf]
      %v2614 = vld [vmem:[%s394 + $0xf8] sm:$0xf]
      %v2615 = vld [vmem:[%s394 + $0xfc] sm:$0xf]
      %v2616 = vld [vmem:[%s394 + $0x100] sm:$0xf]
      %v2617 = vld [vmem:[%s394 + $0x104] sm:$0xf]
      %v2618 = vld [vmem:[%s394 + $0x108] sm:$0xf]
      %v2619 = vld [vmem:[%s394 + $0x10c] sm:$0xf]
      %v2620 = vld [vmem:[%s394 + $0x110] sm:$0xf]
      %v2621 = vld [vmem:[%s394 + $0x114] sm:$0xf]
      %v2622 = vld [vmem:[%s394 + $0x118] sm:$0xf]
      %v2623 = vld [vmem:[%s394 + $0x11c] sm:$0xf]
      %v2624 = vld [vmem:[%s394 + $0x120] sm:$0xf]
      %v2625 = vld [vmem:[%s394 + $0x124] sm:$0xf]
      %v2626 = vld [vmem:[%s394 + $0x128] sm:$0xf]
      %v2627 = vld [vmem:[%s394 + $0x12c] sm:$0xf]
      %v2628 = vld [vmem:[%s394 + $0x130] sm:$0xf]
      %v2629 = vld [vmem:[%s394 + $0x134] sm:$0xf]
      %v2630 = vld [vmem:[%s394 + $0x138] sm:$0xf]
      %v2631 = vld [vmem:[%s394 + $0x13c] sm:$0xf]
      %v2632 = vld [vmem:[%s394 + $0x140] sm:$0xf]
      %v2633 = vld [vmem:[%s394 + $0x144] sm:$0xf]
      %v2634 = vld [vmem:[%s394 + $0x148] sm:$0xf]
      %v2635 = vld [vmem:[%s394 + $0x14c] sm:$0xf]
      %v2636 = vld [vmem:[%s394 + $0x150] sm:$0xf]
      %v2637 = vld [vmem:[%s394 + $0x154] sm:$0xf]
      %v2638 = vld [vmem:[%s394 + $0x158] sm:$0xf]
      %v2639 = vld [vmem:[%s394 + $0x15c] sm:$0xf]
      %v2640 = vld [vmem:[%s394 + $0x160] sm:$0xf]
      %v2641 = vld [vmem:[%s394 + $0x164] sm:$0xf]
      %v2642 = vld [vmem:[%s394 + $0x168] sm:$0xf]
      %v2643 = vld [vmem:[%s394 + $0x16c] sm:$0xf]
      %v2644 = vld [vmem:[%s394 + $0x170] sm:$0xf]
      %v2645 = vld [vmem:[%s394 + $0x174] sm:$0xf]
      %v2646 = vld [vmem:[%s394 + $0x178] sm:$0xf]
      %v2647 = vld [vmem:[%s394 + $0x17c] sm:$0xf]
      %v2648 = vld [vmem:[%s394 + $0x180] sm:$0xf]
      %v2649 = vld [vmem:[%s394 + $0x184] sm:$0xf]
      %v2650 = vld [vmem:[%s394 + $0x188] sm:$0xf]
      %v2651 = vld [vmem:[%s394 + $0x18c] sm:$0xf]
      %v2652 = vld [vmem:[%s394 + $0x190] sm:$0xf]
      %v2653 = vld [vmem:[%s394 + $0x194] sm:$0xf]
      %v2654 = vld [vmem:[%s394 + $0x198] sm:$0xf]
      %v2655 = vld [vmem:[%s394 + $0x19c] sm:$0xf]
      %v2656 = vld [vmem:[%s394 + $0x1a0] sm:$0xf]
      %v2657 = vld [vmem:[%s394 + $0x1a4] sm:$0xf]
      %v2658 = vld [vmem:[%s394 + $0x1a8] sm:$0xf]
      %v2659 = vld [vmem:[%s394 + $0x1ac] sm:$0xf]
      %v2660 = vld [vmem:[%s394 + $0x1b0] sm:$0xf]
      %v2661 = vld [vmem:[%s394 + $0x1b4] sm:$0xf]
      %v2662 = vld [vmem:[%s394 + $0x1b8] sm:$0xf]
      %v2663 = vld [vmem:[%s394 + $0x1bc] sm:$0xf]
      %v2664 = vld [vmem:[%s394 + $0x1c0] sm:$0xf]
      %v2665 = vld [vmem:[%s394 + $0x1c4] sm:$0xf]
      %v2666 = vld [vmem:[%s394 + $0x1c8] sm:$0xf]
      %v2667 = vld [vmem:[%s394 + $0x1cc] sm:$0xf]
      %v2668 = vld [vmem:[%s394 + $0x1d0] sm:$0xf]
      %v2669 = vld [vmem:[%s394 + $0x1d4] sm:$0xf]
      %v2670 = vld [vmem:[%s394 + $0x1d8] sm:$0xf]
      %v2671 = vld [vmem:[%s394 + $0x1dc] sm:$0xf]
      %v2672 = vld [vmem:[%s394 + $0x1e0] sm:$0xf]
      %v2673 = vld [vmem:[%s394 + $0x1e4] sm:$0xf]
      %v2674 = vld [vmem:[%s394 + $0x1e8] sm:$0xf]
      %v2675 = vld [vmem:[%s394 + $0x1ec] sm:$0xf]
      %v2676 = vld [vmem:[%s394 + $0x1f0] sm:$0xf]
      %v2677 = vld [vmem:[%s394 + $0x1f4] sm:$0xf]
      %v2678 = vld [vmem:[%s394 + $0x1f8] sm:$0xf]
      %v2679 = vld [vmem:[%s394 + $0x1fc] sm:$0xf]
      %v2680 = vld [vmem:[%s394 + $0x200] sm:$0xf]
      %v2681 = vld [vmem:[%s394 + $0x204] sm:$0xf]
      %v2682 = vld [vmem:[%s394 + $0x208] sm:$0xf]
      %v2683 = vld [vmem:[%s394 + $0x20c] sm:$0xf]
      %v2684 = vld [vmem:[%s394 + $0x210] sm:$0xf]
      %v2685 = vld [vmem:[%s394 + $0x214] sm:$0xf]
      %v2686 = vld [vmem:[%s394 + $0x218] sm:$0xf]
      %v2687 = vld [vmem:[%s394 + $0x21c] sm:$0xf]
      %v2688 = vld [vmem:[%s394 + $0x220] sm:$0xf]
      %v2689 = vld [vmem:[%s394 + $0x224] sm:$0xf]
      %v2690 = vld [vmem:[%s394 + $0x228] sm:$0xf]
      %v2691 = vld [vmem:[%s394 + $0x22c] sm:$0xf]
      %v2692 = vld [vmem:[%s394 + $0x230] sm:$0xf]
      %v2693 = vld [vmem:[%s394 + $0x234] sm:$0xf]
      %v2694 = vld [vmem:[%s394 + $0x238] sm:$0xf]
      %v2695 = vld [vmem:[%s394 + $0x23c] sm:$0xf]
      %v2696 = vld [vmem:[%s394 + $0x240] sm:$0xf]
      %v2697 = vld [vmem:[%s394 + $0x244] sm:$0xf]
      %v2698 = vld [vmem:[%s394 + $0x248] sm:$0xf]
      %v2699 = vld [vmem:[%s394 + $0x24c] sm:$0xf]
      %v2700 = vld [vmem:[%s394 + $0x250] sm:$0xf]
      %v2701 = vld [vmem:[%s394 + $0x254] sm:$0xf]
      %v2702 = vld [vmem:[%s394 + $0x258] sm:$0xf]
      %v2703 = vld [vmem:[%s394 + $0x25c] sm:$0xf]
      %v2704 = vld [vmem:[%s394 + $0x260] sm:$0xf]
      %v2705 = vld [vmem:[%s394 + $0x264] sm:$0xf]
      %v2706 = vld [vmem:[%s394 + $0x268] sm:$0xf]
      %v2707 = vld [vmem:[%s394 + $0x26c] sm:$0xf]
      %v2708 = vld [vmem:[%s394 + $0x270] sm:$0xf]
      %v2709 = vld [vmem:[%s394 + $0x274] sm:$0xf]
      %v2710 = vld [vmem:[%s394 + $0x278] sm:$0xf]
      %v2711 = vld [vmem:[%s394 + $0x27c] sm:$0xf]
      %v2712 = vld [vmem:[%s394 + $0x280] sm:$0xf]
      %v2713 = vld [vmem:[%s394 + $0x284] sm:$0xf]
      %v2714 = vld [vmem:[%s394 + $0x288] sm:$0xf]
      %v2715 = vld [vmem:[%s394 + $0x28c] sm:$0xf]
      %v2716 = vld [vmem:[%s394 + $0x290] sm:$0xf]
      %v2717 = vld [vmem:[%s394 + $0x294] sm:$0xf]
      %v2718 = vld [vmem:[%s394 + $0x298] sm:$0xf]
      %v2719 = vld [vmem:[%s394 + $0x29c] sm:$0xf]
      %v2720 = vld [vmem:[%s394 + $0x2a0] sm:$0xf]
      %v2721 = vld [vmem:[%s394 + $0x2a4] sm:$0xf]
      %v2722 = vld [vmem:[%s394 + $0x2a8] sm:$0xf]
      %v2723 = vld [vmem:[%s394 + $0x2ac] sm:$0xf]
      %v2724 = vld [vmem:[%s394 + $0x2b0] sm:$0xf]
      %v2725 = vld [vmem:[%s394 + $0x2b4] sm:$0xf]
      %v2726 = vld [vmem:[%s394 + $0x2b8] sm:$0xf]
      %v2727 = vld [vmem:[%s394 + $0x2bc] sm:$0xf]
      %v2728 = vld [vmem:[%s394 + $0x2c0] sm:$0xf]
      %v2729 = vld [vmem:[%s394 + $0x2c4] sm:$0xf]
      %v2730 = vld [vmem:[%s394 + $0x2c8] sm:$0xf]
      %v2731 = vld [vmem:[%s394 + $0x2cc] sm:$0xf]
      %v2732 = vld [vmem:[%s394 + $0x2d0] sm:$0xf]
      %v2733 = vld [vmem:[%s394 + $0x2d4] sm:$0xf]
      %v2734 = vld [vmem:[%s394 + $0x2d8] sm:$0xf]
      %v2735 = vld [vmem:[%s394 + $0x2dc] sm:$0xf]
      %v2736 = vld [vmem:[%s394 + $0x2e0] sm:$0xf]
      %v2737 = vld [vmem:[%s394 + $0x2e4] sm:$0xf]
      %v2738 = vld [vmem:[%s394 + $0x2e8] sm:$0xf]
      %v2739 = vld [vmem:[%s394 + $0x2ec] sm:$0xf]
      %v2740 = vld [vmem:[%s394 + $0x2f0] sm:$0xf]
      %v2741 = vld [vmem:[%s394 + $0x2f4] sm:$0xf]
      %v2742 = vld [vmem:[%s394 + $0x2f8] sm:$0xf]
      %v2743 = vld [vmem:[%s394 + $0x2fc] sm:$0xf]
      %v2744 = vld [vmem:[%s394 + $0x300] sm:$0xf]
      %v2745 = vld [vmem:[%s394 + $0x304] sm:$0xf]
      %v2746 = vld [vmem:[%s394 + $0x308] sm:$0xf]
      %v2747 = vld [vmem:[%s394 + $0x30c] sm:$0xf]
      %v2748 = vld [vmem:[%s394 + $0x310] sm:$0xf]
      %v2749 = vld [vmem:[%s394 + $0x314] sm:$0xf]
      %v2750 = vld [vmem:[%s394 + $0x318] sm:$0xf]
      %v2751 = vld [vmem:[%s394 + $0x31c] sm:$0xf]
      %v2752 = vld [vmem:[%s394 + $0x320] sm:$0xf]
      %v2753 = vld [vmem:[%s394 + $0x324] sm:$0xf]
      %v2754 = vld [vmem:[%s394 + $0x328] sm:$0xf]
      %v2755 = vld [vmem:[%s394 + $0x32c] sm:$0xf]
      %v2756 = vld [vmem:[%s394 + $0x330] sm:$0xf]
      %v2757 = vld [vmem:[%s394 + $0x334] sm:$0xf]
      %v2758 = vld [vmem:[%s394 + $0x338] sm:$0xf]
      %v2759 = vld [vmem:[%s394 + $0x33c] sm:$0xf]
      %v2760 = vld [vmem:[%s394 + $0x340] sm:$0xf]
      %v2761 = vld [vmem:[%s394 + $0x344] sm:$0xf]
      %v2762 = vld [vmem:[%s394 + $0x348] sm:$0xf]
      %v2763 = vld [vmem:[%s394 + $0x34c] sm:$0xf]
      %v2764 = vld [vmem:[%s394 + $0x350] sm:$0xf]
      %v2765 = vld [vmem:[%s394 + $0x354] sm:$0xf]
      %v2766 = vld [vmem:[%s394 + $0x358] sm:$0xf]
      %v2767 = vld [vmem:[%s394 + $0x35c] sm:$0xf]
      %v2768 = vld [vmem:[%s394 + $0x360] sm:$0xf]
      %v2769 = vld [vmem:[%s394 + $0x364] sm:$0xf]
      %v2770 = vld [vmem:[%s394 + $0x368] sm:$0xf]
      %v2771 = vld [vmem:[%s394 + $0x36c] sm:$0xf]
      %v2772 = vld [vmem:[%s394 + $0x370] sm:$0xf]
      %v2773 = vld [vmem:[%s394 + $0x374] sm:$0xf]
      %v2774 = vld [vmem:[%s394 + $0x378] sm:$0xf]
      %v2775 = vld [vmem:[%s394 + $0x37c] sm:$0xf]
      %v2776 = vld [vmem:[%s394 + $0x380] sm:$0xf]
      %v2777 = vld [vmem:[%s394 + $0x384] sm:$0xf]
      %v2778 = vld [vmem:[%s394 + $0x388] sm:$0xf]
      %v2779 = vld [vmem:[%s394 + $0x38c] sm:$0xf]
      %v2780 = vld [vmem:[%s394 + $0x390] sm:$0xf]
      %v2781 = vld [vmem:[%s394 + $0x394] sm:$0xf]
      %v2782 = vld [vmem:[%s394 + $0x398] sm:$0xf]
      %v2783 = vld [vmem:[%s394 + $0x39c] sm:$0xf]
      %v2784 = vld [vmem:[%s394 + $0x3a0] sm:$0xf]
      %v2785 = vld [vmem:[%s394 + $0x3a4] sm:$0xf]
      %v2786 = vld [vmem:[%s394 + $0x3a8] sm:$0xf]
      %v2787 = vld [vmem:[%s394 + $0x3ac] sm:$0xf]
      %v2788 = vld [vmem:[%s394 + $0x3b0] sm:$0xf]
      %v2789 = vld [vmem:[%s394 + $0x3b4] sm:$0xf]
      %v2790 = vld [vmem:[%s394 + $0x3b8] sm:$0xf]
      %v2791 = vld [vmem:[%s394 + $0x3bc] sm:$0xf]
      %v2792 = vld [vmem:[%s394 + $0x3c0] sm:$0xf]
      %v2793 = vld [vmem:[%s394 + $0x3c4] sm:$0xf]
      %v2794 = vld [vmem:[%s394 + $0x3c8] sm:$0xf]
      %v2795 = vld [vmem:[%s394 + $0x3cc] sm:$0xf]
      %v2796 = vld [vmem:[%s394 + $0x3d0] sm:$0xf]
      %v2797 = vld [vmem:[%s394 + $0x3d4] sm:$0xf]
      %v2798 = vld [vmem:[%s394 + $0x3d8] sm:$0xf]
      %v2799 = vld [vmem:[%s394 + $0x3dc] sm:$0xf]
      %v2800 = vld [vmem:[%s394 + $0x3e0] sm:$0xf]
      %v2801 = vld [vmem:[%s394 + $0x3e4] sm:$0xf]
      %v2802 = vld [vmem:[%s394 + $0x3e8] sm:$0xf]
      %v2803 = vld [vmem:[%s394 + $0x3ec] sm:$0xf]
      %v2804 = vld [vmem:[%s394 + $0x3f0] sm:$0xf]
      %v2805 = vld [vmem:[%s394 + $0x3f4] sm:$0xf]
      %v2806 = vld [vmem:[%s394 + $0x3f8] sm:$0xf]
      %v2807 = vld [vmem:[%s394 + $0x3fc] sm:$0xf]
      %v2808 = vperm.slane %v443, 6
      %v3065 = vunpack.c.l.b16 %v2552
      %v3066 = vunpack.c.l.b16 %v2553
      %v3067 = vunpack.c.l.b16 %v2554
      %v3068 = vunpack.c.l.b16 %v2555
      %v3069 = vunpack.c.l.b16 %v2556
      %v3070 = vunpack.c.l.b16 %v2557
      %v3071 = vunpack.c.l.b16 %v2558
      %v3072 = vunpack.c.l.b16 %v2559
      %v3073 = vunpack.c.l.b16 %v2560
      %v3074 = vunpack.c.l.b16 %v2561
      %v3075 = vunpack.c.l.b16 %v2562
      %v3076 = vunpack.c.l.b16 %v2563
      %v3077 = vunpack.c.l.b16 %v2564
      %v3078 = vunpack.c.l.b16 %v2565
      %v3079 = vunpack.c.l.b16 %v2566
      %v3080 = vunpack.c.l.b16 %v2567
      %v3081 = vunpack.c.l.b16 %v2568
      %v3082 = vunpack.c.l.b16 %v2569
      %v3083 = vunpack.c.l.b16 %v2570
      %v3084 = vunpack.c.l.b16 %v2571
      %v3085 = vunpack.c.l.b16 %v2572
      %v3086 = vunpack.c.l.b16 %v2573
      %v3087 = vunpack.c.l.b16 %v2574
      %v3088 = vunpack.c.l.b16 %v2575
      %v3089 = vunpack.c.l.b16 %v2576
      %v3090 = vunpack.c.l.b16 %v2577
      %v3091 = vunpack.c.l.b16 %v2578
      %v3092 = vunpack.c.l.b16 %v2579
      %v3093 = vunpack.c.l.b16 %v2580
      %v3094 = vunpack.c.l.b16 %v2581
      %v3095 = vunpack.c.l.b16 %v2582
      %v3096 = vunpack.c.l.b16 %v2583
      %v3097 = vunpack.c.l.b16 %v2584
      %v3098 = vunpack.c.l.b16 %v2585
      %v3099 = vunpack.c.l.b16 %v2586
      %v3100 = vunpack.c.l.b16 %v2587
      %v3101 = vunpack.c.l.b16 %v2588
      %v3102 = vunpack.c.l.b16 %v2589
      %v3103 = vunpack.c.l.b16 %v2590
      %v3104 = vunpack.c.l.b16 %v2591
      %v3105 = vunpack.c.l.b16 %v2592
      %v3106 = vunpack.c.l.b16 %v2593
      %v3107 = vunpack.c.l.b16 %v2594
      %v3108 = vunpack.c.l.b16 %v2595
      %v3109 = vunpack.c.l.b16 %v2596
      %v3110 = vunpack.c.l.b16 %v2597
      %v3111 = vunpack.c.l.b16 %v2598
      %v3112 = vunpack.c.l.b16 %v2599
      %v3113 = vunpack.c.l.b16 %v2600
      %v3114 = vunpack.c.l.b16 %v2601
      %v3115 = vunpack.c.l.b16 %v2602
      %v3116 = vunpack.c.l.b16 %v2603
      %v3117 = vunpack.c.l.b16 %v2604
      %v3118 = vunpack.c.l.b16 %v2605
      %v3119 = vunpack.c.l.b16 %v2606
      %v3120 = vunpack.c.l.b16 %v2607
      %v3121 = vunpack.c.l.b16 %v2608
      %v3122 = vunpack.c.l.b16 %v2609
      %v3123 = vunpack.c.l.b16 %v2610
      %v3124 = vunpack.c.l.b16 %v2611
      %v3125 = vunpack.c.l.b16 %v2612
      %v3126 = vunpack.c.l.b16 %v2613
      %v3127 = vunpack.c.l.b16 %v2614
      %v3128 = vunpack.c.l.b16 %v2615
      %v3129 = vunpack.c.l.b16 %v2616
      %v3130 = vunpack.c.l.b16 %v2617
      %v3131 = vunpack.c.l.b16 %v2618
      %v3132 = vunpack.c.l.b16 %v2619
      %v3133 = vunpack.c.l.b16 %v2620
      %v3134 = vunpack.c.l.b16 %v2621
      %v3135 = vunpack.c.l.b16 %v2622
      %v3136 = vunpack.c.l.b16 %v2623
      %v3137 = vunpack.c.l.b16 %v2624
      %v3138 = vunpack.c.l.b16 %v2625
      %v3139 = vunpack.c.l.b16 %v2626
      %v3140 = vunpack.c.l.b16 %v2627
      %v3141 = vunpack.c.l.b16 %v2628
      %v3142 = vunpack.c.l.b16 %v2629
      %v3143 = vunpack.c.l.b16 %v2630
      %v3144 = vunpack.c.l.b16 %v2631
      %v3145 = vunpack.c.l.b16 %v2632
      %v3146 = vunpack.c.l.b16 %v2633
      %v3147 = vunpack.c.l.b16 %v2634
      %v3148 = vunpack.c.l.b16 %v2635
      %v3149 = vunpack.c.l.b16 %v2636
      %v3150 = vunpack.c.l.b16 %v2637
      %v3151 = vunpack.c.l.b16 %v2638
      %v3152 = vunpack.c.l.b16 %v2639
      %v3153 = vunpack.c.l.b16 %v2640
      %v3154 = vunpack.c.l.b16 %v2641
      %v3155 = vunpack.c.l.b16 %v2642
      %v3156 = vunpack.c.l.b16 %v2643
      %v3157 = vunpack.c.l.b16 %v2644
      %v3158 = vunpack.c.l.b16 %v2645
      %v3159 = vunpack.c.l.b16 %v2646
      %v3160 = vunpack.c.l.b16 %v2647
      %v3161 = vunpack.c.l.b16 %v2648
      %v3162 = vunpack.c.l.b16 %v2649
      %v3163 = vunpack.c.l.b16 %v2650
      %v3164 = vunpack.c.l.b16 %v2651
      %v3165 = vunpack.c.l.b16 %v2652
      %v3166 = vunpack.c.l.b16 %v2653
      %v3167 = vunpack.c.l.b16 %v2654
      %v3168 = vunpack.c.l.b16 %v2655
      %v3169 = vunpack.c.l.b16 %v2656
      %v3170 = vunpack.c.l.b16 %v2657
      %v3171 = vunpack.c.l.b16 %v2658
      %v3172 = vunpack.c.l.b16 %v2659
      %v3173 = vunpack.c.l.b16 %v2660
      %v3174 = vunpack.c.l.b16 %v2661
      %v3175 = vunpack.c.l.b16 %v2662
      %v3176 = vunpack.c.l.b16 %v2663
      %v3177 = vunpack.c.l.b16 %v2664
      %v3178 = vunpack.c.l.b16 %v2665
      %v3179 = vunpack.c.l.b16 %v2666
      %v3180 = vunpack.c.l.b16 %v2667
      %v3181 = vunpack.c.l.b16 %v2668
      %v3182 = vunpack.c.l.b16 %v2669
      %v3183 = vunpack.c.l.b16 %v2670
      %v3184 = vunpack.c.l.b16 %v2671
      %v3185 = vunpack.c.l.b16 %v2672
      %v3186 = vunpack.c.l.b16 %v2673
      %v3187 = vunpack.c.l.b16 %v2674
      %v3188 = vunpack.c.l.b16 %v2675
      %v3189 = vunpack.c.l.b16 %v2676
      %v3190 = vunpack.c.l.b16 %v2677
      %v3191 = vunpack.c.l.b16 %v2678
      %v3192 = vunpack.c.l.b16 %v2679
      %v3193 = vunpack.c.l.b16 %v2680
      %v3194 = vunpack.c.l.b16 %v2681
      %v3195 = vunpack.c.l.b16 %v2682
      %v3196 = vunpack.c.l.b16 %v2683
      %v3197 = vunpack.c.l.b16 %v2684
      %v3198 = vunpack.c.l.b16 %v2685
      %v3199 = vunpack.c.l.b16 %v2686
      %v3200 = vunpack.c.l.b16 %v2687
      %v3201 = vunpack.c.l.b16 %v2688
      %v3202 = vunpack.c.l.b16 %v2689
      %v3203 = vunpack.c.l.b16 %v2690
      %v3204 = vunpack.c.l.b16 %v2691
      %v3205 = vunpack.c.l.b16 %v2692
      %v3206 = vunpack.c.l.b16 %v2693
      %v3207 = vunpack.c.l.b16 %v2694
      %v3208 = vunpack.c.l.b16 %v2695
      %v3209 = vunpack.c.l.b16 %v2696
      %v3210 = vunpack.c.l.b16 %v2697
      %v3211 = vunpack.c.l.b16 %v2698
      %v3212 = vunpack.c.l.b16 %v2699
      %v3213 = vunpack.c.l.b16 %v2700
      %v3214 = vunpack.c.l.b16 %v2701
      %v3215 = vunpack.c.l.b16 %v2702
      %v3216 = vunpack.c.l.b16 %v2703
      %v3217 = vunpack.c.l.b16 %v2704
      %v3218 = vunpack.c.l.b16 %v2705
      %v3219 = vunpack.c.l.b16 %v2706
      %v3220 = vunpack.c.l.b16 %v2707
      %v3221 = vunpack.c.l.b16 %v2708
      %v3222 = vunpack.c.l.b16 %v2709
      %v3223 = vunpack.c.l.b16 %v2710
      %v3224 = vunpack.c.l.b16 %v2711
      %v3225 = vunpack.c.l.b16 %v2712
      %v3226 = vunpack.c.l.b16 %v2713
      %v3227 = vunpack.c.l.b16 %v2714
      %v3228 = vunpack.c.l.b16 %v2715
      %v3229 = vunpack.c.l.b16 %v2716
      %v3230 = vunpack.c.l.b16 %v2717
      %v3231 = vunpack.c.l.b16 %v2718
      %v3232 = vunpack.c.l.b16 %v2719
      %v3233 = vunpack.c.l.b16 %v2720
      %v3234 = vunpack.c.l.b16 %v2721
      %v3235 = vunpack.c.l.b16 %v2722
      %v3236 = vunpack.c.l.b16 %v2723
      %v3237 = vunpack.c.l.b16 %v2724
      %v3238 = vunpack.c.l.b16 %v2725
      %v3239 = vunpack.c.l.b16 %v2726
      %v3240 = vunpack.c.l.b16 %v2727
      %v3241 = vunpack.c.l.b16 %v2728
      %v3242 = vunpack.c.l.b16 %v2729
      %v3243 = vunpack.c.l.b16 %v2730
      %v3244 = vunpack.c.l.b16 %v2731
      %v3245 = vunpack.c.l.b16 %v2732
      %v3246 = vunpack.c.l.b16 %v2733
      %v3247 = vunpack.c.l.b16 %v2734
      %v3248 = vunpack.c.l.b16 %v2735
      %v3249 = vunpack.c.l.b16 %v2736
      %v3250 = vunpack.c.l.b16 %v2737
      %v3251 = vunpack.c.l.b16 %v2738
      %v3252 = vunpack.c.l.b16 %v2739
      %v3253 = vunpack.c.l.b16 %v2740
      %v3254 = vunpack.c.l.b16 %v2741
      %v3255 = vunpack.c.l.b16 %v2742
      %v3256 = vunpack.c.l.b16 %v2743
      %v3257 = vunpack.c.l.b16 %v2744
      %v3258 = vunpack.c.l.b16 %v2745
      %v3259 = vunpack.c.l.b16 %v2746
      %v3260 = vunpack.c.l.b16 %v2747
      %v3261 = vunpack.c.l.b16 %v2748
      %v3262 = vunpack.c.l.b16 %v2749
      %v3263 = vunpack.c.l.b16 %v2750
      %v3264 = vunpack.c.l.b16 %v2751
      %v3265 = vunpack.c.l.b16 %v2752
      %v3266 = vunpack.c.l.b16 %v2753
      %v3267 = vunpack.c.l.b16 %v2754
      %v3268 = vunpack.c.l.b16 %v2755
      %v3269 = vunpack.c.l.b16 %v2756
      %v3270 = vunpack.c.l.b16 %v2757
      %v3271 = vunpack.c.l.b16 %v2758
      %v3272 = vunpack.c.l.b16 %v2759
      %v3273 = vunpack.c.l.b16 %v2760
      %v3274 = vunpack.c.l.b16 %v2761
      %v3275 = vunpack.c.l.b16 %v2762
      %v3276 = vunpack.c.l.b16 %v2763
      %v3277 = vunpack.c.l.b16 %v2764
      %v3278 = vunpack.c.l.b16 %v2765
      %v3279 = vunpack.c.l.b16 %v2766
      %v3280 = vunpack.c.l.b16 %v2767
      %v3281 = vunpack.c.l.b16 %v2768
      %v3282 = vunpack.c.l.b16 %v2769
      %v3283 = vunpack.c.l.b16 %v2770
      %v3284 = vunpack.c.l.b16 %v2771
      %v3285 = vunpack.c.l.b16 %v2772
      %v3286 = vunpack.c.l.b16 %v2773
      %v3287 = vunpack.c.l.b16 %v2774
      %v3288 = vunpack.c.l.b16 %v2775
      %v3289 = vunpack.c.l.b16 %v2776
      %v3290 = vunpack.c.l.b16 %v2777
      %v3291 = vunpack.c.l.b16 %v2778
      %v3292 = vunpack.c.l.b16 %v2779
      %v3293 = vunpack.c.l.b16 %v2780
      %v3294 = vunpack.c.l.b16 %v2781
      %v3295 = vunpack.c.l.b16 %v2782
      %v3296 = vunpack.c.l.b16 %v2783
      %v3297 = vunpack.c.l.b16 %v2784
      %v3298 = vunpack.c.l.b16 %v2785
      %v3299 = vunpack.c.l.b16 %v2786
      %v3300 = vunpack.c.l.b16 %v2787
      %v3301 = vunpack.c.l.b16 %v2788
      %v3302 = vunpack.c.l.b16 %v2789
      %v3303 = vunpack.c.l.b16 %v2790
      %v3304 = vunpack.c.l.b16 %v2791
      %v3305 = vunpack.c.l.b16 %v2792
      %v3306 = vunpack.c.l.b16 %v2793
      %v3307 = vunpack.c.l.b16 %v2794
      %v3308 = vunpack.c.l.b16 %v2795
      %v3309 = vunpack.c.l.b16 %v2796
      %v3310 = vunpack.c.l.b16 %v2797
      %v3311 = vunpack.c.l.b16 %v2798
      %v3312 = vunpack.c.l.b16 %v2799
      %v3313 = vunpack.c.l.b16 %v2800
      %v3314 = vunpack.c.l.b16 %v2801
      %v3315 = vunpack.c.l.b16 %v2802
      %v3316 = vunpack.c.l.b16 %v2803
      %v3317 = vunpack.c.l.b16 %v2804
      %v3318 = vunpack.c.l.b16 %v2805
      %v3319 = vunpack.c.l.b16 %v2806
      %v3320 = vunpack.c.l.b16 %v2807
      %v3321 = vpack.c.b16 %v3066, %v3065
      %v3322 = vpack.c.b16 %v3068, %v3067
      %v3323 = vpack.c.b16 %v3070, %v3069
      %v3324 = vpack.c.b16 %v3072, %v3071
      %v3325 = vpack.c.b16 %v3074, %v3073
      %v3326 = vpack.c.b16 %v3076, %v3075
      %v3327 = vpack.c.b16 %v3078, %v3077
      %v3328 = vpack.c.b16 %v3080, %v3079
      %v3329 = vpack.c.b16 %v3082, %v3081
      %v3330 = vpack.c.b16 %v3084, %v3083
      %v3331 = vpack.c.b16 %v3086, %v3085
      %v3332 = vpack.c.b16 %v3088, %v3087
      %v3333 = vpack.c.b16 %v3090, %v3089
      %v3334 = vpack.c.b16 %v3092, %v3091
      %v3335 = vpack.c.b16 %v3094, %v3093
      %v3336 = vpack.c.b16 %v3096, %v3095
      %v3337 = vpack.c.b16 %v3098, %v3097
      %v3338 = vpack.c.b16 %v3100, %v3099
      %v3339 = vpack.c.b16 %v3102, %v3101
      %v3340 = vpack.c.b16 %v3104, %v3103
      %v3341 = vpack.c.b16 %v3106, %v3105
      %v3342 = vpack.c.b16 %v3108, %v3107
      %v3343 = vpack.c.b16 %v3110, %v3109
      %v3344 = vpack.c.b16 %v3112, %v3111
      %v3345 = vpack.c.b16 %v3114, %v3113
      %v3346 = vpack.c.b16 %v3116, %v3115
      %v3347 = vpack.c.b16 %v3118, %v3117
      %v3348 = vpack.c.b16 %v3120, %v3119
      %v3349 = vpack.c.b16 %v3122, %v3121
      %v3350 = vpack.c.b16 %v3124, %v3123
      %v3351 = vpack.c.b16 %v3126, %v3125
      %v3352 = vpack.c.b16 %v3128, %v3127
      %v3353 = vpack.c.b16 %v3130, %v3129
      %v3354 = vpack.c.b16 %v3132, %v3131
      %v3355 = vpack.c.b16 %v3134, %v3133
      %v3356 = vpack.c.b16 %v3136, %v3135
      %v3357 = vpack.c.b16 %v3138, %v3137
      %v3358 = vpack.c.b16 %v3140, %v3139
      %v3359 = vpack.c.b16 %v3142, %v3141
      %v3360 = vpack.c.b16 %v3144, %v3143
      %v3361 = vpack.c.b16 %v3146, %v3145
      %v3362 = vpack.c.b16 %v3148, %v3147
      %v3363 = vpack.c.b16 %v3150, %v3149
      %v3364 = vpack.c.b16 %v3152, %v3151
      %v3365 = vpack.c.b16 %v3154, %v3153
      %v3366 = vpack.c.b16 %v3156, %v3155
      %v3367 = vpack.c.b16 %v3158, %v3157
      %v3368 = vpack.c.b16 %v3160, %v3159
      %v3369 = vpack.c.b16 %v3162, %v3161
      %v3370 = vpack.c.b16 %v3164, %v3163
      %v3371 = vpack.c.b16 %v3166, %v3165
      %v3372 = vpack.c.b16 %v3168, %v3167
      %v3373 = vpack.c.b16 %v3170, %v3169
      %v3374 = vpack.c.b16 %v3172, %v3171
      %v3375 = vpack.c.b16 %v3174, %v3173
      %v3376 = vpack.c.b16 %v3176, %v3175
      %v3377 = vpack.c.b16 %v3178, %v3177
      %v3378 = vpack.c.b16 %v3180, %v3179
      %v3379 = vpack.c.b16 %v3182, %v3181
      %v3380 = vpack.c.b16 %v3184, %v3183
      %v3381 = vpack.c.b16 %v3186, %v3185
      %v3382 = vpack.c.b16 %v3188, %v3187
      %v3383 = vpack.c.b16 %v3190, %v3189
      %v3384 = vpack.c.b16 %v3192, %v3191
      %v3385 = vpack.c.b16 %v3194, %v3193
      %v3386 = vpack.c.b16 %v3196, %v3195
      %v3387 = vpack.c.b16 %v3198, %v3197
      %v3388 = vpack.c.b16 %v3200, %v3199
      %v3389 = vpack.c.b16 %v3202, %v3201
      %v3390 = vpack.c.b16 %v3204, %v3203
      %v3391 = vpack.c.b16 %v3206, %v3205
      %v3392 = vpack.c.b16 %v3208, %v3207
      %v3393 = vpack.c.b16 %v3210, %v3209
      %v3394 = vpack.c.b16 %v3212, %v3211
      %v3395 = vpack.c.b16 %v3214, %v3213
      %v3396 = vpack.c.b16 %v3216, %v3215
      %v3397 = vpack.c.b16 %v3218, %v3217
      %v3398 = vpack.c.b16 %v3220, %v3219
      %v3399 = vpack.c.b16 %v3222, %v3221
      %v3400 = vpack.c.b16 %v3224, %v3223
      %v3401 = vpack.c.b16 %v3226, %v3225
      %v3402 = vpack.c.b16 %v3228, %v3227
      %v3403 = vpack.c.b16 %v3230, %v3229
      %v3404 = vpack.c.b16 %v3232, %v3231
      %v3405 = vpack.c.b16 %v3234, %v3233
      %v3406 = vpack.c.b16 %v3236, %v3235
      %v3407 = vpack.c.b16 %v3238, %v3237
      %v3408 = vpack.c.b16 %v3240, %v3239
      %v3409 = vpack.c.b16 %v3242, %v3241
      %v3410 = vpack.c.b16 %v3244, %v3243
      %v3411 = vpack.c.b16 %v3246, %v3245
      %v3412 = vpack.c.b16 %v3248, %v3247
      %v3413 = vpack.c.b16 %v3250, %v3249
      %v3414 = vpack.c.b16 %v3252, %v3251
      %v3415 = vpack.c.b16 %v3254, %v3253
      %v3416 = vpack.c.b16 %v3256, %v3255
      %v3417 = vpack.c.b16 %v3258, %v3257
      %v3418 = vpack.c.b16 %v3260, %v3259
      %v3419 = vpack.c.b16 %v3262, %v3261
      %v3420 = vpack.c.b16 %v3264, %v3263
      %v3421 = vpack.c.b16 %v3266, %v3265
      %v3422 = vpack.c.b16 %v3268, %v3267
      %v3423 = vpack.c.b16 %v3270, %v3269
      %v3424 = vpack.c.b16 %v3272, %v3271
      %v3425 = vpack.c.b16 %v3274, %v3273
      %v3426 = vpack.c.b16 %v3276, %v3275
      %v3427 = vpack.c.b16 %v3278, %v3277
      %v3428 = vpack.c.b16 %v3280, %v3279
      %v3429 = vpack.c.b16 %v3282, %v3281
      %v3430 = vpack.c.b16 %v3284, %v3283
      %v3431 = vpack.c.b16 %v3286, %v3285
      %v3432 = vpack.c.b16 %v3288, %v3287
      %v3433 = vpack.c.b16 %v3290, %v3289
      %v3434 = vpack.c.b16 %v3292, %v3291
      %v3435 = vpack.c.b16 %v3294, %v3293
      %v3436 = vpack.c.b16 %v3296, %v3295
      %v3437 = vpack.c.b16 %v3298, %v3297
      %v3438 = vpack.c.b16 %v3300, %v3299
      %v3439 = vpack.c.b16 %v3302, %v3301
      %v3440 = vpack.c.b16 %v3304, %v3303
      %v3441 = vpack.c.b16 %v3306, %v3305
      %v3442 = vpack.c.b16 %v3308, %v3307
      %v3443 = vpack.c.b16 %v3310, %v3309
      %v3444 = vpack.c.b16 %v3312, %v3311
      %v3445 = vpack.c.b16 %v3314, %v3313
      %v3446 = vpack.c.b16 %v3316, %v3315
      %v3447 = vpack.c.b16 %v3318, %v3317
      %v3448 = vpack.c.b16 %v3320, %v3319
      %3577 = vmatpush.bf16.msra.mxu0 %v3328
      %3578 = vmatpush.bf16.msra.mxu0 %v3327
      %3579 = vmatpush.bf16.msra.mxu0 %v3326
      %3580 = vmatpush.bf16.msra.mxu0 %v3325
      %3581 = vmatpush.bf16.msra.mxu0 %v3324
      %3582 = vmatpush.bf16.msra.mxu0 %v3323
      %3583 = vmatpush.bf16.msra.mxu0 %v3322
      %3584 = vmatpush.bf16.msra.mxu0 %v3321
      %3585 = vmatmul.bf16.gmra.mxu0 %v2536
      %v3586 = vpop.f32.mrf.mxu0
      %v3587 = vadd.f32 %v2808, %v3586
      %v3588 = vpop.f32.mrf.mxu0
      %v3589 = vadd.f32 %v2808, %v3588
      %3590 = vdwg.mxu0
      %3591 = vmatpush.bf16.msra.mxu0 %v3336
      %3592 = vmatpush.bf16.msra.mxu0 %v3335
      %3593 = vmatpush.bf16.msra.mxu0 %v3334
      %3594 = vmatpush.bf16.msra.mxu0 %v3333
      %3595 = vmatpush.bf16.msra.mxu0 %v3332
      %3596 = vmatpush.bf16.msra.mxu0 %v3331
      %3597 = vmatpush.bf16.msra.mxu0 %v3330
      %3598 = vmatpush.bf16.msra.mxu0 %v3329
      %3599 = vmatmul.bf16.gmra.mxu0 %v2537
      %v3600 = vpop.f32.mrf.mxu0
      %v3601 = vadd.f32 %v3587, %v3600
      %v3602 = vpop.f32.mrf.mxu0
      %v3603 = vadd.f32 %v3589, %v3602
      %3604 = vdwg.mxu0
      %3605 = vmatpush.bf16.msra.mxu0 %v3344
      %3606 = vmatpush.bf16.msra.mxu0 %v3343
      %3607 = vmatpush.bf16.msra.mxu0 %v3342
      %3608 = vmatpush.bf16.msra.mxu0 %v3341
      %3609 = vmatpush.bf16.msra.mxu0 %v3340
      %3610 = vmatpush.bf16.msra.mxu0 %v3339
      %3611 = vmatpush.bf16.msra.mxu0 %v3338
      %3612 = vmatpush.bf16.msra.mxu0 %v3337
      %3613 = vmatmul.bf16.gmra.mxu0 %v2538
      %v3614 = vpop.f32.mrf.mxu0
      %v3615 = vadd.f32 %v3601, %v3614
      %v3616 = vpop.f32.mrf.mxu0
      %v3617 = vadd.f32 %v3603, %v3616
      %3618 = vdwg.mxu0
      %3619 = vmatpush.bf16.msra.mxu0 %v3352
      %3620 = vmatpush.bf16.msra.mxu0 %v3351
      %3621 = vmatpush.bf16.msra.mxu0 %v3350
      %3622 = vmatpush.bf16.msra.mxu0 %v3349
      %3623 = vmatpush.bf16.msra.mxu0 %v3348
      %3624 = vmatpush.bf16.msra.mxu0 %v3347
      %3625 = vmatpush.bf16.msra.mxu0 %v3346
      %3626 = vmatpush.bf16.msra.mxu0 %v3345
      %3627 = vmatmul.bf16.gmra.mxu0 %v2539
      %v3628 = vpop.f32.mrf.mxu0
      %v3629 = vadd.f32 %v3615, %v3628
      %v3630 = vpop.f32.mrf.mxu0
      %v3631 = vadd.f32 %v3617, %v3630
      %3632 = vdwg.mxu0
      %3633 = vmatpush.bf16.msra.mxu0 %v3360
      %3634 = vmatpush.bf16.msra.mxu0 %v3359
      %3635 = vmatpush.bf16.msra.mxu0 %v3358
      %3636 = vmatpush.bf16.msra.mxu0 %v3357
      %3637 = vmatpush.bf16.msra.mxu0 %v3356
      %3638 = vmatpush.bf16.msra.mxu0 %v3355
      %3639 = vmatpush.bf16.msra.mxu0 %v3354
      %3640 = vmatpush.bf16.msra.mxu0 %v3353
      %3641 = vmatmul.bf16.gmra.mxu0 %v2540
      %v3642 = vpop.f32.mrf.mxu0
      %v3643 = vadd.f32 %v3629, %v3642
      %v3644 = vpop.f32.mrf.mxu0
      %v3645 = vadd.f32 %v3631, %v3644
      %3646 = vdwg.mxu0
      %3647 = vmatpush.bf16.msra.mxu0 %v3368
      %3648 = vmatpush.bf16.msra.mxu0 %v3367
      %3649 = vmatpush.bf16.msra.mxu0 %v3366
      %3650 = vmatpush.bf16.msra.mxu0 %v3365
      %3651 = vmatpush.bf16.msra.mxu0 %v3364
      %3652 = vmatpush.bf16.msra.mxu0 %v3363
      %3653 = vmatpush.bf16.msra.mxu0 %v3362
      %3654 = vmatpush.bf16.msra.mxu0 %v3361
      %3655 = vmatmul.bf16.gmra.mxu0 %v2541
      %v3656 = vpop.f32.mrf.mxu0
      %v3657 = vadd.f32 %v3643, %v3656
      %v3658 = vpop.f32.mrf.mxu0
      %v3659 = vadd.f32 %v3645, %v3658
      %3660 = vdwg.mxu0
      %3661 = vmatpush.bf16.msra.mxu0 %v3376
      %3662 = vmatpush.bf16.msra.mxu0 %v3375
      %3663 = vmatpush.bf16.msra.mxu0 %v3374
      %3664 = vmatpush.bf16.msra.mxu0 %v3373
      %3665 = vmatpush.bf16.msra.mxu0 %v3372
      %3666 = vmatpush.bf16.msra.mxu0 %v3371
      %3667 = vmatpush.bf16.msra.mxu0 %v3370
      %3668 = vmatpush.bf16.msra.mxu0 %v3369
      %3669 = vmatmul.bf16.gmra.mxu0 %v2542
      %v3670 = vpop.f32.mrf.mxu0
      %v3671 = vadd.f32 %v3657, %v3670
      %v3672 = vpop.f32.mrf.mxu0
      %v3673 = vadd.f32 %v3659, %v3672
      %3674 = vdwg.mxu0
      %3675 = vmatpush.bf16.msra.mxu0 %v3384
      %3676 = vmatpush.bf16.msra.mxu0 %v3383
      %3677 = vmatpush.bf16.msra.mxu0 %v3382
      %3678 = vmatpush.bf16.msra.mxu0 %v3381
      %3679 = vmatpush.bf16.msra.mxu0 %v3380
      %3680 = vmatpush.bf16.msra.mxu0 %v3379
      %3681 = vmatpush.bf16.msra.mxu0 %v3378
      %3682 = vmatpush.bf16.msra.mxu0 %v3377
      %3683 = vmatmul.bf16.gmra.mxu0 %v2543
      %v3684 = vpop.f32.mrf.mxu0
      %v3685 = vadd.f32 %v3671, %v3684
      %v3686 = vpop.f32.mrf.mxu0
      %v3687 = vadd.f32 %v3673, %v3686
      %3688 = vdwg.mxu0
      %3689 = vmatpush.bf16.msra.mxu0 %v3392
      %3690 = vmatpush.bf16.msra.mxu0 %v3391
      %3691 = vmatpush.bf16.msra.mxu0 %v3390
      %3692 = vmatpush.bf16.msra.mxu0 %v3389
      %3693 = vmatpush.bf16.msra.mxu0 %v3388
      %3694 = vmatpush.bf16.msra.mxu0 %v3387
      %3695 = vmatpush.bf16.msra.mxu0 %v3386
      %3696 = vmatpush.bf16.msra.mxu0 %v3385
      %3697 = vmatmul.bf16.gmra.mxu0 %v2544
      %v3698 = vpop.f32.mrf.mxu0
      %v3699 = vadd.f32 %v3685, %v3698
      %v3700 = vpop.f32.mrf.mxu0
      %v3701 = vadd.f32 %v3687, %v3700
      %3702 = vdwg.mxu0
      %3703 = vmatpush.bf16.msra.mxu0 %v3400
      %3704 = vmatpush.bf16.msra.mxu0 %v3399
      %3705 = vmatpush.bf16.msra.mxu0 %v3398
      %3706 = vmatpush.bf16.msra.mxu0 %v3397
      %3707 = vmatpush.bf16.msra.mxu0 %v3396
      %3708 = vmatpush.bf16.msra.mxu0 %v3395
      %3709 = vmatpush.bf16.msra.mxu0 %v3394
      %3710 = vmatpush.bf16.msra.mxu0 %v3393
      %3711 = vmatmul.bf16.gmra.mxu0 %v2545
      %v3712 = vpop.f32.mrf.mxu0
      %v3713 = vadd.f32 %v3699, %v3712
      %v3714 = vpop.f32.mrf.mxu0
      %v3715 = vadd.f32 %v3701, %v3714
      %3716 = vdwg.mxu0
      %3717 = vmatpush.bf16.msra.mxu0 %v3408
      %3718 = vmatpush.bf16.msra.mxu0 %v3407
      %3719 = vmatpush.bf16.msra.mxu0 %v3406
      %3720 = vmatpush.bf16.msra.mxu0 %v3405
      %3721 = vmatpush.bf16.msra.mxu0 %v3404
      %3722 = vmatpush.bf16.msra.mxu0 %v3403
      %3723 = vmatpush.bf16.msra.mxu0 %v3402
      %3724 = vmatpush.bf16.msra.mxu0 %v3401
      %3725 = vmatmul.bf16.gmra.mxu0 %v2546
      %v3726 = vpop.f32.mrf.mxu0
      %v3727 = vadd.f32 %v3713, %v3726
      %v3728 = vpop.f32.mrf.mxu0
      %v3729 = vadd.f32 %v3715, %v3728
      %3730 = vdwg.mxu0
      %3731 = vmatpush.bf16.msra.mxu0 %v3416
      %3732 = vmatpush.bf16.msra.mxu0 %v3415
      %3733 = vmatpush.bf16.msra.mxu0 %v3414
      %3734 = vmatpush.bf16.msra.mxu0 %v3413
      %3735 = vmatpush.bf16.msra.mxu0 %v3412
      %3736 = vmatpush.bf16.msra.mxu0 %v3411
      %3737 = vmatpush.bf16.msra.mxu0 %v3410
      %3738 = vmatpush.bf16.msra.mxu0 %v3409
      %3739 = vmatmul.bf16.gmra.mxu0 %v2547
      %v3740 = vpop.f32.mrf.mxu0
      %v3741 = vadd.f32 %v3727, %v3740
      %v3742 = vpop.f32.mrf.mxu0
      %v3743 = vadd.f32 %v3729, %v3742
      %3744 = vdwg.mxu0
      %3745 = vmatpush.bf16.msra.mxu0 %v3424
      %3746 = vmatpush.bf16.msra.mxu0 %v3423
      %3747 = vmatpush.bf16.msra.mxu0 %v3422
      %3748 = vmatpush.bf16.msra.mxu0 %v3421
      %3749 = vmatpush.bf16.msra.mxu0 %v3420
      %3750 = vmatpush.bf16.msra.mxu0 %v3419
      %3751 = vmatpush.bf16.msra.mxu0 %v3418
      %3752 = vmatpush.bf16.msra.mxu0 %v3417
      %3753 = vmatmul.bf16.gmra.mxu0 %v2548
      %v3754 = vpop.f32.mrf.mxu0
      %v3755 = vadd.f32 %v3741, %v3754
      %v3756 = vpop.f32.mrf.mxu0
      %v3757 = vadd.f32 %v3743, %v3756
      %3758 = vdwg.mxu0
      %3759 = vmatpush.bf16.msra.mxu0 %v3432
      %3760 = vmatpush.bf16.msra.mxu0 %v3431
      %3761 = vmatpush.bf16.msra.mxu0 %v3430
      %3762 = vmatpush.bf16.msra.mxu0 %v3429
      %3763 = vmatpush.bf16.msra.mxu0 %v3428
      %3764 = vmatpush.bf16.msra.mxu0 %v3427
      %3765 = vmatpush.bf16.msra.mxu0 %v3426
      %3766 = vmatpush.bf16.msra.mxu0 %v3425
      %3767 = vmatmul.bf16.gmra.mxu0 %v2549
      %v3768 = vpop.f32.mrf.mxu0
      %v3769 = vadd.f32 %v3755, %v3768
      %v3770 = vpop.f32.mrf.mxu0
      %v3771 = vadd.f32 %v3757, %v3770
      %3772 = vdwg.mxu0
      %3773 = vmatpush.bf16.msra.mxu0 %v3440
      %3774 = vmatpush.bf16.msra.mxu0 %v3439
      %3775 = vmatpush.bf16.msra.mxu0 %v3438
      %3776 = vmatpush.bf16.msra.mxu0 %v3437
      %3777 = vmatpush.bf16.msra.mxu0 %v3436
      %3778 = vmatpush.bf16.msra.mxu0 %v3435
      %3779 = vmatpush.bf16.msra.mxu0 %v3434
      %3780 = vmatpush.bf16.msra.mxu0 %v3433
      %3781 = vmatmul.bf16.gmra.mxu0 %v2550
      %v3782 = vpop.f32.mrf.mxu0
      %v3783 = vadd.f32 %v3769, %v3782
      %v3784 = vpop.f32.mrf.mxu0
      %v3785 = vadd.f32 %v3771, %v3784
      %3786 = vdwg.mxu0
      %3787 = vmatpush.bf16.msra.mxu0 %v3448
      %3788 = vmatpush.bf16.msra.mxu0 %v3447
      %3789 = vmatpush.bf16.msra.mxu0 %v3446
      %3790 = vmatpush.bf16.msra.mxu0 %v3445
      %3791 = vmatpush.bf16.msra.mxu0 %v3444
      %3792 = vmatpush.bf16.msra.mxu0 %v3443
      %3793 = vmatpush.bf16.msra.mxu0 %v3442
      %3794 = vmatpush.bf16.msra.mxu0 %v3441
      %3795 = vmatmul.bf16.gmra.mxu0 %v2551
      %v3796 = vpop.f32.mrf.mxu0
      %v3797 = vadd.f32 %v3783, %v3796
      %v3798 = vpop.f32.mrf.mxu0
      %v3799 = vadd.f32 %v3785, %v3798
      %3800 = vdwg.mxu0
      %v3801 = vadd.f32 %v2046, %v3797
      %v3802 = vadd.f32 %v2047, %v3799
      %v3803 = vsel %vm458, %v3801, 0.0
      %3804 = vadd.xlane.f32.xlu0 %v3803
      %v3805 = vpop.xlane.xlu0 %3804
      %v3806 = vsel %vm458, %v3802, 0.0
      %3807 = vadd.xlane.f32.xlu0 %v3806
      %v3808 = vpop.xlane.xlu0 %3807
      %v3809 = vmul.f32 %v3805, %v1071
      %v3810 = vmul.f32 %v3808, %v1071
      %v3811 = vsub.f32 %v3801, %v3809
      %v3812 = vsub.f32 %v3802, %v3810
      %v3813 = vmul.f32 %v3811, %v3811
      %v3814 = vmul.f32 %v3812, %v3812
      %v3815 = vsel %vm458, %v3813, 0.0
      %3816 = vadd.xlane.f32.xlu0 %v3815
      %v3817 = vpop.xlane.xlu0 %3816
      %v3818 = vsel %vm458, %v3814, 0.0
      %3819 = vadd.xlane.f32.xlu0 %v3818
      %v3820 = vpop.xlane.xlu0 %3819
      %v3821 = vmul.f32 %v3817, %v1071
      %v3822 = vmul.f32 %v3820, %v1071
      %v3823 = vadd.f32 %v3821, 1e-05
      %v3824 = vadd.f32 %v3822, 1e-05
      %v3825 = vrsqrt.pop %v3823
      %v3826 = vmul.f32 %v3825, %v3823
      %v3827 = vmul.f32 %v3826, %v3825
      %v3828 = vmul.f32 0.5, %v3827
      %v3829 = vsub.f32 1.5, %v3828
      %v3830 = vmul.f32 %v3825, %v3829
      %vm3831 = vweird.f32 %v3823
      %vm3832 = vweird.f32 %v3825
      %vm3833 = vmor %vm3831, %vm3832
      %v3834 = vsel %vm3833, %v3825, %v3830
      %v3835 = vrsqrt.pop %v3824
      %v3836 = vmul.f32 %v3835, %v3824
      %v3837 = vmul.f32 %v3836, %v3835
      %v3838 = vmul.f32 0.5, %v3837
      %v3839 = vsub.f32 1.5, %v3838
      %v3840 = vmul.f32 %v3835, %v3839
      %vm3841 = vweird.f32 %v3824
      %vm3842 = vweird.f32 %v3835
      %vm3843 = vmor %vm3841, %vm3842
      %v3844 = vsel %vm3843, %v3835, %v3840
      %v3845 = vmul.f32 %v3811, %v3834
      %v3846 = vmul.f32 %v3812, %v3844
      %v3847 = vperm.slane %v443, 4
      %v3848 = vmul.f32 %v3845, %v3847
      %v3849 = vmul.f32 %v3846, %v3847
      %v3850 = vperm.slane %v443, 5
      %v3851 = vadd.f32 %v3848, %v3850
      %v3852 = vadd.f32 %v3849, %v3850
      %3853 = vst.msk [vmem:[#allocation2] sm:$0xff] %vm458, %v3851
      %3854 = vst.msk [vmem:[#allocation2 + $0x8] sm:$0xff] %vm458, %v3852
      %p3855 = scmp.eq.s32.totalorder %s20, 1
      // Predicated region
      $region61: #{transformer_decoder_forward.1} parent=55 // pred_check
        %p3856 = pneg %p3855
      $region62: #{transformer_decoder_forward.1} parent=55 // pred_check_branch
        %3858 = sbr.rel (%p3856) target = $region64
      $region63: #{transformer_decoder_forward.1} parent=55 // pred_region
        %v3859 = vpack.c.bf16 %v3852, %v3851
        %v3860 = vld [vmem:[%s7] sm:$0xf]
        %v3861 = vld [vmem:[%s7 + $0x4] sm:$0xf]
        %v3862 = vld [vmem:[%s7 + $0x8] sm:$0xf]
        %v3863 = vld [vmem:[%s7 + $0xc] sm:$0xf]
        %v3864 = vld [vmem:[%s8] sm:$0x1]
        %v3866 = vperm.slane %v3864, 0
        %v3872 = vunpack.c.l.b16 %v3860
        %v3873 = vunpack.c.l.b16 %v3861
        %v3874 = vunpack.c.l.b16 %v3862
        %v3875 = vunpack.c.l.b16 %v3863
        %v3876 = vpack.c.b16 %v3873, %v3872
        %v3877 = vpack.c.b16 %v3875, %v3874
        %v3881 = vsel %vm458, %v3859, 0
        %3883 = vmatpush.bf16.msra.mxu0 0
        %3884 = vmatpush.bf16.msra.mxu0 0
        %3885 = vmatpush.bf16.msra.mxu0 0
        %3886 = vmatpush.bf16.msra.mxu0 0
        %3887 = vmatpush.bf16.msra.mxu0 0
        %3888 = vmatpush.bf16.msra.mxu0 0
        %3889 = vmatpush.bf16.msra.mxu0 %v3877
        %3890 = vmatpush.bf16.msra.mxu0 %v3876
        %3891 = vmatmul.bf16.gmra.mxu0 %v3881
        %v3892 = vpop.f32.mrf.mxu0
        %v3893 = vadd.f32 %v3866, %v3892
        %v3894 = vpop.f32.mrf.mxu0
        %v3895 = vadd.f32 %v3866, %v3894
        %3896 = vdwg.mxu0
        %3897 = vst.msk [vmem:[%s9] sm:$0xff] %vm458, %v3893
        %3898 = vst.msk [vmem:[%s9 + $0x8] sm:$0xff] %vm458, %v3895
      $region64: #{transformer_decoder_forward.1} parent=55 // pred_fallthru
        _
      // Predicated region
      $region65: #{transformer_decoder_forward.1} parent=55 // pred_check
        %p3899 = pneg %p247
      $region66: #{transformer_decoder_forward.1} parent=55 // pred_check_branch
        %3901 = sbr.rel (%p3899) target = $region68
      $region67: #{transformer_decoder_forward.1} parent=55 // pred_region
        _
      $region68: #{transformer_decoder_forward.1} parent=55 // pred_fallthru
        _
      // Predicated region
      $region69: #{transformer_decoder_forward.1} parent=55 // pred_check
        %p3902 = pneg %p247
      $region70: #{transformer_decoder_forward.1} parent=55 // pred_check_branch
        %3904 = sbr.rel (%p3902) target = $region72
      $region71: #{transformer_decoder_forward.1} parent=55 // pred_region
        _
      $region72: #{transformer_decoder_forward.1} parent=55 // pred_fallthru
        _
    $region56: #{transformer_decoder_forward.1} parent=5 // pred_fallthru
      _
    %p3905 = scmp.le.s32.totalorder 2, %s15
    // Predicated region
    $region73: #{transformer_decoder_forward.1} parent=5 // pred_check
      %p3906 = pneg %p3905
    $region74: #{transformer_decoder_forward.1} parent=5 // pred_check_branch
      %3908 = sbr.rel (%p3906) target = $region76
    $region75: #{transformer_decoder_forward.1} parent=5 // pred_region
      %s3909 = ssub.s32 %s15, 2
    $region76: #{transformer_decoder_forward.1} parent=5 // pred_fallthru
      _
  $region6: #{transformer_decoder_forward.1} parent=0 // loop_footer
    %s19 = sadd.s32 1, %s15
  $region7: #{transformer_decoder_forward.1} parent=0 // loop_footer_branch
    %14 = sbr.rel target = $region3
  $region8: #{transformer_decoder_forward.1} parent=0 // loop_exit
    _

</llo_original>
